<compile_context>
chip_gen: v5e
topology: v5e:2x2
jax: 0.10.0
libtpu: 0.0.40
codegen_flags: <defaults>
</compile_context>

<pallas_src>
from functools import partial

import jax
import jax.numpy as jnp
from jax import lax
from jax.experimental import pallas as pl
from jax.experimental.pallas import tpu as pltpu

K = 7      # depthwise kernel size
PAD = 3    # spatial padding


# ----------------------------------------------------------------------------
# Fused kernel: dwconv7x7 + LN(stats) + Linear/GELU/Linear (+folded affines)
# ----------------------------------------------------------------------------
def block_kernel(x_ref, dww_ref, dwb_ref, w1_ref, b1_ref, w2_ref, b2_ref,
                 o_ref, *, strip_h, wp, eps):
    snt = strip_h * wp                 # output tokens produced by this step
    slab = snt + (K - 1) * wp          # rows needed per kw-shifted slab
    load = slab + 8                    # rows loaded (kw in [0,6] headroom)

    s = pl.program_id(1)
    row0 = pl.multiple_of(s * snt, 8)  # strip start in the flat padded image

    # Strip window (with halo) of the flattened padded image, bf16 in HBM/VMEM,
    # upcast ONCE to f32 (cheaper than 49 per-tap converts).
    xw = x_ref[0, pl.ds(row0, load), :].astype(jnp.float32)

    acc = None
    res = None                         # original (un-convolved) x == center tap
    for kw in range(K):
        if kw == 0:
            xkw = xw
        else:
            # xkw[i] = xw[i + kw]; shift goes to the XLU (idle slot), the
            # subsequent slices below are sublane-aligned (wp % 8 == 0).
            xkw = pltpu.roll(xw, shift=load - kw, axis=0)
        for kh in range(K):
            patch = xkw[kh * wp:kh * wp + snt, :]   # aligned sublane slice
            if kh == K // 2 and kw == K // 2:
                res = patch
            term = patch * dww_ref[kh, kw, :]
            acc = term if acc is None else acc + term
    y = acc + dwb_ref[0, :]                         # f32

    # LayerNorm statistics only (affine folded into w1'/b1' in the wrapper).
    mean = jnp.mean(y, axis=-1, keepdims=True)
    d = y - mean
    var = jnp.mean(d * d, axis=-1, keepdims=True)
    dn = d * lax.rsqrt(var + eps)

    # pwconv1 -> GELU(tanh) -> pwconv2 on the MXU: bf16 operands, f32 acc.
    h = jnp.dot(dn.astype(jnp.bfloat16), w1_ref[...],
                preferred_element_type=jnp.float32) + b1_ref[0, :]
    h = 0.5 * h * (1.0 + jnp.tanh(0.7978845608028654
                                  * (h + 0.044715 * (h * h * h))))
    z = jnp.dot(h.astype(jnp.bfloat16), w2_ref[...],
                preferred_element_type=jnp.float32) + b2_ref[0, :]

    # gamma already folded into w2'/b2'; residual = center tap.
    o_ref[0] = (res + z).astype(o_ref.dtype)


# ----------------------------------------------------------------------------
# Wrapper (PyTorch NCHW interface at the boundary)
# ----------------------------------------------------------------------------
def block_forward(x_nchw, params, *, eps=1e-6):
    B, C, H, W = x_nchw.shape
    f32 = jnp.float32

    # Padded width rounded up to a sublane multiple -> all in-kernel slices
    # along the flattened spatial axis are (8,128)-aligned.
    wp = ((W + 2 * PAD) + 7) // 8 * 8

    # Generation-aware VMEM budget: capacity minus headroom for compiler
    # scratch (~112 MiB on v5e/v6e, ~48 MiB on v7x).
    try:
        info = pltpu.get_tpu_info()
        vmem_cap = int(getattr(info, "vmem_capacity_bytes", 64 * 2 ** 20))
    except Exception:
        vmem_cap = 64 * 2 ** 20
    vmem_budget = max(32 * 2 ** 20, vmem_cap - 16 * 2 ** 20)

    # Strip sizing: larger strips => bigger matmul M, fewer grid steps, smaller
    # halo fraction.  Token target scales with the VMEM budget.
    if vmem_budget >= 96 * 2 ** 20:
        tok_target = 8192
    elif vmem_budget >= 48 * 2 ** 20:
        tok_target = 4096
    else:
        tok_target = 2048
    strip_h = max(1, min(H, tok_target // wp))
    n_strips = pl.cdiv(H, strip_h)            # no divisibility requirement
    h_cover = n_strips * strip_h              # rows actually computed (>= H)
    hp = h_cover + 2 * PAD + 1                # padded rows (+1 kw headroom)

    snt = strip_h * wp
    slab = snt + (K - 1) * wp
    load = slab + 8

    # NCHW -> NHWC, zero-pad, flatten spatial, store bf16 in HBM (biggest DMA).
    x = jnp.transpose(x_nchw, (0, 2, 3, 1))
    xp = jnp.pad(x, ((0, 0), (PAD, hp - PAD - H), (PAD, wp - W - PAD), (0, 0)))
    xf = xp.reshape(B, hp * wp, C).astype(jnp.bfloat16)

    # Fold LN affine into pwconv1 and gamma into pwconv2 (in f32, then bf16).
    ln_w = params["ln_w"].astype(f32)
    ln_b = params["ln_b"].astype(f32)
    gamma = params["gamma"].astype(f32)
    w1 = params["w1"].astype(f32)
    b1 = params["b1"].astype(f32)
    w2 = params["w2"].astype(f32)
    b2 = params["b2"].astype(f32)
    w1_bf = (ln_w[:, None] * w1).astype(jnp.bfloat16)
    b1f = (b1 + ln_b @ w1).reshape(1, 4 * C)
    w2_bf = (w2 * gamma[None, :]).astype(jnp.bfloat16)
    b2f = (b2 * gamma).reshape(1, C)
    dw_w = params["dw_w"].astype(f32)
    dw_b = params["dw_b"].reshape(1, C).astype(f32)

    # Scoped-VMEM estimate (resident bf16 image + f32 strip temps + MLP temps).
    est = (2 * hp * wp * C * 2                      # bf16 image, double-buffered
           + 2 * snt * C * 4                        # output double buffer
           + (load + 3 * slab + 4 * snt) * C * 4    # f32 window/rolls/LN temps
           + 3 * snt * 4 * C * 4                    # MLP hidden temps
           + 2 * (2 * 4 * C * C * 2 + (K * K + 8) * C * 4))   # params
    vmem_limit = int(min(vmem_budget, max(32 * 2 ** 20, 2 * est)))

    # Note: the constant-index-map parameter blocks below are DMA'd once; their
    # small double buffers could additionally be dropped with
    # pipeline_mode=pl.Buffered(1), but the saving is a few hundred KiB at most.
    out_flat = pl.pallas_call(
        partial(block_kernel, strip_h=strip_h, wp=wp, eps=eps),
        out_shape=jax.ShapeDtypeStruct((B, h_cover * wp, C), x_nchw.dtype),
        grid=(B, n_strips),
        in_specs=[
            # Padded image: block index ignores the strip axis, so the block
            # stays resident in VMEM across strips (one DMA per batch elem).
            pl.BlockSpec((1, hp * wp, C), lambda b, s: (b, 0, 0)),
            pl.BlockSpec((K, K, C), lambda b, s: (0, 0, 0)),   # dw weights
            pl.BlockSpec((1, C), lambda b, s: (0, 0)),         # dw bias
            pl.BlockSpec((C, 4 * C), lambda b, s: (0, 0)),     # w1' (bf16)
            pl.BlockSpec((1, 4 * C), lambda b, s: (0, 0)),     # b1'
            pl.BlockSpec((4 * C, C), lambda b, s: (0, 0)),     # w2' (bf16)
            pl.BlockSpec((1, C), lambda b, s: (0, 0)),         # b2'
        ],
        out_specs=pl.BlockSpec((1, snt, C), lambda b, s: (b, s, 0)),
        compiler_params=pltpu.CompilerParams(
            dimension_semantics=("parallel", "parallel"),
            vmem_limit_bytes=vmem_limit,
        ),
    )(xf, dw_w, dw_b, w1_bf, b1f, w2_bf, b2f)

    # Drop width padding and any extra strip rows, return to NCHW.
    out = out_flat.reshape(B, h_cover, wp, C)[:, :H, :W, :]
    return jnp.transpose(out, (0, 3, 1, 2))


# ----------------------------------------------------------------------------
# Pure-JAX reference (f32, exact-erf GELU) — correctness check
# ----------------------------------------------------------------------------
def block_reference(x_nchw, params, *, eps=1e-6):
    B, C, H, W = x_nchw.shape
    x = jnp.transpose(x_nchw, (0, 2, 3, 1))
    xp = jnp.pad(x, ((0, 0), (3, 3), (3, 3), (0, 0)))
    acc = jnp.zeros((B, H, W, C), jnp.float32)
    for kh in range(7):
        for kw in range(7):
            acc = acc + xp[:, kh:kh + H, kw:kw + W, :] * params["dw_w"][kh, kw, :]
    y = acc + params["dw_b"]
    mean = jnp.mean(y, axis=-1, keepdims=True)
    var = jnp.mean((y - mean) ** 2, axis=-1, keepdims=True)
    yn = (y - mean) / jnp.sqrt(var + eps) * params["ln_w"] + params["ln_b"]
    h = yn @ params["w1"] + params["b1"]
    h = 0.5 * h * (1.0 + lax.erf(h * 0.7071067811865476))
    z = h @ params["w2"] + params["b2"]
    z = params["gamma"] * z
    out = x + z
    return jnp.transpose(out, (0, 3, 1, 2))


if __name__ == "__main__":
    dim = 32          # channels (4*dim = 128 -> lane-dense hidden)
    B, H, W = 2, 8, 8

    key = jax.random.PRNGKey(0)
    ks = jax.random.split(key, 10)
    params = {
        "dw_w": jax.random.normal(ks[0], (7, 7, dim), jnp.float32) * 0.1,
        "dw_b": jax.random.normal(ks[1], (dim,), jnp.float32) * 0.1,
        # non-trivial LN affine + gamma so the weight-folding path is exercised
        "ln_w": 1.0 + 0.1 * jax.random.normal(ks[8], (dim,), jnp.float32),
        "ln_b": 0.1 * jax.random.normal(ks[9], (dim,), jnp.float32),
        "w1": jax.random.normal(ks[2], (dim, 4 * dim), jnp.float32) * 0.05,
        "b1": jax.random.normal(ks[3], (4 * dim,), jnp.float32) * 0.05,
        "w2": jax.random.normal(ks[4], (4 * dim, dim), jnp.float32) * 0.05,
        "b2": jax.random.normal(ks[5], (dim,), jnp.float32) * 0.05,
        "gamma": 1.0 + 0.1 * jax.random.normal(ks[7], (dim,), jnp.float32),
    }

    x = jax.random.normal(ks[6], (B, dim, H, W), jnp.float32)   # NCHW (PyTorch)

    out = jax.jit(block_forward)(x, params)
    out = jax.block_until_ready(out)

    ref = block_reference(x, params)
    assert out.shape == (B, dim, H, W)
    assert jnp.allclose(out, ref, rtol=2e-2, atol=2e-2), "mismatch vs reference"

    print("KERNEL_OK")
</pallas_src>

<mosaic_0001>
module attributes {stable_mosaic.version = 11 : i64} {
  func.func @block_kernel(%arg0: i32, %arg1: i32, %arg2: memref<1x240x32xbf16, #tpu.memory_space<vmem>>, %arg3: memref<7x7x32xf32, #tpu.memory_space<vmem>>, %arg4: memref<1x32xf32, #tpu.memory_space<vmem>>, %arg5: memref<32x128xbf16, #tpu.memory_space<vmem>>, %arg6: memref<1x128xf32, #tpu.memory_space<vmem>>, %arg7: memref<128x32xbf16, #tpu.memory_space<vmem>>, %arg8: memref<1x32xf32, #tpu.memory_space<vmem>>, %arg9: memref<1x128x32xf32, #tpu.memory_space<vmem>>) attributes {dimension_semantics = [#tpu.dimension_semantics<parallel>, #tpu.dimension_semantics<parallel>], iteration_bounds = array<i64: 2, 1>, scalar_prefetch = 0 : i64, scratch_operands = 0 : i64, tpu.core_type = #tpu.core_type<tc>, window_params = [{transform_indices = @transform_0, window_bounds = array<i64: 1, 240, 32>}, {pipeline_mode = #tpu.pipeline_mode<synchronous>, transform_indices = @transform_1, window_bounds = array<i64: 7, 7, 32>}, {pipeline_mode = #tpu.pipeline_mode<synchronous>, transform_indices = @transform_2, window_bounds = array<i64: 1, 32>}, {pipeline_mode = #tpu.pipeline_mode<synchronous>, transform_indices = @transform_3, window_bounds = array<i64: 32, 128>}, {pipeline_mode = #tpu.pipeline_mode<synchronous>, transform_indices = @transform_4, window_bounds = array<i64: 1, 128>}, {pipeline_mode = #tpu.pipeline_mode<synchronous>, transform_indices = @transform_5, window_bounds = array<i64: 128, 32>}, {pipeline_mode = #tpu.pipeline_mode<synchronous>, transform_indices = @transform_6, window_bounds = array<i64: 1, 32>}, {transform_indices = @transform_7, window_bounds = array<i64: 1, 128, 32>}]} {
    %c128_i32 = arith.constant 128 : i32
    %0 = arith.muli %arg1, %c128_i32 : i32
    %1 = tpu.assume_multiple %0, 8 : i32
    %c0 = arith.constant 0 : index
    %2 = arith.index_cast %1 : i32 to index
    %c0_0 = arith.constant 0 : index
    %3 = vector.load %arg2[%c0, %2, %c0_0] : memref<1x240x32xbf16, #tpu.memory_space<vmem>>, vector<1x232x32xbf16>
    %4 = vector.shape_cast %3 : vector<1x232x32xbf16> to vector<232x32xbf16>
    %5 = arith.extf %4 : vector<232x32xbf16> to vector<232x32xf32>
    %6 = vector.extract_strided_slice %5 {offsets = [0, 0], sizes = [128, 32], strides = [1, 1]} : vector<232x32xf32> to vector<128x32xf32>
    %c0_1 = arith.constant 0 : index
    %c0_2 = arith.constant 0 : index
    %c0_3 = arith.constant 0 : index
    %7 = vector.load %arg3[%c0_1, %c0_2, %c0_3] : memref<7x7x32xf32, #tpu.memory_space<vmem>>, vector<1x1x32xf32>
    %8 = vector.shape_cast %7 : vector<1x1x32xf32> to vector<32xf32>
    %9 = vector.shape_cast %8 : vector<32xf32> to vector<1x32xf32>
    %10 = vector.broadcast %9 : vector<1x32xf32> to vector<128x32xf32>
    %11 = arith.mulf %6, %10 : vector<128x32xf32>
    %12 = vector.extract_strided_slice %5 {offsets = [16, 0], sizes = [128, 32], strides = [1, 1]} : vector<232x32xf32> to vector<128x32xf32>
    %c1 = arith.constant 1 : index
    %c0_4 = arith.constant 0 : index
    %c0_5 = arith.constant 0 : index
    %13 = vector.load %arg3[%c1, %c0_4, %c0_5] : memref<7x7x32xf32, #tpu.memory_space<vmem>>, vector<1x1x32xf32>
    %14 = vector.shape_cast %13 : vector<1x1x32xf32> to vector<32xf32>
    %15 = vector.shape_cast %14 : vector<32xf32> to vector<1x32xf32>
    %16 = vector.broadcast %15 : vector<1x32xf32> to vector<128x32xf32>
    %17 = arith.mulf %12, %16 : vector<128x32xf32>
    %18 = arith.addf %11, %17 : vector<128x32xf32>
    %19 = vector.extract_strided_slice %5 {offsets = [32, 0], sizes = [128, 32], strides = [1, 1]} : vector<232x32xf32> to vector<128x32xf32>
    %c2 = arith.constant 2 : index
    %c0_6 = arith.constant 0 : index
    %c0_7 = arith.constant 0 : index
    %20 = vector.load %arg3[%c2, %c0_6, %c0_7] : memref<7x7x32xf32, #tpu.memory_space<vmem>>, vector<1x1x32xf32>
    %21 = vector.shape_cast %20 : vector<1x1x32xf32> to vector<32xf32>
    %22 = vector.shape_cast %21 : vector<32xf32> to vector<1x32xf32>
    %23 = vector.broadcast %22 : vector<1x32xf32> to vector<128x32xf32>
    %24 = arith.mulf %19, %23 : vector<128x32xf32>
    %25 = arith.addf %18, %24 : vector<128x32xf32>
    %26 = vector.extract_strided_slice %5 {offsets = [48, 0], sizes = [128, 32], strides = [1, 1]} : vector<232x32xf32> to vector<128x32xf32>
    %c3 = arith.constant 3 : index
    %c0_8 = arith.constant 0 : index
    %c0_9 = arith.constant 0 : index
    %27 = vector.load %arg3[%c3, %c0_8, %c0_9] : memref<7x7x32xf32, #tpu.memory_space<vmem>>, vector<1x1x32xf32>
    %28 = vector.shape_cast %27 : vector<1x1x32xf32> to vector<32xf32>
    %29 = vector.shape_cast %28 : vector<32xf32> to vector<1x32xf32>
    %30 = vector.broadcast %29 : vector<1x32xf32> to vector<128x32xf32>
    %31 = arith.mulf %26, %30 : vector<128x32xf32>
    %32 = arith.addf %25, %31 : vector<128x32xf32>
    %33 = vector.extract_strided_slice %5 {offsets = [64, 0], sizes = [128, 32], strides = [1, 1]} : vector<232x32xf32> to vector<128x32xf32>
    %c4 = arith.constant 4 : index
    %c0_10 = arith.constant 0 : index
    %c0_11 = arith.constant 0 : index
    %34 = vector.load %arg3[%c4, %c0_10, %c0_11] : memref<7x7x32xf32, #tpu.memory_space<vmem>>, vector<1x1x32xf32>
    %35 = vector.shape_cast %34 : vector<1x1x32xf32> to vector<32xf32>
    %36 = vector.shape_cast %35 : vector<32xf32> to vector<1x32xf32>
    %37 = vector.broadcast %36 : vector<1x32xf32> to vector<128x32xf32>
    %38 = arith.mulf %33, %37 : vector<128x32xf32>
    %39 = arith.addf %32, %38 : vector<128x32xf32>
    %40 = vector.extract_strided_slice %5 {offsets = [80, 0], sizes = [128, 32], strides = [1, 1]} : vector<232x32xf32> to vector<128x32xf32>
    %c5 = arith.constant 5 : index
    %c0_12 = arith.constant 0 : index
    %c0_13 = arith.constant 0 : index
    %41 = vector.load %arg3[%c5, %c0_12, %c0_13] : memref<7x7x32xf32, #tpu.memory_space<vmem>>, vector<1x1x32xf32>
    %42 = vector.shape_cast %41 : vector<1x1x32xf32> to vector<32xf32>
    %43 = vector.shape_cast %42 : vector<32xf32> to vector<1x32xf32>
    %44 = vector.broadcast %43 : vector<1x32xf32> to vector<128x32xf32>
    %45 = arith.mulf %40, %44 : vector<128x32xf32>
    %46 = arith.addf %39, %45 : vector<128x32xf32>
    %47 = vector.extract_strided_slice %5 {offsets = [96, 0], sizes = [128, 32], strides = [1, 1]} : vector<232x32xf32> to vector<128x32xf32>
    %c6 = arith.constant 6 : index
    %c0_14 = arith.constant 0 : index
    %c0_15 = arith.constant 0 : index
    %48 = vector.load %arg3[%c6, %c0_14, %c0_15] : memref<7x7x32xf32, #tpu.memory_space<vmem>>, vector<1x1x32xf32>
    %49 = vector.shape_cast %48 : vector<1x1x32xf32> to vector<32xf32>
    %50 = vector.shape_cast %49 : vector<32xf32> to vector<1x32xf32>
    %51 = vector.broadcast %50 : vector<1x32xf32> to vector<128x32xf32>
    %52 = arith.mulf %47, %51 : vector<128x32xf32>
    %53 = arith.addf %46, %52 : vector<128x32xf32>
    %c231_i32 = arith.constant 231 : i32
    %54 = tpu.dynamic_rotate %5 by %c231_i32 dim 0 : vector<232x32xf32>, i32 -> vector<232x32xf32>
    %55 = vector.extract_strided_slice %54 {offsets = [0, 0], sizes = [128, 32], strides = [1, 1]} : vector<232x32xf32> to vector<128x32xf32>
    %c0_16 = arith.constant 0 : index
    %c1_17 = arith.constant 1 : index
    %c0_18 = arith.constant 0 : index
    %56 = vector.load %arg3[%c0_16, %c1_17, %c0_18] : memref<7x7x32xf32, #tpu.memory_space<vmem>>, vector<1x1x32xf32>
    %57 = vector.shape_cast %56 : vector<1x1x32xf32> to vector<32xf32>
    %58 = vector.shape_cast %57 : vector<32xf32> to vector<1x32xf32>
    %59 = vector.broadcast %58 : vector<1x32xf32> to vector<128x32xf32>
    %60 = arith.mulf %55, %59 : vector<128x32xf32>
    %61 = arith.addf %53, %60 : vector<128x32xf32>
    %62 = vector.extract_strided_slice %54 {offsets = [16, 0], sizes = [128, 32], strides = [1, 1]} : vector<232x32xf32> to vector<128x32xf32>
    %c1_19 = arith.constant 1 : index
    %c1_20 = arith.constant 1 : index
    %c0_21 = arith.constant 0 : index
    %63 = vector.load %arg3[%c1_19, %c1_20, %c0_21] : memref<7x7x32xf32, #tpu.memory_space<vmem>>, vector<1x1x32xf32>
    %64 = vector.shape_cast %63 : vector<1x1x32xf32> to vector<32xf32>
    %65 = vector.shape_cast %64 : vector<32xf32> to vector<1x32xf32>
    %66 = vector.broadcast %65 : vector<1x32xf32> to vector<128x32xf32>
    %67 = arith.mulf %62, %66 : vector<128x32xf32>
    %68 = arith.addf %61, %67 : vector<128x32xf32>
    %69 = vector.extract_strided_slice %54 {offsets = [32, 0], sizes = [128, 32], strides = [1, 1]} : vector<232x32xf32> to vector<128x32xf32>
    %c2_22 = arith.constant 2 : index
    %c1_23 = arith.constant 1 : index
    %c0_24 = arith.constant 0 : index
    %70 = vector.load %arg3[%c2_22, %c1_23, %c0_24] : memref<7x7x32xf32, #tpu.memory_space<vmem>>, vector<1x1x32xf32>
    %71 = vector.shape_cast %70 : vector<1x1x32xf32> to vector<32xf32>
    %72 = vector.shape_cast %71 : vector<32xf32> to vector<1x32xf32>
    %73 = vector.broadcast %72 : vector<1x32xf32> to vector<128x32xf32>
    %74 = arith.mulf %69, %73 : vector<128x32xf32>
    %75 = arith.addf %68, %74 : vector<128x32xf32>
    %76 = vector.extract_strided_slice %54 {offsets = [48, 0], sizes = [128, 32], strides = [1, 1]} : vector<232x32xf32> to vector<128x32xf32>
    %c3_25 = arith.constant 3 : index
    %c1_26 = arith.constant 1 : index
    %c0_27 = arith.constant 0 : index
    %77 = vector.load %arg3[%c3_25, %c1_26, %c0_27] : memref<7x7x32xf32, #tpu.memory_space<vmem>>, vector<1x1x32xf32>
    %78 = vector.shape_cast %77 : vector<1x1x32xf32> to vector<32xf32>
    %79 = vector.shape_cast %78 : vector<32xf32> to vector<1x32xf32>
    %80 = vector.broadcast %79 : vector<1x32xf32> to vector<128x32xf32>
    %81 = arith.mulf %76, %80 : vector<128x32xf32>
    %82 = arith.addf %75, %81 : vector<128x32xf32>
    %83 = vector.extract_strided_slice %54 {offsets = [64, 0], sizes = [128, 32], strides = [1, 1]} : vector<232x32xf32> to vector<128x32xf32>
    %c4_28 = arith.constant 4 : index
    %c1_29 = arith.constant 1 : index
    %c0_30 = arith.constant 0 : index
    %84 = vector.load %arg3[%c4_28, %c1_29, %c0_30] : memref<7x7x32xf32, #tpu.memory_space<vmem>>, vector<1x1x32xf32>
    %85 = vector.shape_cast %84 : vector<1x1x32xf32> to vector<32xf32>
    %86 = vector.shape_cast %85 : vector<32xf32> to vector<1x32xf32>
    %87 = vector.broadcast %86 : vector<1x32xf32> to vector<128x32xf32>
    %88 = arith.mulf %83, %87 : vector<128x32xf32>
    %89 = arith.addf %82, %88 : vector<128x32xf32>
    %90 = vector.extract_strided_slice %54 {offsets = [80, 0], sizes = [128, 32], strides = [1, 1]} : vector<232x32xf32> to vector<128x32xf32>
    %c5_31 = arith.constant 5 : index
    %c1_32 = arith.constant 1 : index
    %c0_33 = arith.constant 0 : index
    %91 = vector.load %arg3[%c5_31, %c1_32, %c0_33] : memref<7x7x32xf32, #tpu.memory_space<vmem>>, vector<1x1x32xf32>
    %92 = vector.shape_cast %91 : vector<1x1x32xf32> to vector<32xf32>
    %93 = vector.shape_cast %92 : vector<32xf32> to vector<1x32xf32>
    %94 = vector.broadcast %93 : vector<1x32xf32> to vector<128x32xf32>
    %95 = arith.mulf %90, %94 : vector<128x32xf32>
    %96 = arith.addf %89, %95 : vector<128x32xf32>
    %97 = vector.extract_strided_slice %54 {offsets = [96, 0], sizes = [128, 32], strides = [1, 1]} : vector<232x32xf32> to vector<128x32xf32>
    %c6_34 = arith.constant 6 : index
    %c1_35 = arith.constant 1 : index
    %c0_36 = arith.constant 0 : index
    %98 = vector.load %arg3[%c6_34, %c1_35, %c0_36] : memref<7x7x32xf32, #tpu.memory_space<vmem>>, vector<1x1x32xf32>
    %99 = vector.shape_cast %98 : vector<1x1x32xf32> to vector<32xf32>
    %100 = vector.shape_cast %99 : vector<32xf32> to vector<1x32xf32>
    %101 = vector.broadcast %100 : vector<1x32xf32> to vector<128x32xf32>
    %102 = arith.mulf %97, %101 : vector<128x32xf32>
    %103 = arith.addf %96, %102 : vector<128x32xf32>
    %c230_i32 = arith.constant 230 : i32
    %104 = tpu.dynamic_rotate %5 by %c230_i32 dim 0 : vector<232x32xf32>, i32 -> vector<232x32xf32>
    %105 = vector.extract_strided_slice %104 {offsets = [0, 0], sizes = [128, 32], strides = [1, 1]} : vector<232x32xf32> to vector<128x32xf32>
    %c0_37 = arith.constant 0 : index
    %c2_38 = arith.constant 2 : index
    %c0_39 = arith.constant 0 : index
    %106 = vector.load %arg3[%c0_37, %c2_38, %c0_39] : memref<7x7x32xf32, #tpu.memory_space<vmem>>, vector<1x1x32xf32>
    %107 = vector.shape_cast %106 : vector<1x1x32xf32> to vector<32xf32>
    %108 = vector.shape_cast %107 : vector<32xf32> to vector<1x32xf32>
    %109 = vector.broadcast %108 : vector<1x32xf32> to vector<128x32xf32>
    %110 = arith.mulf %105, %109 : vector<128x32xf32>
    %111 = arith.addf %103, %110 : vector<128x32xf32>
    %112 = vector.extract_strided_slice %104 {offsets = [16, 0], sizes = [128, 32], strides = [1, 1]} : vector<232x32xf32> to vector<128x32xf32>
    %c1_40 = arith.constant 1 : index
    %c2_41 = arith.constant 2 : index
    %c0_42 = arith.constant 0 : index
    %113 = vector.load %arg3[%c1_40, %c2_41, %c0_42] : memref<7x7x32xf32, #tpu.memory_space<vmem>>, vector<1x1x32xf32>
    %114 = vector.shape_cast %113 : vector<1x1x32xf32> to vector<32xf32>
    %115 = vector.shape_cast %114 : vector<32xf32> to vector<1x32xf32>
    %116 = vector.broadcast %115 : vector<1x32xf32> to vector<128x32xf32>
    %117 = arith.mulf %112, %116 : vector<128x32xf32>
    %118 = arith.addf %111, %117 : vector<128x32xf32>
    %119 = vector.extract_strided_slice %104 {offsets = [32, 0], sizes = [128, 32], strides = [1, 1]} : vector<232x32xf32> to vector<128x32xf32>
    %c2_43 = arith.constant 2 : index
    %c2_44 = arith.constant 2 : index
    %c0_45 = arith.constant 0 : index
    %120 = vector.load %arg3[%c2_43, %c2_44, %c0_45] : memref<7x7x32xf32, #tpu.memory_space<vmem>>, vector<1x1x32xf32>
    %121 = vector.shape_cast %120 : vector<1x1x32xf32> to vector<32xf32>
    %122 = vector.shape_cast %121 : vector<32xf32> to vector<1x32xf32>
    %123 = vector.broadcast %122 : vector<1x32xf32> to vector<128x32xf32>
    %124 = arith.mulf %119, %123 : vector<128x32xf32>
    %125 = arith.addf %118, %124 : vector<128x32xf32>
    %126 = vector.extract_strided_slice %104 {offsets = [48, 0], sizes = [128, 32], strides = [1, 1]} : vector<232x32xf32> to vector<128x32xf32>
    %c3_46 = arith.constant 3 : index
    %c2_47 = arith.constant 2 : index
    %c0_48 = arith.constant 0 : index
    %127 = vector.load %arg3[%c3_46, %c2_47, %c0_48] : memref<7x7x32xf32, #tpu.memory_space<vmem>>, vector<1x1x32xf32>
    %128 = vector.shape_cast %127 : vector<1x1x32xf32> to vector<32xf32>
    %129 = vector.shape_cast %128 : vector<32xf32> to vector<1x32xf32>
    %130 = vector.broadcast %129 : vector<1x32xf32> to vector<128x32xf32>
    %131 = arith.mulf %126, %130 : vector<128x32xf32>
    %132 = arith.addf %125, %131 : vector<128x32xf32>
    %133 = vector.extract_strided_slice %104 {offsets = [64, 0], sizes = [128, 32], strides = [1, 1]} : vector<232x32xf32> to vector<128x32xf32>
    %c4_49 = arith.constant 4 : index
    %c2_50 = arith.constant 2 : index
    %c0_51 = arith.constant 0 : index
    %134 = vector.load %arg3[%c4_49, %c2_50, %c0_51] : memref<7x7x32xf32, #tpu.memory_space<vmem>>, vector<1x1x32xf32>
    %135 = vector.shape_cast %134 : vector<1x1x32xf32> to vector<32xf32>
    %136 = vector.shape_cast %135 : vector<32xf32> to vector<1x32xf32>
    %137 = vector.broadcast %136 : vector<1x32xf32> to vector<128x32xf32>
    %138 = arith.mulf %133, %137 : vector<128x32xf32>
    %139 = arith.addf %132, %138 : vector<128x32xf32>
    %140 = vector.extract_strided_slice %104 {offsets = [80, 0], sizes = [128, 32], strides = [1, 1]} : vector<232x32xf32> to vector<128x32xf32>
    %c5_52 = arith.constant 5 : index
    %c2_53 = arith.constant 2 : index
    %c0_54 = arith.constant 0 : index
    %141 = vector.load %arg3[%c5_52, %c2_53, %c0_54] : memref<7x7x32xf32, #tpu.memory_space<vmem>>, vector<1x1x32xf32>
    %142 = vector.shape_cast %141 : vector<1x1x32xf32> to vector<32xf32>
    %143 = vector.shape_cast %142 : vector<32xf32> to vector<1x32xf32>
    %144 = vector.broadcast %143 : vector<1x32xf32> to vector<128x32xf32>
    %145 = arith.mulf %140, %144 : vector<128x32xf32>
    %146 = arith.addf %139, %145 : vector<128x32xf32>
    %147 = vector.extract_strided_slice %104 {offsets = [96, 0], sizes = [128, 32], strides = [1, 1]} : vector<232x32xf32> to vector<128x32xf32>
    %c6_55 = arith.constant 6 : index
    %c2_56 = arith.constant 2 : index
    %c0_57 = arith.constant 0 : index
    %148 = vector.load %arg3[%c6_55, %c2_56, %c0_57] : memref<7x7x32xf32, #tpu.memory_space<vmem>>, vector<1x1x32xf32>
    %149 = vector.shape_cast %148 : vector<1x1x32xf32> to vector<32xf32>
    %150 = vector.shape_cast %149 : vector<32xf32> to vector<1x32xf32>
    %151 = vector.broadcast %150 : vector<1x32xf32> to vector<128x32xf32>
    %152 = arith.mulf %147, %151 : vector<128x32xf32>
    %153 = arith.addf %146, %152 : vector<128x32xf32>
    %c229_i32 = arith.constant 229 : i32
    %154 = tpu.dynamic_rotate %5 by %c229_i32 dim 0 : vector<232x32xf32>, i32 -> vector<232x32xf32>
    %155 = vector.extract_strided_slice %154 {offsets = [0, 0], sizes = [128, 32], strides = [1, 1]} : vector<232x32xf32> to vector<128x32xf32>
    %c0_58 = arith.constant 0 : index
    %c3_59 = arith.constant 3 : index
    %c0_60 = arith.constant 0 : index
    %156 = vector.load %arg3[%c0_58, %c3_59, %c0_60] : memref<7x7x32xf32, #tpu.memory_space<vmem>>, vector<1x1x32xf32>
    %157 = vector.shape_cast %156 : vector<1x1x32xf32> to vector<32xf32>
    %158 = vector.shape_cast %157 : vector<32xf32> to vector<1x32xf32>
    %159 = vector.broadcast %158 : vector<1x32xf32> to vector<128x32xf32>
    %160 = arith.mulf %155, %159 : vector<128x32xf32>
    %161 = arith.addf %153, %160 : vector<128x32xf32>
    %162 = vector.extract_strided_slice %154 {offsets = [16, 0], sizes = [128, 32], strides = [1, 1]} : vector<232x32xf32> to vector<128x32xf32>
    %c1_61 = arith.constant 1 : index
    %c3_62 = arith.constant 3 : index
    %c0_63 = arith.constant 0 : index
    %163 = vector.load %arg3[%c1_61, %c3_62, %c0_63] : memref<7x7x32xf32, #tpu.memory_space<vmem>>, vector<1x1x32xf32>
    %164 = vector.shape_cast %163 : vector<1x1x32xf32> to vector<32xf32>
    %165 = vector.shape_cast %164 : vector<32xf32> to vector<1x32xf32>
    %166 = vector.broadcast %165 : vector<1x32xf32> to vector<128x32xf32>
    %167 = arith.mulf %162, %166 : vector<128x32xf32>
    %168 = arith.addf %161, %167 : vector<128x32xf32>
    %169 = vector.extract_strided_slice %154 {offsets = [32, 0], sizes = [128, 32], strides = [1, 1]} : vector<232x32xf32> to vector<128x32xf32>
    %c2_64 = arith.constant 2 : index
    %c3_65 = arith.constant 3 : index
    %c0_66 = arith.constant 0 : index
    %170 = vector.load %arg3[%c2_64, %c3_65, %c0_66] : memref<7x7x32xf32, #tpu.memory_space<vmem>>, vector<1x1x32xf32>
    %171 = vector.shape_cast %170 : vector<1x1x32xf32> to vector<32xf32>
    %172 = vector.shape_cast %171 : vector<32xf32> to vector<1x32xf32>
    %173 = vector.broadcast %172 : vector<1x32xf32> to vector<128x32xf32>
    %174 = arith.mulf %169, %173 : vector<128x32xf32>
    %175 = arith.addf %168, %174 : vector<128x32xf32>
    %176 = vector.extract_strided_slice %154 {offsets = [48, 0], sizes = [128, 32], strides = [1, 1]} : vector<232x32xf32> to vector<128x32xf32>
    %c3_67 = arith.constant 3 : index
    %c3_68 = arith.constant 3 : index
    %c0_69 = arith.constant 0 : index
    %177 = vector.load %arg3[%c3_67, %c3_68, %c0_69] : memref<7x7x32xf32, #tpu.memory_space<vmem>>, vector<1x1x32xf32>
    %178 = vector.shape_cast %177 : vector<1x1x32xf32> to vector<32xf32>
    %179 = vector.shape_cast %178 : vector<32xf32> to vector<1x32xf32>
    %180 = vector.broadcast %179 : vector<1x32xf32> to vector<128x32xf32>
    %181 = arith.mulf %176, %180 : vector<128x32xf32>
    %182 = arith.addf %175, %181 : vector<128x32xf32>
    %183 = vector.extract_strided_slice %154 {offsets = [64, 0], sizes = [128, 32], strides = [1, 1]} : vector<232x32xf32> to vector<128x32xf32>
    %c4_70 = arith.constant 4 : index
    %c3_71 = arith.constant 3 : index
    %c0_72 = arith.constant 0 : index
    %184 = vector.load %arg3[%c4_70, %c3_71, %c0_72] : memref<7x7x32xf32, #tpu.memory_space<vmem>>, vector<1x1x32xf32>
    %185 = vector.shape_cast %184 : vector<1x1x32xf32> to vector<32xf32>
    %186 = vector.shape_cast %185 : vector<32xf32> to vector<1x32xf32>
    %187 = vector.broadcast %186 : vector<1x32xf32> to vector<128x32xf32>
    %188 = arith.mulf %183, %187 : vector<128x32xf32>
    %189 = arith.addf %182, %188 : vector<128x32xf32>
    %190 = vector.extract_strided_slice %154 {offsets = [80, 0], sizes = [128, 32], strides = [1, 1]} : vector<232x32xf32> to vector<128x32xf32>
    %c5_73 = arith.constant 5 : index
    %c3_74 = arith.constant 3 : index
    %c0_75 = arith.constant 0 : index
    %191 = vector.load %arg3[%c5_73, %c3_74, %c0_75] : memref<7x7x32xf32, #tpu.memory_space<vmem>>, vector<1x1x32xf32>
    %192 = vector.shape_cast %191 : vector<1x1x32xf32> to vector<32xf32>
    %193 = vector.shape_cast %192 : vector<32xf32> to vector<1x32xf32>
    %194 = vector.broadcast %193 : vector<1x32xf32> to vector<128x32xf32>
    %195 = arith.mulf %190, %194 : vector<128x32xf32>
    %196 = arith.addf %189, %195 : vector<128x32xf32>
    %197 = vector.extract_strided_slice %154 {offsets = [96, 0], sizes = [128, 32], strides = [1, 1]} : vector<232x32xf32> to vector<128x32xf32>
    %c6_76 = arith.constant 6 : index
    %c3_77 = arith.constant 3 : index
    %c0_78 = arith.constant 0 : index
    %198 = vector.load %arg3[%c6_76, %c3_77, %c0_78] : memref<7x7x32xf32, #tpu.memory_space<vmem>>, vector<1x1x32xf32>
    %199 = vector.shape_cast %198 : vector<1x1x32xf32> to vector<32xf32>
    %200 = vector.shape_cast %199 : vector<32xf32> to vector<1x32xf32>
    %201 = vector.broadcast %200 : vector<1x32xf32> to vector<128x32xf32>
    %202 = arith.mulf %197, %201 : vector<128x32xf32>
    %203 = arith.addf %196, %202 : vector<128x32xf32>
    %c228_i32 = arith.constant 228 : i32
    %204 = tpu.dynamic_rotate %5 by %c228_i32 dim 0 : vector<232x32xf32>, i32 -> vector<232x32xf32>
    %205 = vector.extract_strided_slice %204 {offsets = [0, 0], sizes = [128, 32], strides = [1, 1]} : vector<232x32xf32> to vector<128x32xf32>
    %c0_79 = arith.constant 0 : index
    %c4_80 = arith.constant 4 : index
    %c0_81 = arith.constant 0 : index
    %206 = vector.load %arg3[%c0_79, %c4_80, %c0_81] : memref<7x7x32xf32, #tpu.memory_space<vmem>>, vector<1x1x32xf32>
    %207 = vector.shape_cast %206 : vector<1x1x32xf32> to vector<32xf32>
    %208 = vector.shape_cast %207 : vector<32xf32> to vector<1x32xf32>
    %209 = vector.broadcast %208 : vector<1x32xf32> to vector<128x32xf32>
    %210 = arith.mulf %205, %209 : vector<128x32xf32>
    %211 = arith.addf %203, %210 : vector<128x32xf32>
    %212 = vector.extract_strided_slice %204 {offsets = [16, 0], sizes = [128, 32], strides = [1, 1]} : vector<232x32xf32> to vector<128x32xf32>
    %c1_82 = arith.constant 1 : index
    %c4_83 = arith.constant 4 : index
    %c0_84 = arith.constant 0 : index
    %213 = vector.load %arg3[%c1_82, %c4_83, %c0_84] : memref<7x7x32xf32, #tpu.memory_space<vmem>>, vector<1x1x32xf32>
    %214 = vector.shape_cast %213 : vector<1x1x32xf32> to vector<32xf32>
    %215 = vector.shape_cast %214 : vector<32xf32> to vector<1x32xf32>
    %216 = vector.broadcast %215 : vector<1x32xf32> to vector<128x32xf32>
    %217 = arith.mulf %212, %216 : vector<128x32xf32>
    %218 = arith.addf %211, %217 : vector<128x32xf32>
    %219 = vector.extract_strided_slice %204 {offsets = [32, 0], sizes = [128, 32], strides = [1, 1]} : vector<232x32xf32> to vector<128x32xf32>
    %c2_85 = arith.constant 2 : index
    %c4_86 = arith.constant 4 : index
    %c0_87 = arith.constant 0 : index
    %220 = vector.load %arg3[%c2_85, %c4_86, %c0_87] : memref<7x7x32xf32, #tpu.memory_space<vmem>>, vector<1x1x32xf32>
    %221 = vector.shape_cast %220 : vector<1x1x32xf32> to vector<32xf32>
    %222 = vector.shape_cast %221 : vector<32xf32> to vector<1x32xf32>
    %223 = vector.broadcast %222 : vector<1x32xf32> to vector<128x32xf32>
    %224 = arith.mulf %219, %223 : vector<128x32xf32>
    %225 = arith.addf %218, %224 : vector<128x32xf32>
    %226 = vector.extract_strided_slice %204 {offsets = [48, 0], sizes = [128, 32], strides = [1, 1]} : vector<232x32xf32> to vector<128x32xf32>
    %c3_88 = arith.constant 3 : index
    %c4_89 = arith.constant 4 : index
    %c0_90 = arith.constant 0 : index
    %227 = vector.load %arg3[%c3_88, %c4_89, %c0_90] : memref<7x7x32xf32, #tpu.memory_space<vmem>>, vector<1x1x32xf32>
    %228 = vector.shape_cast %227 : vector<1x1x32xf32> to vector<32xf32>
    %229 = vector.shape_cast %228 : vector<32xf32> to vector<1x32xf32>
    %230 = vector.broadcast %229 : vector<1x32xf32> to vector<128x32xf32>
    %231 = arith.mulf %226, %230 : vector<128x32xf32>
    %232 = arith.addf %225, %231 : vector<128x32xf32>
    %233 = vector.extract_strided_slice %204 {offsets = [64, 0], sizes = [128, 32], strides = [1, 1]} : vector<232x32xf32> to vector<128x32xf32>
    %c4_91 = arith.constant 4 : index
    %c4_92 = arith.constant 4 : index
    %c0_93 = arith.constant 0 : index
    %234 = vector.load %arg3[%c4_91, %c4_92, %c0_93] : memref<7x7x32xf32, #tpu.memory_space<vmem>>, vector<1x1x32xf32>
    %235 = vector.shape_cast %234 : vector<1x1x32xf32> to vector<32xf32>
    %236 = vector.shape_cast %235 : vector<32xf32> to vector<1x32xf32>
    %237 = vector.broadcast %236 : vector<1x32xf32> to vector<128x32xf32>
    %238 = arith.mulf %233, %237 : vector<128x32xf32>
    %239 = arith.addf %232, %238 : vector<128x32xf32>
    %240 = vector.extract_strided_slice %204 {offsets = [80, 0], sizes = [128, 32], strides = [1, 1]} : vector<232x32xf32> to vector<128x32xf32>
    %c5_94 = arith.constant 5 : index
    %c4_95 = arith.constant 4 : index
    %c0_96 = arith.constant 0 : index
    %241 = vector.load %arg3[%c5_94, %c4_95, %c0_96] : memref<7x7x32xf32, #tpu.memory_space<vmem>>, vector<1x1x32xf32>
    %242 = vector.shape_cast %241 : vector<1x1x32xf32> to vector<32xf32>
    %243 = vector.shape_cast %242 : vector<32xf32> to vector<1x32xf32>
    %244 = vector.broadcast %243 : vector<1x32xf32> to vector<128x32xf32>
    %245 = arith.mulf %240, %244 : vector<128x32xf32>
    %246 = arith.addf %239, %245 : vector<128x32xf32>
    %247 = vector.extract_strided_slice %204 {offsets = [96, 0], sizes = [128, 32], strides = [1, 1]} : vector<232x32xf32> to vector<128x32xf32>
    %c6_97 = arith.constant 6 : index
    %c4_98 = arith.constant 4 : index
    %c0_99 = arith.constant 0 : index
    %248 = vector.load %arg3[%c6_97, %c4_98, %c0_99] : memref<7x7x32xf32, #tpu.memory_space<vmem>>, vector<1x1x32xf32>
    %249 = vector.shape_cast %248 : vector<1x1x32xf32> to vector<32xf32>
    %250 = vector.shape_cast %249 : vector<32xf32> to vector<1x32xf32>
    %251 = vector.broadcast %250 : vector<1x32xf32> to vector<128x32xf32>
    %252 = arith.mulf %247, %251 : vector<128x32xf32>
    %253 = arith.addf %246, %252 : vector<128x32xf32>
    %c227_i32 = arith.constant 227 : i32
    %254 = tpu.dynamic_rotate %5 by %c227_i32 dim 0 : vector<232x32xf32>, i32 -> vector<232x32xf32>
    %255 = vector.extract_strided_slice %254 {offsets = [0, 0], sizes = [128, 32], strides = [1, 1]} : vector<232x32xf32> to vector<128x32xf32>
    %c0_100 = arith.constant 0 : index
    %c5_101 = arith.constant 5 : index
    %c0_102 = arith.constant 0 : index
    %256 = vector.load %arg3[%c0_100, %c5_101, %c0_102] : memref<7x7x32xf32, #tpu.memory_space<vmem>>, vector<1x1x32xf32>
    %257 = vector.shape_cast %256 : vector<1x1x32xf32> to vector<32xf32>
    %258 = vector.shape_cast %257 : vector<32xf32> to vector<1x32xf32>
    %259 = vector.broadcast %258 : vector<1x32xf32> to vector<128x32xf32>
    %260 = arith.mulf %255, %259 : vector<128x32xf32>
    %261 = arith.addf %253, %260 : vector<128x32xf32>
    %262 = vector.extract_strided_slice %254 {offsets = [16, 0], sizes = [128, 32], strides = [1, 1]} : vector<232x32xf32> to vector<128x32xf32>
    %c1_103 = arith.constant 1 : index
    %c5_104 = arith.constant 5 : index
    %c0_105 = arith.constant 0 : index
    %263 = vector.load %arg3[%c1_103, %c5_104, %c0_105] : memref<7x7x32xf32, #tpu.memory_space<vmem>>, vector<1x1x32xf32>
    %264 = vector.shape_cast %263 : vector<1x1x32xf32> to vector<32xf32>
    %265 = vector.shape_cast %264 : vector<32xf32> to vector<1x32xf32>
    %266 = vector.broadcast %265 : vector<1x32xf32> to vector<128x32xf32>
    %267 = arith.mulf %262, %266 : vector<128x32xf32>
    %268 = arith.addf %261, %267 : vector<128x32xf32>
    %269 = vector.extract_strided_slice %254 {offsets = [32, 0], sizes = [128, 32], strides = [1, 1]} : vector<232x32xf32> to vector<128x32xf32>
    %c2_106 = arith.constant 2 : index
    %c5_107 = arith.constant 5 : index
    %c0_108 = arith.constant 0 : index
    %270 = vector.load %arg3[%c2_106, %c5_107, %c0_108] : memref<7x7x32xf32, #tpu.memory_space<vmem>>, vector<1x1x32xf32>
    %271 = vector.shape_cast %270 : vector<1x1x32xf32> to vector<32xf32>
    %272 = vector.shape_cast %271 : vector<32xf32> to vector<1x32xf32>
    %273 = vector.broadcast %272 : vector<1x32xf32> to vector<128x32xf32>
    %274 = arith.mulf %269, %273 : vector<128x32xf32>
    %275 = arith.addf %268, %274 : vector<128x32xf32>
    %276 = vector.extract_strided_slice %254 {offsets = [48, 0], sizes = [128, 32], strides = [1, 1]} : vector<232x32xf32> to vector<128x32xf32>
    %c3_109 = arith.constant 3 : index
    %c5_110 = arith.constant 5 : index
    %c0_111 = arith.constant 0 : index
    %277 = vector.load %arg3[%c3_109, %c5_110, %c0_111] : memref<7x7x32xf32, #tpu.memory_space<vmem>>, vector<1x1x32xf32>
    %278 = vector.shape_cast %277 : vector<1x1x32xf32> to vector<32xf32>
    %279 = vector.shape_cast %278 : vector<32xf32> to vector<1x32xf32>
    %280 = vector.broadcast %279 : vector<1x32xf32> to vector<128x32xf32>
    %281 = arith.mulf %276, %280 : vector<128x32xf32>
    %282 = arith.addf %275, %281 : vector<128x32xf32>
    %283 = vector.extract_strided_slice %254 {offsets = [64, 0], sizes = [128, 32], strides = [1, 1]} : vector<232x32xf32> to vector<128x32xf32>
    %c4_112 = arith.constant 4 : index
    %c5_113 = arith.constant 5 : index
    %c0_114 = arith.constant 0 : index
    %284 = vector.load %arg3[%c4_112, %c5_113, %c0_114] : memref<7x7x32xf32, #tpu.memory_space<vmem>>, vector<1x1x32xf32>
    %285 = vector.shape_cast %284 : vector<1x1x32xf32> to vector<32xf32>
    %286 = vector.shape_cast %285 : vector<32xf32> to vector<1x32xf32>
    %287 = vector.broadcast %286 : vector<1x32xf32> to vector<128x32xf32>
    %288 = arith.mulf %283, %287 : vector<128x32xf32>
    %289 = arith.addf %282, %288 : vector<128x32xf32>
    %290 = vector.extract_strided_slice %254 {offsets = [80, 0], sizes = [128, 32], strides = [1, 1]} : vector<232x32xf32> to vector<128x32xf32>
    %c5_115 = arith.constant 5 : index
    %c5_116 = arith.constant 5 : index
    %c0_117 = arith.constant 0 : index
    %291 = vector.load %arg3[%c5_115, %c5_116, %c0_117] : memref<7x7x32xf32, #tpu.memory_space<vmem>>, vector<1x1x32xf32>
    %292 = vector.shape_cast %291 : vector<1x1x32xf32> to vector<32xf32>
    %293 = vector.shape_cast %292 : vector<32xf32> to vector<1x32xf32>
    %294 = vector.broadcast %293 : vector<1x32xf32> to vector<128x32xf32>
    %295 = arith.mulf %290, %294 : vector<128x32xf32>
    %296 = arith.addf %289, %295 : vector<128x32xf32>
    %297 = vector.extract_strided_slice %254 {offsets = [96, 0], sizes = [128, 32], strides = [1, 1]} : vector<232x32xf32> to vector<128x32xf32>
    %c6_118 = arith.constant 6 : index
    %c5_119 = arith.constant 5 : index
    %c0_120 = arith.constant 0 : index
    %298 = vector.load %arg3[%c6_118, %c5_119, %c0_120] : memref<7x7x32xf32, #tpu.memory_space<vmem>>, vector<1x1x32xf32>
    %299 = vector.shape_cast %298 : vector<1x1x32xf32> to vector<32xf32>
    %300 = vector.shape_cast %299 : vector<32xf32> to vector<1x32xf32>
    %301 = vector.broadcast %300 : vector<1x32xf32> to vector<128x32xf32>
    %302 = arith.mulf %297, %301 : vector<128x32xf32>
    %303 = arith.addf %296, %302 : vector<128x32xf32>
    %c226_i32 = arith.constant 226 : i32
    %304 = tpu.dynamic_rotate %5 by %c226_i32 dim 0 : vector<232x32xf32>, i32 -> vector<232x32xf32>
    %305 = vector.extract_strided_slice %304 {offsets = [0, 0], sizes = [128, 32], strides = [1, 1]} : vector<232x32xf32> to vector<128x32xf32>
    %c0_121 = arith.constant 0 : index
    %c6_122 = arith.constant 6 : index
    %c0_123 = arith.constant 0 : index
    %306 = vector.load %arg3[%c0_121, %c6_122, %c0_123] : memref<7x7x32xf32, #tpu.memory_space<vmem>>, vector<1x1x32xf32>
    %307 = vector.shape_cast %306 : vector<1x1x32xf32> to vector<32xf32>
    %308 = vector.shape_cast %307 : vector<32xf32> to vector<1x32xf32>
    %309 = vector.broadcast %308 : vector<1x32xf32> to vector<128x32xf32>
    %310 = arith.mulf %305, %309 : vector<128x32xf32>
    %311 = arith.addf %303, %310 : vector<128x32xf32>
    %312 = vector.extract_strided_slice %304 {offsets = [16, 0], sizes = [128, 32], strides = [1, 1]} : vector<232x32xf32> to vector<128x32xf32>
    %c1_124 = arith.constant 1 : index
    %c6_125 = arith.constant 6 : index
    %c0_126 = arith.constant 0 : index
    %313 = vector.load %arg3[%c1_124, %c6_125, %c0_126] : memref<7x7x32xf32, #tpu.memory_space<vmem>>, vector<1x1x32xf32>
    %314 = vector.shape_cast %313 : vector<1x1x32xf32> to vector<32xf32>
    %315 = vector.shape_cast %314 : vector<32xf32> to vector<1x32xf32>
    %316 = vector.broadcast %315 : vector<1x32xf32> to vector<128x32xf32>
    %317 = arith.mulf %312, %316 : vector<128x32xf32>
    %318 = arith.addf %311, %317 : vector<128x32xf32>
    %319 = vector.extract_strided_slice %304 {offsets = [32, 0], sizes = [128, 32], strides = [1, 1]} : vector<232x32xf32> to vector<128x32xf32>
    %c2_127 = arith.constant 2 : index
    %c6_128 = arith.constant 6 : index
    %c0_129 = arith.constant 0 : index
    %320 = vector.load %arg3[%c2_127, %c6_128, %c0_129] : memref<7x7x32xf32, #tpu.memory_space<vmem>>, vector<1x1x32xf32>
    %321 = vector.shape_cast %320 : vector<1x1x32xf32> to vector<32xf32>
    %322 = vector.shape_cast %321 : vector<32xf32> to vector<1x32xf32>
    %323 = vector.broadcast %322 : vector<1x32xf32> to vector<128x32xf32>
    %324 = arith.mulf %319, %323 : vector<128x32xf32>
    %325 = arith.addf %318, %324 : vector<128x32xf32>
    %326 = vector.extract_strided_slice %304 {offsets = [48, 0], sizes = [128, 32], strides = [1, 1]} : vector<232x32xf32> to vector<128x32xf32>
    %c3_130 = arith.constant 3 : index
    %c6_131 = arith.constant 6 : index
    %c0_132 = arith.constant 0 : index
    %327 = vector.load %arg3[%c3_130, %c6_131, %c0_132] : memref<7x7x32xf32, #tpu.memory_space<vmem>>, vector<1x1x32xf32>
    %328 = vector.shape_cast %327 : vector<1x1x32xf32> to vector<32xf32>
    %329 = vector.shape_cast %328 : vector<32xf32> to vector<1x32xf32>
    %330 = vector.broadcast %329 : vector<1x32xf32> to vector<128x32xf32>
    %331 = arith.mulf %326, %330 : vector<128x32xf32>
    %332 = arith.addf %325, %331 : vector<128x32xf32>
    %333 = vector.extract_strided_slice %304 {offsets = [64, 0], sizes = [128, 32], strides = [1, 1]} : vector<232x32xf32> to vector<128x32xf32>
    %c4_133 = arith.constant 4 : index
    %c6_134 = arith.constant 6 : index
    %c0_135 = arith.constant 0 : index
    %334 = vector.load %arg3[%c4_133, %c6_134, %c0_135] : memref<7x7x32xf32, #tpu.memory_space<vmem>>, vector<1x1x32xf32>
    %335 = vector.shape_cast %334 : vector<1x1x32xf32> to vector<32xf32>
    %336 = vector.shape_cast %335 : vector<32xf32> to vector<1x32xf32>
    %337 = vector.broadcast %336 : vector<1x32xf32> to vector<128x32xf32>
    %338 = arith.mulf %333, %337 : vector<128x32xf32>
    %339 = arith.addf %332, %338 : vector<128x32xf32>
    %340 = vector.extract_strided_slice %304 {offsets = [80, 0], sizes = [128, 32], strides = [1, 1]} : vector<232x32xf32> to vector<128x32xf32>
    %c5_136 = arith.constant 5 : index
    %c6_137 = arith.constant 6 : index
    %c0_138 = arith.constant 0 : index
    %341 = vector.load %arg3[%c5_136, %c6_137, %c0_138] : memref<7x7x32xf32, #tpu.memory_space<vmem>>, vector<1x1x32xf32>
    %342 = vector.shape_cast %341 : vector<1x1x32xf32> to vector<32xf32>
    %343 = vector.shape_cast %342 : vector<32xf32> to vector<1x32xf32>
    %344 = vector.broadcast %343 : vector<1x32xf32> to vector<128x32xf32>
    %345 = arith.mulf %340, %344 : vector<128x32xf32>
    %346 = arith.addf %339, %345 : vector<128x32xf32>
    %347 = vector.extract_strided_slice %304 {offsets = [96, 0], sizes = [128, 32], strides = [1, 1]} : vector<232x32xf32> to vector<128x32xf32>
    %c6_139 = arith.constant 6 : index
    %c6_140 = arith.constant 6 : index
    %c0_141 = arith.constant 0 : index
    %348 = vector.load %arg3[%c6_139, %c6_140, %c0_141] : memref<7x7x32xf32, #tpu.memory_space<vmem>>, vector<1x1x32xf32>
    %349 = vector.shape_cast %348 : vector<1x1x32xf32> to vector<32xf32>
    %350 = vector.shape_cast %349 : vector<32xf32> to vector<1x32xf32>
    %351 = vector.broadcast %350 : vector<1x32xf32> to vector<128x32xf32>
    %352 = arith.mulf %347, %351 : vector<128x32xf32>
    %353 = arith.addf %346, %352 : vector<128x32xf32>
    %c0_142 = arith.constant 0 : index
    %c0_143 = arith.constant 0 : index
    %354 = vector.load %arg4[%c0_142, %c0_143] : memref<1x32xf32, #tpu.memory_space<vmem>>, vector<1x32xf32>
    %355 = vector.shape_cast %354 : vector<1x32xf32> to vector<32xf32>
    %356 = vector.shape_cast %355 : vector<32xf32> to vector<1x32xf32>
    %357 = vector.broadcast %356 : vector<1x32xf32> to vector<128x32xf32>
    %358 = arith.addf %353, %357 : vector<128x32xf32>
    %cst = arith.constant dense<0.000000e+00> : vector<128xf32>
    %359 = vector.multi_reduction <add>, %358, %cst [1] : vector<128x32xf32> to vector<128xf32>
    %360 = vector.shape_cast %359 : vector<128xf32> to vector<128x1xf32>
    %cst_144 = arith.constant 3.200000e+01 : f32
    %361 = vector.broadcast %cst_144 : f32 to vector<128x1xf32>
    %362 = arith.divf %360, %361 : vector<128x1xf32>
    %363 = vector.broadcast %362 : vector<128x1xf32> to vector<128x32xf32>
    %364 = arith.subf %358, %363 : vector<128x32xf32>
    %365 = arith.mulf %364, %364 : vector<128x32xf32>
    %cst_145 = arith.constant dense<0.000000e+00> : vector<128xf32>
    %366 = vector.multi_reduction <add>, %365, %cst_145 [1] : vector<128x32xf32> to vector<128xf32>
    %367 = vector.shape_cast %366 : vector<128xf32> to vector<128x1xf32>
    %cst_146 = arith.constant 3.200000e+01 : f32
    %368 = vector.broadcast %cst_146 : f32 to vector<128x1xf32>
    %369 = arith.divf %367, %368 : vector<128x1xf32>
    %cst_147 = arith.constant 9.99999997E-7 : f32
    %370 = vector.broadcast %cst_147 : f32 to vector<128x1xf32>
    %371 = arith.addf %369, %370 : vector<128x1xf32>
    %372 = math.rsqrt %371 : vector<128x1xf32>
    %373 = vector.broadcast %372 : vector<128x1xf32> to vector<128x32xf32>
    %374 = arith.mulf %364, %373 : vector<128x32xf32>
    %375 = arith.truncf %374 : vector<128x32xf32> to vector<128x32xbf16>
    %c0_148 = arith.constant 0 : index
    %c0_149 = arith.constant 0 : index
    %376 = vector.load %arg5[%c0_148, %c0_149] : memref<32x128xbf16, #tpu.memory_space<vmem>>, vector<32x128xbf16>
    %cst_150 = arith.constant dense<0.000000e+00> : vector<128x128xf32>
    %377 = tpu.matmul %375, %376, %cst_150 {dimension_numbers = #tpu.dot_dimension_numbers<[1], [0], [0], [1], [0, 0, 1, 1], [], []>} : vector<128x32xbf16>, vector<32x128xbf16>, vector<128x128xf32> -> vector<128x128xf32>
    %c0_151 = arith.constant 0 : index
    %c0_152 = arith.constant 0 : index
    %378 = vector.load %arg6[%c0_151, %c0_152] : memref<1x128xf32, #tpu.memory_space<vmem>>, vector<1x128xf32>
    %379 = vector.shape_cast %378 : vector<1x128xf32> to vector<128xf32>
    %380 = vector.shape_cast %379 : vector<128xf32> to vector<1x128xf32>
    %381 = vector.broadcast %380 : vector<1x128xf32> to vector<128x128xf32>
    %382 = arith.addf %377, %381 : vector<128x128xf32>
    %cst_153 = arith.constant 5.000000e-01 : f32
    %383 = vector.broadcast %cst_153 : f32 to vector<128x128xf32>
    %384 = arith.mulf %383, %382 : vector<128x128xf32>
    %385 = arith.mulf %382, %382 : vector<128x128xf32>
    %386 = arith.mulf %385, %382 : vector<128x128xf32>
    %cst_154 = arith.constant 4.471500e-02 : f32
    %387 = vector.broadcast %cst_154 : f32 to vector<128x128xf32>
    %388 = arith.mulf %387, %386 : vector<128x128xf32>
    %389 = arith.addf %382, %388 : vector<128x128xf32>
    %cst_155 = arith.constant 0.797884583 : f32
    %390 = vector.broadcast %cst_155 : f32 to vector<128x128xf32>
    %391 = arith.mulf %390, %389 : vector<128x128xf32>
    %392 = math.tanh %391 : vector<128x128xf32>
    %cst_156 = arith.constant 1.000000e+00 : f32
    %393 = vector.broadcast %cst_156 : f32 to vector<128x128xf32>
    %394 = arith.addf %393, %392 : vector<128x128xf32>
    %395 = arith.mulf %384, %394 : vector<128x128xf32>
    %396 = arith.truncf %395 : vector<128x128xf32> to vector<128x128xbf16>
    %c0_157 = arith.constant 0 : index
    %c0_158 = arith.constant 0 : index
    %397 = vector.load %arg7[%c0_157, %c0_158] : memref<128x32xbf16, #tpu.memory_space<vmem>>, vector<128x32xbf16>
    %cst_159 = arith.constant dense<0.000000e+00> : vector<128x32xf32>
    %398 = tpu.matmul %396, %397, %cst_159 {dimension_numbers = #tpu.dot_dimension_numbers<[1], [0], [0], [1], [0, 0, 1, 1], [], []>} : vector<128x128xbf16>, vector<128x32xbf16>, vector<128x32xf32> -> vector<128x32xf32>
    %c0_160 = arith.constant 0 : index
    %c0_161 = arith.constant 0 : index
    %399 = vector.load %arg8[%c0_160, %c0_161] : memref<1x32xf32, #tpu.memory_space<vmem>>, vector<1x32xf32>
    %400 = vector.shape_cast %399 : vector<1x32xf32> to vector<32xf32>
    %401 = vector.shape_cast %400 : vector<32xf32> to vector<1x32xf32>
    %402 = vector.broadcast %401 : vector<1x32xf32> to vector<128x32xf32>
    %403 = arith.addf %398, %402 : vector<128x32xf32>
    %404 = arith.addf %176, %403 : vector<128x32xf32>
    %c0_162 = arith.constant 0 : index
    %c0_163 = arith.constant 0 : index
    %c0_164 = arith.constant 0 : index
    %405 = vector.load %arg9[%c0_162, %c0_163, %c0_164] : memref<1x128x32xf32, #tpu.memory_space<vmem>>, vector<1x128x32xf32>
    %406 = vector.shape_cast %405 : vector<1x128x32xf32> to vector<128x32xf32>
    %407 = vector.shape_cast %404 : vector<128x32xf32> to vector<1x128x32xf32>
    tpu.vector_store %arg9[%c0_162, %c0_163, %c0_164], %407 {strides = array<i32>} : memref<1x128x32xf32, #tpu.memory_space<vmem>>, vector<1x128x32xf32>,
    return
  }
  func.func @transform_0(%arg0: i32, %arg1: i32) -> (i32, i32, i32) {
    %c0_i32 = arith.constant 0 : i32
    %c0_i32_0 = arith.constant 0 : i32
    %c0_i32_1 = arith.constant 0 : i32
    return %arg0, %c0_i32, %c0_i32_0 : i32, i32, i32
  }
  func.func @transform_1(%arg0: i32, %arg1: i32) -> (i32, i32, i32) {
    %c0_i32 = arith.constant 0 : i32
    %c0_i32_0 = arith.constant 0 : i32
    %c0_i32_1 = arith.constant 0 : i32
    %c0_i32_2 = arith.constant 0 : i32
    return %c0_i32, %c0_i32_0, %c0_i32_1 : i32, i32, i32
  }
  func.func @transform_2(%arg0: i32, %arg1: i32) -> (i32, i32) {
    %c0_i32 = arith.constant 0 : i32
    %c0_i32_0 = arith.constant 0 : i32
    %c0_i32_1 = arith.constant 0 : i32
    return %c0_i32, %c0_i32_0 : i32, i32
  }
  func.func @transform_3(%arg0: i32, %arg1: i32) -> (i32, i32) {
    %c0_i32 = arith.constant 0 : i32
    %c0_i32_0 = arith.constant 0 : i32
    %c0_i32_1 = arith.constant 0 : i32
    return %c0_i32, %c0_i32_0 : i32, i32
  }
  func.func @transform_4(%arg0: i32, %arg1: i32) -> (i32, i32) {
    %c0_i32 = arith.constant 0 : i32
    %c0_i32_0 = arith.constant 0 : i32
    %c0_i32_1 = arith.constant 0 : i32
    return %c0_i32, %c0_i32_0 : i32, i32
  }
  func.func @transform_5(%arg0: i32, %arg1: i32) -> (i32, i32) {
    %c0_i32 = arith.constant 0 : i32
    %c0_i32_0 = arith.constant 0 : i32
    %c0_i32_1 = arith.constant 0 : i32
    return %c0_i32, %c0_i32_0 : i32, i32
  }
  func.func @transform_6(%arg0: i32, %arg1: i32) -> (i32, i32) {
    %c0_i32 = arith.constant 0 : i32
    %c0_i32_0 = arith.constant 0 : i32
    %c0_i32_1 = arith.constant 0 : i32
    return %c0_i32, %c0_i32_0 : i32, i32
  }
  func.func @transform_7(%arg0: i32, %arg1: i32) -> (i32, i32, i32) {
    %c0_i32 = arith.constant 0 : i32
    %c0_i32_0 = arith.constant 0 : i32
    return %arg0, %arg1, %c0_i32 : i32, i32, i32
  }
}

</mosaic_0001>

<llo_original>
// kernel: block_forward.1
$region0: #{block_forward.1}
  #allocation0 [shape = 'u32[]', space=smem, size = 0x4, offset = 0x4, fixed_abs, tag = 'smem constant byte address 0x4 - core index']
  #allocation1 [shape = 'u32[72,128]{1,0:T(1,128)}', space=vmem, size = 0x9000, scoped, tag = 'internal scratch']
  %s0 = inlined_call_operand.vmem [shape: bf16[2,240,32], index: 0, kind: input, shape index: {}]
  %s1 = inlined_call_operand.vmem [shape: f32[7,7,32], index: 1, kind: input, shape index: {}]
  %s2 = inlined_call_operand.vmem [shape: f32[1,32], index: 2, kind: input, shape index: {}]
  %s3 = inlined_call_operand.vmem [shape: bf16[32,128], index: 3, kind: input, shape index: {}]
  %s4 = inlined_call_operand.vmem [shape: f32[1,128], index: 4, kind: input, shape index: {}]
  %s5 = inlined_call_operand.vmem [shape: bf16[128,32], index: 5, kind: input, shape index: {}]
  %s6 = inlined_call_operand.vmem [shape: f32[1,32], index: 6, kind: input, shape index: {}]
  %s7 = inlined_call_operand.vmem [shape: f32[2,128,32], index: 7, kind: output, shape index: {}]
  %s8 = sld [smem:[#allocation0]]
  $region61: #{block_forward.1} parent=0
    _
  %s10 = ssub.s32 1, %s8
  %s11 = scalar_select 0, %s10, %s8
  loop: start=0, step=1, limit=4
  $region2: #{block_forward.1} parent=0 // loop_pre_header
    _
  $region3: #{block_forward.1} parent=0 // loop_header
    %s13 = sphi 0, %s17
    %p14 = scmp.ge.s32.totalorder %s13, 4
    %s20 = sphi 0, %s32
    %s21 = sphi 0, %s28
    %s22 = sphi 0, %s20
    %s23 = sphi 0, %s21
    %s24 = sphi 0, %s22
    %s25 = sphi 0, %s23
    %s35 = sphi 0, %s37
    %s38 = sphi 0, %s35
    %s39 = sphi 0, %s38
    %s55 = sphi 0, %s39
    %s59 = sphi 0, %s59
    %s61 = sphi 0, %s59
    %s62 = sphi 0, %s61
    %s76 = sphi 0, %s62
    %s80 = sphi 0, %s80
    %s82 = sphi 0, %s80
    %s83 = sphi 0, %s82
    %s97 = sphi 0, %s83
    %s101 = sphi 0, %s101
    %s103 = sphi 0, %s101
    %s104 = sphi 0, %s103
    %s118 = sphi 0, %s104
    %s122 = sphi 0, %s122
    %s124 = sphi 0, %s122
    %s125 = sphi 0, %s124
    %s139 = sphi 0, %s125
    %s143 = sphi 0, %s143
    %s145 = sphi 0, %s143
    %s146 = sphi 0, %s145
    %s160 = sphi 0, %s146
    %s164 = sphi 0, %s164
    %s166 = sphi 0, %s164
    %s167 = sphi 0, %s166
    %s181 = sphi 0, %s167
    %s189 = sphi 0, %s191
    %s192 = sphi 0, %s189
    %s193 = sphi 0, %s192
    %s209 = sphi 0, %s193
  $region4: #{block_forward.1} parent=0 // loop_header_branch
    %16 = sbr.rel (%p14) target = $region8
  $region5: #{block_forward.1} parent=0 // loop_body
    %s18 = ssub.s32 %s13, 1
    %s19 = ssub.s32 %s13, 2
    %s26 = sadd.s32 1, %s21
    %p27 = scmp.ge.s32.totalorder %s26, 1
    %s28 = scalar_select %p27, 0, %s26
    %s29 = sadd.s32 1, %s20
    %s30 = scalar_select %p27, %s29, %s20
    %p31 = scmp.ge.s32.totalorder %s30, 2
    %s32 = scalar_select %p31, 0, %s30
    %s33 = ssub.s32 %s20, %s32
    %p34 = scmp.eq.s32.totalorder %s33, 0
    %s36 = sadd.s32 %s35, 1
    %s37 = scalar_select %p34, %s35, %s36
    %p40 = pneg %p34
    %p41 = scmp.eq.s32.totalorder %s13, 1
    %p42 = por %p40, %p41
    %p43 = scmp.ne.s32.totalorder %s35, %s38
    %p44 = scmp.eq.s32.totalorder %s13, 0
    %p45 = por %p43, %p44
    %p46 = scmp.ne.s32.totalorder %s35, %s38
    %p47 = scmp.eq.s32.totalorder %s18, 1
    %p48 = por %p46, %p47
    %p49 = scmp.ne.s32.totalorder %s38, %s39
    %p50 = scmp.eq.s32.totalorder %s18, 0
    %p51 = por %p49, %p50
    %p52 = scmp.ne.s32.totalorder %s38, %s39
    %p53 = scmp.eq.s32.totalorder %s19, 1
    %p54 = por %p52, %p53
    %p56 = scmp.ne.s32.totalorder %s39, %s55
    %p57 = scmp.eq.s32.totalorder %s19, 0
    %p58 = por %p56, %p57
    %s60 = sadd.s32 %s59, 1
    %p63 = scmp.eq.s32.totalorder %s13, 1
    %p64 = scmp.ne.s32.totalorder %s59, %s61
    %p65 = scmp.eq.s32.totalorder %s13, 0
    %p66 = por %p64, %p65
    %p67 = scmp.ne.s32.totalorder %s59, %s61
    %p68 = scmp.eq.s32.totalorder %s18, 1
    %p69 = por %p67, %p68
    %p70 = scmp.ne.s32.totalorder %s61, %s62
    %p71 = scmp.eq.s32.totalorder %s18, 0
    %p72 = por %p70, %p71
    %p73 = scmp.ne.s32.totalorder %s61, %s62
    %p74 = scmp.eq.s32.totalorder %s19, 1
    %p75 = por %p73, %p74
    %p77 = scmp.ne.s32.totalorder %s62, %s76
    %p78 = scmp.eq.s32.totalorder %s19, 0
    %p79 = por %p77, %p78
    %s81 = sadd.s32 %s80, 1
    %p84 = scmp.eq.s32.totalorder %s13, 1
    %p85 = scmp.ne.s32.totalorder %s80, %s82
    %p86 = scmp.eq.s32.totalorder %s13, 0
    %p87 = por %p85, %p86
    %p88 = scmp.ne.s32.totalorder %s80, %s82
    %p89 = scmp.eq.s32.totalorder %s18, 1
    %p90 = por %p88, %p89
    %p91 = scmp.ne.s32.totalorder %s82, %s83
    %p92 = scmp.eq.s32.totalorder %s18, 0
    %p93 = por %p91, %p92
    %p94 = scmp.ne.s32.totalorder %s82, %s83
    %p95 = scmp.eq.s32.totalorder %s19, 1
    %p96 = por %p94, %p95
    %p98 = scmp.ne.s32.totalorder %s83, %s97
    %p99 = scmp.eq.s32.totalorder %s19, 0
    %p100 = por %p98, %p99
    %s102 = sadd.s32 %s101, 1
    %p105 = scmp.eq.s32.totalorder %s13, 1
    %p106 = scmp.ne.s32.totalorder %s101, %s103
    %p107 = scmp.eq.s32.totalorder %s13, 0
    %p108 = por %p106, %p107
    %p109 = scmp.ne.s32.totalorder %s101, %s103
    %p110 = scmp.eq.s32.totalorder %s18, 1
    %p111 = por %p109, %p110
    %p112 = scmp.ne.s32.totalorder %s103, %s104
    %p113 = scmp.eq.s32.totalorder %s18, 0
    %p114 = por %p112, %p113
    %p115 = scmp.ne.s32.totalorder %s103, %s104
    %p116 = scmp.eq.s32.totalorder %s19, 1
    %p117 = por %p115, %p116
    %p119 = scmp.ne.s32.totalorder %s104, %s118
    %p120 = scmp.eq.s32.totalorder %s19, 0
    %p121 = por %p119, %p120
    %s123 = sadd.s32 %s122, 1
    %p126 = scmp.eq.s32.totalorder %s13, 1
    %p127 = scmp.ne.s32.totalorder %s122, %s124
    %p128 = scmp.eq.s32.totalorder %s13, 0
    %p129 = por %p127, %p128
    %p130 = scmp.ne.s32.totalorder %s122, %s124
    %p131 = scmp.eq.s32.totalorder %s18, 1
    %p132 = por %p130, %p131
    %p133 = scmp.ne.s32.totalorder %s124, %s125
    %p134 = scmp.eq.s32.totalorder %s18, 0
    %p135 = por %p133, %p134
    %p136 = scmp.ne.s32.totalorder %s124, %s125
    %p137 = scmp.eq.s32.totalorder %s19, 1
    %p138 = por %p136, %p137
    %p140 = scmp.ne.s32.totalorder %s125, %s139
    %p141 = scmp.eq.s32.totalorder %s19, 0
    %p142 = por %p140, %p141
    %s144 = sadd.s32 %s143, 1
    %p147 = scmp.eq.s32.totalorder %s13, 1
    %p148 = scmp.ne.s32.totalorder %s143, %s145
    %p149 = scmp.eq.s32.totalorder %s13, 0
    %p150 = por %p148, %p149
    %p151 = scmp.ne.s32.totalorder %s143, %s145
    %p152 = scmp.eq.s32.totalorder %s18, 1
    %p153 = por %p151, %p152
    %p154 = scmp.ne.s32.totalorder %s145, %s146
    %p155 = scmp.eq.s32.totalorder %s18, 0
    %p156 = por %p154, %p155
    %p157 = scmp.ne.s32.totalorder %s145, %s146
    %p158 = scmp.eq.s32.totalorder %s19, 1
    %p159 = por %p157, %p158
    %p161 = scmp.ne.s32.totalorder %s146, %s160
    %p162 = scmp.eq.s32.totalorder %s19, 0
    %p163 = por %p161, %p162
    %s165 = sadd.s32 %s164, 1
    %p168 = scmp.eq.s32.totalorder %s13, 1
    %p169 = scmp.ne.s32.totalorder %s164, %s166
    %p170 = scmp.eq.s32.totalorder %s13, 0
    %p171 = por %p169, %p170
    %p172 = scmp.ne.s32.totalorder %s164, %s166
    %p173 = scmp.eq.s32.totalorder %s18, 1
    %p174 = por %p172, %p173
    %p175 = scmp.ne.s32.totalorder %s166, %s167
    %p176 = scmp.eq.s32.totalorder %s18, 0
    %p177 = por %p175, %p176
    %p178 = scmp.ne.s32.totalorder %s166, %s167
    %p179 = scmp.eq.s32.totalorder %s19, 1
    %p180 = por %p178, %p179
    %p182 = scmp.ne.s32.totalorder %s167, %s181
    %p183 = scmp.eq.s32.totalorder %s19, 0
    %p184 = por %p182, %p183
    %s185 = ssub.s32 %s20, %s32
    %s186 = ssub.s32 %s21, %s28
    %s187 = sor.u32 %s185, %s186
    %p188 = scmp.eq.s32.totalorder %s187, 0
    %s190 = sadd.s32 %s189, 1
    %s191 = scalar_select %p188, %s189, %s190
    %p194 = pneg %p188
    %p195 = scmp.eq.s32.totalorder %s13, 1
    %p196 = por %p194, %p195
    %p197 = scmp.ne.s32.totalorder %s189, %s192
    %p198 = scmp.eq.s32.totalorder %s13, 0
    %p199 = por %p197, %p198
    %p200 = scmp.ne.s32.totalorder %s189, %s192
    %p201 = scmp.eq.s32.totalorder %s18, 1
    %p202 = por %p200, %p201
    %p203 = scmp.ne.s32.totalorder %s192, %s193
    %p204 = scmp.eq.s32.totalorder %s18, 0
    %p205 = por %p203, %p204
    %p206 = scmp.ne.s32.totalorder %s192, %s193
    %p207 = scmp.eq.s32.totalorder %s19, 1
    %p208 = por %p206, %p207
    %p210 = scmp.ne.s32.totalorder %s193, %s209
    %p211 = scmp.eq.s32.totalorder %s19, 0
    %p212 = por %p210, %p211
    %p213 = scmp.le.s32.totalorder 1, %s13
    %p214 = scmp.lt.s32.totalorder %s13, 3
    %p215 = pnand %p213, %p214
    %p216 = pneg %p215
    // Predicated region
    $region9: #{block_forward.1} parent=5 // pred_check
      _
    $region10: #{block_forward.1} parent=5 // pred_check_branch
      %218 = sbr.rel (%p215) target = $region12
    $region11: #{block_forward.1} parent=5 // pred_region
      %s219 = ssub.s32 %s13, 1
      // Predicated region
      $region13: #{block_forward.1} parent=11 // pred_check
        %p220 = pneg %p72
      $region14: #{block_forward.1} parent=11 // pred_check_branch
        %222 = sbr.rel (%p220) target = $region16
      $region15: #{block_forward.1} parent=11 // pred_region
        _
      $region16: #{block_forward.1} parent=11 // pred_fallthru
        _
      // Predicated region
      $region17: #{block_forward.1} parent=11 // pred_check
        %p223 = pneg %p93
      $region18: #{block_forward.1} parent=11 // pred_check_branch
        %225 = sbr.rel (%p223) target = $region20
      $region19: #{block_forward.1} parent=11 // pred_region
        _
      $region20: #{block_forward.1} parent=11 // pred_fallthru
        _
      // Predicated region
      $region21: #{block_forward.1} parent=11 // pred_check
        %p226 = pneg %p114
      $region22: #{block_forward.1} parent=11 // pred_check_branch
        %228 = sbr.rel (%p226) target = $region24
      $region23: #{block_forward.1} parent=11 // pred_region
        _
      $region24: #{block_forward.1} parent=11 // pred_fallthru
        _
      // Predicated region
      $region25: #{block_forward.1} parent=11 // pred_check
        %p229 = pneg %p135
      $region26: #{block_forward.1} parent=11 // pred_check_branch
        %231 = sbr.rel (%p229) target = $region28
      $region27: #{block_forward.1} parent=11 // pred_region
        _
      $region28: #{block_forward.1} parent=11 // pred_fallthru
        _
      // Predicated region
      $region29: #{block_forward.1} parent=11 // pred_check
        %p232 = pneg %p156
      $region30: #{block_forward.1} parent=11 // pred_check_branch
        %234 = sbr.rel (%p232) target = $region32
      $region31: #{block_forward.1} parent=11 // pred_region
        _
      $region32: #{block_forward.1} parent=11 // pred_fallthru
        _
      // Predicated region
      $region33: #{block_forward.1} parent=11 // pred_check
        %p235 = pneg %p177
      $region34: #{block_forward.1} parent=11 // pred_check_branch
        %237 = sbr.rel (%p235) target = $region36
      $region35: #{block_forward.1} parent=11 // pred_region
        _
      $region36: #{block_forward.1} parent=11 // pred_fallthru
        _
    $region12: #{block_forward.1} parent=5 // pred_fallthru
      _
    %p238 = scmp.lt.s32.totalorder %s13, 2
    // Predicated region
    $region37: #{block_forward.1} parent=5 // pred_check
      %p239 = pneg %p238
    $region38: #{block_forward.1} parent=5 // pred_check_branch
      %241 = sbr.rel (%p239) target = $region40
    $region39: #{block_forward.1} parent=5 // pred_region
      // Predicated region
      $region41: #{block_forward.1} parent=39 // pred_check
        %p242 = pneg %p45
      $region42: #{block_forward.1} parent=39 // pred_check_branch
        %244 = sbr.rel (%p242) target = $region44
      $region43: #{block_forward.1} parent=39 // pred_region
        %p245 = scmp.lt.s32.totalorder %s20, 1
        %s246 = scalar_select %p245, %s20, 1
        %s247 = smul.addr %s246, 30
        %s248 = smul.addr %s247, 4
        %s249 = scalar_lea.vmem %s0, %s248
      $region44: #{block_forward.1} parent=39 // pred_fallthru
        _
    $region40: #{block_forward.1} parent=5 // pred_fallthru
      _
    %p250 = scmp.le.s32.totalorder 1, %s13
    %p251 = scmp.lt.s32.totalorder %s13, 3
    %p252 = pnand %p250, %p251
    %p253 = pneg %p252
    // Predicated region
    $region45: #{block_forward.1} parent=5 // pred_check
      _
    $region46: #{block_forward.1} parent=5 // pred_check_branch
      %255 = sbr.rel (%p252) target = $region48
    $region47: #{block_forward.1} parent=5 // pred_region
      %s256 = ssub.s32 %s13, 1
      %p257 = scmp.lt.s32.totalorder %s22, 1
      %s258 = scalar_select %p257, %s22, 1
      %s259 = smul.addr %s258, 30
      %s260 = smul.addr %s259, 4
      %s261 = scalar_lea.vmem %s0, %s260
      %p262 = pneg %p51
      %p263 = pneg %p48
      %p264 = pneg %p72
      %p265 = pneg %p69
      %p266 = pneg %p93
      %p267 = pneg %p90
      %p268 = pneg %p114
      %p269 = pneg %p111
      %p270 = pneg %p135
      %p271 = pneg %p132
      %p272 = pneg %p156
      %p273 = pneg %p153
      %p274 = pneg %p177
      %p275 = pneg %p174
      %p276 = pneg %p205
      %p277 = pneg %p202
      %s278 = smul.u32 16, %s23
      %p279 = scmp.lt.s32.totalorder %s22, 1
      %s280 = scalar_select %p279, %s22, 1
      %p281 = scmp.lt.s32.totalorder %s278, 15
      %s282 = scalar_select %p281, %s278, 15
      %s283 = smul.addr %s280, 16
      %s284 = sadd.s32 %s282, %s283
      %s285 = smul.addr %s284, 8
      %s286 = scalar_lea.vmem %s7, %s285
      %p287 = scmp.lt.s32.totalorder %s22, 1
      %s288 = scalar_select %p287, %s22, 1
      %s289 = smul.addr %s288, 30
      %s290 = smul.addr %s289, 4
      %s291 = scalar_lea.vmem %s0, %s290
      %s292 = smul.u32 16, %s23
      %p293 = scmp.lt.s32.totalorder %s22, 1
      %s294 = scalar_select %p293, %s22, 1
      %p295 = scmp.lt.s32.totalorder %s292, 15
      %s296 = scalar_select %p295, %s292, 15
      %s297 = smul.addr %s294, 16
      %s298 = sadd.s32 %s296, %s297
      %s299 = smul.addr %s298, 8
      %s300 = scalar_lea.vmem %s7, %s299
      %s301 = smul.u32 16, %s23
      %s303 = smul.u32 %s23, 128
      %s304 = sshra.s32 %s303, 3
      %s305 = sand.u32 %s303, 7
      %s306 = smul.addr %s304, 4
      %s307 = scalar_lea.vmem %s291, %s306
      %v308 = vld [vmem:[%s307] sm:$0xf]
      %v309 = vld [vmem:[%s307 + $0x4] sm:$0xf]
      %v310 = vld [vmem:[%s307 + $0x8] sm:$0xf]
      %v311 = vld [vmem:[%s307 + $0xc] sm:$0xf]
      %v312 = vld [vmem:[%s307 + $0x10] sm:$0xf]
      %v313 = vld [vmem:[%s307 + $0x14] sm:$0xf]
      %v314 = vld [vmem:[%s307 + $0x18] sm:$0xf]
      %v315 = vld [vmem:[%s307 + $0x1c] sm:$0xf]
      %v316 = vld [vmem:[%s307 + $0x20] sm:$0xf]
      %v317 = vld [vmem:[%s307 + $0x24] sm:$0xf]
      %v318 = vld [vmem:[%s307 + $0x28] sm:$0xf]
      %v319 = vld [vmem:[%s307 + $0x2c] sm:$0xf]
      %v320 = vld [vmem:[%s307 + $0x30] sm:$0xf]
      %v321 = vld [vmem:[%s307 + $0x34] sm:$0xf]
      %v322 = vld [vmem:[%s307 + $0x38] sm:$0xf]
      %v323 = vld [vmem:[%s307 + $0x3c] sm:$0xf]
      %v324 = vld [vmem:[%s307 + $0x40] sm:$0xf]
      %v325 = vld [vmem:[%s307 + $0x44] sm:$0xf]
      %v326 = vld [vmem:[%s307 + $0x48] sm:$0xf]
      %v327 = vld [vmem:[%s307 + $0x4c] sm:$0xf]
      %v328 = vld [vmem:[%s307 + $0x50] sm:$0xf]
      %v329 = vld [vmem:[%s307 + $0x54] sm:$0xf]
      %v330 = vld [vmem:[%s307 + $0x58] sm:$0xf]
      %v331 = vld [vmem:[%s307 + $0x5c] sm:$0xf]
      %v332 = vld [vmem:[%s307 + $0x60] sm:$0xf]
      %v333 = vld [vmem:[%s307 + $0x64] sm:$0xf]
      %v334 = vld [vmem:[%s307 + $0x68] sm:$0xf]
      %v335 = vld [vmem:[%s307 + $0x6c] sm:$0xf]
      %v336 = vld [vmem:[%s307 + $0x70] sm:$0xf]
      %v337 = vunpack.c.l.bf16 %v308
      %v338 = vunpack.c.l.bf16 %v309
      %v339 = vunpack.c.l.bf16 %v310
      %v340 = vunpack.c.l.bf16 %v311
      %v341 = vunpack.c.l.bf16 %v312
      %v342 = vunpack.c.l.bf16 %v313
      %v343 = vunpack.c.l.bf16 %v314
      %v344 = vunpack.c.l.bf16 %v315
      %v345 = vunpack.c.l.bf16 %v316
      %v346 = vunpack.c.l.bf16 %v317
      %v347 = vunpack.c.l.bf16 %v318
      %v348 = vunpack.c.l.bf16 %v319
      %v349 = vunpack.c.l.bf16 %v320
      %v350 = vunpack.c.l.bf16 %v321
      %v351 = vunpack.c.l.bf16 %v322
      %v352 = vunpack.c.l.bf16 %v323
      %v353 = vunpack.c.l.bf16 %v324
      %v354 = vunpack.c.l.bf16 %v325
      %v355 = vunpack.c.l.bf16 %v326
      %v356 = vunpack.c.l.bf16 %v327
      %v357 = vunpack.c.l.bf16 %v328
      %v358 = vunpack.c.l.bf16 %v329
      %v359 = vunpack.c.l.bf16 %v330
      %v360 = vunpack.c.l.bf16 %v331
      %v361 = vunpack.c.l.bf16 %v332
      %v362 = vunpack.c.l.bf16 %v333
      %v363 = vunpack.c.l.bf16 %v334
      %v364 = vunpack.c.l.bf16 %v335
      %v365 = vunpack.c.l.bf16 %v336
      %v366 = vld [vmem:[%s1] sm:$0x1]
      %v367 = vperm.slane %v366, 0
      %v368 = vmul.f32 %v337, %v367
      %v369 = vmul.f32 %v338, %v367
      %v370 = vmul.f32 %v339, %v367
      %v371 = vmul.f32 %v340, %v367
      %v372 = vmul.f32 %v341, %v367
      %v373 = vmul.f32 %v342, %v367
      %v374 = vmul.f32 %v343, %v367
      %v375 = vmul.f32 %v344, %v367
      %v376 = vmul.f32 %v345, %v367
      %v377 = vmul.f32 %v346, %v367
      %v378 = vmul.f32 %v347, %v367
      %v379 = vmul.f32 %v348, %v367
      %v380 = vmul.f32 %v349, %v367
      %v381 = vmul.f32 %v350, %v367
      %v382 = vmul.f32 %v351, %v367
      %v383 = vmul.f32 %v352, %v367
      %s384 = scalar_lea.vmem %s1, 8
      %v385 = vld [vmem:[%s384] sm:$0x1]
      %v386 = vperm.slane %v385, 0
      %v387 = vmul.f32 %v339, %v386
      %v388 = vmul.f32 %v340, %v386
      %v389 = vmul.f32 %v341, %v386
      %v390 = vmul.f32 %v342, %v386
      %v391 = vmul.f32 %v343, %v386
      %v392 = vmul.f32 %v344, %v386
      %v393 = vmul.f32 %v345, %v386
      %v394 = vmul.f32 %v346, %v386
      %v395 = vmul.f32 %v347, %v386
      %v396 = vmul.f32 %v348, %v386
      %v397 = vmul.f32 %v349, %v386
      %v398 = vmul.f32 %v350, %v386
      %v399 = vmul.f32 %v351, %v386
      %v400 = vmul.f32 %v352, %v386
      %v401 = vmul.f32 %v353, %v386
      %v402 = vmul.f32 %v354, %v386
      %v403 = vadd.f32 %v368, %v387
      %v404 = vadd.f32 %v369, %v388
      %v405 = vadd.f32 %v370, %v389
      %v406 = vadd.f32 %v371, %v390
      %v407 = vadd.f32 %v372, %v391
      %v408 = vadd.f32 %v373, %v392
      %v409 = vadd.f32 %v374, %v393
      %v410 = vadd.f32 %v375, %v394
      %v411 = vadd.f32 %v376, %v395
      %v412 = vadd.f32 %v377, %v396
      %v413 = vadd.f32 %v378, %v397
      %v414 = vadd.f32 %v379, %v398
      %v415 = vadd.f32 %v380, %v399
      %v416 = vadd.f32 %v381, %v400
      %v417 = vadd.f32 %v382, %v401
      %v418 = vadd.f32 %v383, %v402
      %s419 = scalar_lea.vmem %s1, 16
      %v420 = vld [vmem:[%s419] sm:$0x1]
      %v421 = vperm.slane %v420, 0
      %v422 = vmul.f32 %v341, %v421
      %v423 = vmul.f32 %v342, %v421
      %v424 = vmul.f32 %v343, %v421
      %v425 = vmul.f32 %v344, %v421
      %v426 = vmul.f32 %v345, %v421
      %v427 = vmul.f32 %v346, %v421
      %v428 = vmul.f32 %v347, %v421
      %v429 = vmul.f32 %v348, %v421
      %v430 = vmul.f32 %v349, %v421
      %v431 = vmul.f32 %v350, %v421
      %v432 = vmul.f32 %v351, %v421
      %v433 = vmul.f32 %v352, %v421
      %v434 = vmul.f32 %v353, %v421
      %v435 = vmul.f32 %v354, %v421
      %v436 = vmul.f32 %v355, %v421
      %v437 = vmul.f32 %v356, %v421
      %v438 = vadd.f32 %v403, %v422
      %v439 = vadd.f32 %v404, %v423
      %v440 = vadd.f32 %v405, %v424
      %v441 = vadd.f32 %v406, %v425
      %v442 = vadd.f32 %v407, %v426
      %v443 = vadd.f32 %v408, %v427
      %v444 = vadd.f32 %v409, %v428
      %v445 = vadd.f32 %v410, %v429
      %v446 = vadd.f32 %v411, %v430
      %v447 = vadd.f32 %v412, %v431
      %v448 = vadd.f32 %v413, %v432
      %v449 = vadd.f32 %v414, %v433
      %v450 = vadd.f32 %v415, %v434
      %v451 = vadd.f32 %v416, %v435
      %v452 = vadd.f32 %v417, %v436
      %v453 = vadd.f32 %v418, %v437
      %s454 = scalar_lea.vmem %s1, 24
      %v455 = vld [vmem:[%s454] sm:$0x1]
      %v456 = vperm.slane %v455, 0
      %v457 = vmul.f32 %v343, %v456
      %v458 = vmul.f32 %v344, %v456
      %v459 = vmul.f32 %v345, %v456
      %v460 = vmul.f32 %v346, %v456
      %v461 = vmul.f32 %v347, %v456
      %v462 = vmul.f32 %v348, %v456
      %v463 = vmul.f32 %v349, %v456
      %v464 = vmul.f32 %v350, %v456
      %v465 = vmul.f32 %v351, %v456
      %v466 = vmul.f32 %v352, %v456
      %v467 = vmul.f32 %v353, %v456
      %v468 = vmul.f32 %v354, %v456
      %v469 = vmul.f32 %v355, %v456
      %v470 = vmul.f32 %v356, %v456
      %v471 = vmul.f32 %v357, %v456
      %v472 = vmul.f32 %v358, %v456
      %v473 = vadd.f32 %v438, %v457
      %v474 = vadd.f32 %v439, %v458
      %v475 = vadd.f32 %v440, %v459
      %v476 = vadd.f32 %v441, %v460
      %v477 = vadd.f32 %v442, %v461
      %v478 = vadd.f32 %v443, %v462
      %v479 = vadd.f32 %v444, %v463
      %v480 = vadd.f32 %v445, %v464
      %v481 = vadd.f32 %v446, %v465
      %v482 = vadd.f32 %v447, %v466
      %v483 = vadd.f32 %v448, %v467
      %v484 = vadd.f32 %v449, %v468
      %v485 = vadd.f32 %v450, %v469
      %v486 = vadd.f32 %v451, %v470
      %v487 = vadd.f32 %v452, %v471
      %v488 = vadd.f32 %v453, %v472
      %s489 = scalar_lea.vmem %s1, 32
      %v490 = vld [vmem:[%s489] sm:$0x1]
      %v491 = vperm.slane %v490, 0
      %v492 = vmul.f32 %v345, %v491
      %v493 = vmul.f32 %v346, %v491
      %v494 = vmul.f32 %v347, %v491
      %v495 = vmul.f32 %v348, %v491
      %v496 = vmul.f32 %v349, %v491
      %v497 = vmul.f32 %v350, %v491
      %v498 = vmul.f32 %v351, %v491
      %v499 = vmul.f32 %v352, %v491
      %v500 = vmul.f32 %v353, %v491
      %v501 = vmul.f32 %v354, %v491
      %v502 = vmul.f32 %v355, %v491
      %v503 = vmul.f32 %v356, %v491
      %v504 = vmul.f32 %v357, %v491
      %v505 = vmul.f32 %v358, %v491
      %v506 = vmul.f32 %v359, %v491
      %v507 = vmul.f32 %v360, %v491
      %v508 = vadd.f32 %v473, %v492
      %v509 = vadd.f32 %v474, %v493
      %v510 = vadd.f32 %v475, %v494
      %v511 = vadd.f32 %v476, %v495
      %v512 = vadd.f32 %v477, %v496
      %v513 = vadd.f32 %v478, %v497
      %v514 = vadd.f32 %v479, %v498
      %v515 = vadd.f32 %v480, %v499
      %v516 = vadd.f32 %v481, %v500
      %v517 = vadd.f32 %v482, %v501
      %v518 = vadd.f32 %v483, %v502
      %v519 = vadd.f32 %v484, %v503
      %v520 = vadd.f32 %v485, %v504
      %v521 = vadd.f32 %v486, %v505
      %v522 = vadd.f32 %v487, %v506
      %v523 = vadd.f32 %v488, %v507
      %s524 = scalar_lea.vmem %s1, 40
      %v525 = vld [vmem:[%s524] sm:$0x1]
      %v526 = vperm.slane %v525, 0
      %v527 = vmul.f32 %v347, %v526
      %v528 = vmul.f32 %v348, %v526
      %v529 = vmul.f32 %v349, %v526
      %v530 = vmul.f32 %v350, %v526
      %v531 = vmul.f32 %v351, %v526
      %v532 = vmul.f32 %v352, %v526
      %v533 = vmul.f32 %v353, %v526
      %v534 = vmul.f32 %v354, %v526
      %v535 = vmul.f32 %v355, %v526
      %v536 = vmul.f32 %v356, %v526
      %v537 = vmul.f32 %v357, %v526
      %v538 = vmul.f32 %v358, %v526
      %v539 = vmul.f32 %v359, %v526
      %v540 = vmul.f32 %v360, %v526
      %v541 = vmul.f32 %v361, %v526
      %v542 = vmul.f32 %v362, %v526
      %v543 = vadd.f32 %v508, %v527
      %v544 = vadd.f32 %v509, %v528
      %v545 = vadd.f32 %v510, %v529
      %v546 = vadd.f32 %v511, %v530
      %v547 = vadd.f32 %v512, %v531
      %v548 = vadd.f32 %v513, %v532
      %v549 = vadd.f32 %v514, %v533
      %v550 = vadd.f32 %v515, %v534
      %v551 = vadd.f32 %v516, %v535
      %v552 = vadd.f32 %v517, %v536
      %v553 = vadd.f32 %v518, %v537
      %v554 = vadd.f32 %v519, %v538
      %v555 = vadd.f32 %v520, %v539
      %v556 = vadd.f32 %v521, %v540
      %v557 = vadd.f32 %v522, %v541
      %v558 = vadd.f32 %v523, %v542
      %s559 = scalar_lea.vmem %s1, 48
      %v560 = vld [vmem:[%s559] sm:$0x1]
      %v561 = vperm.slane %v560, 0
      %v562 = vmul.f32 %v349, %v561
      %v563 = vmul.f32 %v350, %v561
      %v564 = vmul.f32 %v351, %v561
      %v565 = vmul.f32 %v352, %v561
      %v566 = vmul.f32 %v353, %v561
      %v567 = vmul.f32 %v354, %v561
      %v568 = vmul.f32 %v355, %v561
      %v569 = vmul.f32 %v356, %v561
      %v570 = vmul.f32 %v357, %v561
      %v571 = vmul.f32 %v358, %v561
      %v572 = vmul.f32 %v359, %v561
      %v573 = vmul.f32 %v360, %v561
      %v574 = vmul.f32 %v361, %v561
      %v575 = vmul.f32 %v362, %v561
      %v576 = vmul.f32 %v363, %v561
      %v577 = vmul.f32 %v364, %v561
      %v578 = vadd.f32 %v543, %v562
      %v579 = vadd.f32 %v544, %v563
      %v580 = vadd.f32 %v545, %v564
      %v581 = vadd.f32 %v546, %v565
      %v582 = vadd.f32 %v547, %v566
      %v583 = vadd.f32 %v548, %v567
      %v584 = vadd.f32 %v549, %v568
      %v585 = vadd.f32 %v550, %v569
      %v586 = vadd.f32 %v551, %v570
      %v587 = vadd.f32 %v552, %v571
      %v588 = vadd.f32 %v553, %v572
      %v589 = vadd.f32 %v554, %v573
      %v590 = vadd.f32 %v555, %v574
      %v591 = vadd.f32 %v556, %v575
      %v592 = vadd.f32 %v557, %v576
      %v593 = vadd.f32 %v558, %v577
      %v594 = vrot.slane %v337, 1
      %v595 = vrot.slane %v338, 1
      %v596 = vrot.slane %v339, 1
      %v597 = vrot.slane %v340, 1
      %v598 = vrot.slane %v341, 1
      %v599 = vrot.slane %v342, 1
      %v600 = vrot.slane %v343, 1
      %v601 = vrot.slane %v344, 1
      %v602 = vrot.slane %v345, 1
      %v603 = vrot.slane %v346, 1
      %v604 = vrot.slane %v347, 1
      %v605 = vrot.slane %v348, 1
      %v606 = vrot.slane %v349, 1
      %v607 = vrot.slane %v350, 1
      %v608 = vrot.slane %v351, 1
      %v609 = vrot.slane %v352, 1
      %v610 = vrot.slane %v353, 1
      %v611 = vrot.slane %v354, 1
      %v612 = vrot.slane %v355, 1
      %v613 = vrot.slane %v356, 1
      %v614 = vrot.slane %v357, 1
      %v615 = vrot.slane %v358, 1
      %v616 = vrot.slane %v359, 1
      %v617 = vrot.slane %v360, 1
      %v618 = vrot.slane %v361, 1
      %v619 = vrot.slane %v362, 1
      %v620 = vrot.slane %v363, 1
      %v621 = vrot.slane %v364, 1
      %v622 = vrot.slane %v365, 1
      %v623 = vlaneseq
      %v624 = vshrl.u32 %v623, 7
      %vm625 = vcmp.lt.s32.totalorder %v624, 7
      %v626 = vsel %vm625, %v621, %v622
      %v627 = vsel %vm625, %v620, %v621
      %v628 = vsel %vm625, %v619, %v620
      %v629 = vsel %vm625, %v618, %v619
      %v630 = vsel %vm625, %v617, %v618
      %v631 = vsel %vm625, %v616, %v617
      %v632 = vsel %vm625, %v615, %v616
      %v633 = vsel %vm625, %v614, %v615
      %v634 = vsel %vm625, %v613, %v614
      %v635 = vsel %vm625, %v612, %v613
      %v636 = vsel %vm625, %v611, %v612
      %v637 = vsel %vm625, %v610, %v611
      %v638 = vsel %vm625, %v609, %v610
      %v639 = vsel %vm625, %v608, %v609
      %v640 = vsel %vm625, %v607, %v608
      %v641 = vsel %vm625, %v606, %v607
      %v642 = vsel %vm625, %v605, %v606
      %v643 = vsel %vm625, %v604, %v605
      %v644 = vsel %vm625, %v603, %v604
      %v645 = vsel %vm625, %v602, %v603
      %v646 = vsel %vm625, %v601, %v602
      %v647 = vsel %vm625, %v600, %v601
      %v648 = vsel %vm625, %v599, %v600
      %v649 = vsel %vm625, %v598, %v599
      %v650 = vsel %vm625, %v597, %v598
      %v651 = vsel %vm625, %v596, %v597
      %v652 = vsel %vm625, %v595, %v596
      %v653 = vsel %vm625, %v594, %v595
      %v654 = vld [vmem:[%s1 + $0x1] sm:$0x1]
      %v655 = vperm.slane %v654, 0
      %v656 = vmul.f32 %v653, %v655
      %v657 = vmul.f32 %v652, %v655
      %v658 = vmul.f32 %v651, %v655
      %v659 = vmul.f32 %v650, %v655
      %v660 = vmul.f32 %v649, %v655
      %v661 = vmul.f32 %v648, %v655
      %v662 = vmul.f32 %v647, %v655
      %v663 = vmul.f32 %v646, %v655
      %v664 = vmul.f32 %v645, %v655
      %v665 = vmul.f32 %v644, %v655
      %v666 = vmul.f32 %v643, %v655
      %v667 = vmul.f32 %v642, %v655
      %v668 = vmul.f32 %v641, %v655
      %v669 = vmul.f32 %v640, %v655
      %v670 = vmul.f32 %v639, %v655
      %v671 = vmul.f32 %v638, %v655
      %v672 = vadd.f32 %v578, %v656
      %v673 = vadd.f32 %v579, %v657
      %v674 = vadd.f32 %v580, %v658
      %v675 = vadd.f32 %v581, %v659
      %v676 = vadd.f32 %v582, %v660
      %v677 = vadd.f32 %v583, %v661
      %v678 = vadd.f32 %v584, %v662
      %v679 = vadd.f32 %v585, %v663
      %v680 = vadd.f32 %v586, %v664
      %v681 = vadd.f32 %v587, %v665
      %v682 = vadd.f32 %v588, %v666
      %v683 = vadd.f32 %v589, %v667
      %v684 = vadd.f32 %v590, %v668
      %v685 = vadd.f32 %v591, %v669
      %v686 = vadd.f32 %v592, %v670
      %v687 = vadd.f32 %v593, %v671
      %v688 = vld [vmem:[%s384 + $0x1] sm:$0x1]
      %v689 = vperm.slane %v688, 0
      %v690 = vmul.f32 %v651, %v689
      %v691 = vmul.f32 %v650, %v689
      %v692 = vmul.f32 %v649, %v689
      %v693 = vmul.f32 %v648, %v689
      %v694 = vmul.f32 %v647, %v689
      %v695 = vmul.f32 %v646, %v689
      %v696 = vmul.f32 %v645, %v689
      %v697 = vmul.f32 %v644, %v689
      %v698 = vmul.f32 %v643, %v689
      %v699 = vmul.f32 %v642, %v689
      %v700 = vmul.f32 %v641, %v689
      %v701 = vmul.f32 %v640, %v689
      %v702 = vmul.f32 %v639, %v689
      %v703 = vmul.f32 %v638, %v689
      %v704 = vmul.f32 %v637, %v689
      %v705 = vmul.f32 %v636, %v689
      %v706 = vadd.f32 %v672, %v690
      %v707 = vadd.f32 %v673, %v691
      %v708 = vadd.f32 %v674, %v692
      %v709 = vadd.f32 %v675, %v693
      %v710 = vadd.f32 %v676, %v694
      %v711 = vadd.f32 %v677, %v695
      %v712 = vadd.f32 %v678, %v696
      %v713 = vadd.f32 %v679, %v697
      %v714 = vadd.f32 %v680, %v698
      %v715 = vadd.f32 %v681, %v699
      %v716 = vadd.f32 %v682, %v700
      %v717 = vadd.f32 %v683, %v701
      %v718 = vadd.f32 %v684, %v702
      %v719 = vadd.f32 %v685, %v703
      %v720 = vadd.f32 %v686, %v704
      %v721 = vadd.f32 %v687, %v705
      %v722 = vld [vmem:[%s419 + $0x1] sm:$0x1]
      %v723 = vperm.slane %v722, 0
      %v724 = vmul.f32 %v649, %v723
      %v725 = vmul.f32 %v648, %v723
      %v726 = vmul.f32 %v647, %v723
      %v727 = vmul.f32 %v646, %v723
      %v728 = vmul.f32 %v645, %v723
      %v729 = vmul.f32 %v644, %v723
      %v730 = vmul.f32 %v643, %v723
      %v731 = vmul.f32 %v642, %v723
      %v732 = vmul.f32 %v641, %v723
      %v733 = vmul.f32 %v640, %v723
      %v734 = vmul.f32 %v639, %v723
      %v735 = vmul.f32 %v638, %v723
      %v736 = vmul.f32 %v637, %v723
      %v737 = vmul.f32 %v636, %v723
      %v738 = vmul.f32 %v635, %v723
      %v739 = vmul.f32 %v634, %v723
      %v740 = vadd.f32 %v706, %v724
      %v741 = vadd.f32 %v707, %v725
      %v742 = vadd.f32 %v708, %v726
      %v743 = vadd.f32 %v709, %v727
      %v744 = vadd.f32 %v710, %v728
      %v745 = vadd.f32 %v711, %v729
      %v746 = vadd.f32 %v712, %v730
      %v747 = vadd.f32 %v713, %v731
      %v748 = vadd.f32 %v714, %v732
      %v749 = vadd.f32 %v715, %v733
      %v750 = vadd.f32 %v716, %v734
      %v751 = vadd.f32 %v717, %v735
      %v752 = vadd.f32 %v718, %v736
      %v753 = vadd.f32 %v719, %v737
      %v754 = vadd.f32 %v720, %v738
      %v755 = vadd.f32 %v721, %v739
      %v756 = vld [vmem:[%s454 + $0x1] sm:$0x1]
      %v757 = vperm.slane %v756, 0
      %v758 = vmul.f32 %v647, %v757
      %v759 = vmul.f32 %v646, %v757
      %v760 = vmul.f32 %v645, %v757
      %v761 = vmul.f32 %v644, %v757
      %v762 = vmul.f32 %v643, %v757
      %v763 = vmul.f32 %v642, %v757
      %v764 = vmul.f32 %v641, %v757
      %v765 = vmul.f32 %v640, %v757
      %v766 = vmul.f32 %v639, %v757
      %v767 = vmul.f32 %v638, %v757
      %v768 = vmul.f32 %v637, %v757
      %v769 = vmul.f32 %v636, %v757
      %v770 = vmul.f32 %v635, %v757
      %v771 = vmul.f32 %v634, %v757
      %v772 = vmul.f32 %v633, %v757
      %v773 = vmul.f32 %v632, %v757
      %v774 = vadd.f32 %v740, %v758
      %v775 = vadd.f32 %v741, %v759
      %v776 = vadd.f32 %v742, %v760
      %v777 = vadd.f32 %v743, %v761
      %v778 = vadd.f32 %v744, %v762
      %v779 = vadd.f32 %v745, %v763
      %v780 = vadd.f32 %v746, %v764
      %v781 = vadd.f32 %v747, %v765
      %v782 = vadd.f32 %v748, %v766
      %v783 = vadd.f32 %v749, %v767
      %v784 = vadd.f32 %v750, %v768
      %v785 = vadd.f32 %v751, %v769
      %v786 = vadd.f32 %v752, %v770
      %v787 = vadd.f32 %v753, %v771
      %v788 = vadd.f32 %v754, %v772
      %v789 = vadd.f32 %v755, %v773
      %v790 = vld [vmem:[%s489 + $0x1] sm:$0x1]
      %v791 = vperm.slane %v790, 0
      %v792 = vmul.f32 %v645, %v791
      %v793 = vmul.f32 %v644, %v791
      %v794 = vmul.f32 %v643, %v791
      %v795 = vmul.f32 %v642, %v791
      %v796 = vmul.f32 %v641, %v791
      %v797 = vmul.f32 %v640, %v791
      %v798 = vmul.f32 %v639, %v791
      %v799 = vmul.f32 %v638, %v791
      %v800 = vmul.f32 %v637, %v791
      %v801 = vmul.f32 %v636, %v791
      %v802 = vmul.f32 %v635, %v791
      %v803 = vmul.f32 %v634, %v791
      %v804 = vmul.f32 %v633, %v791
      %v805 = vmul.f32 %v632, %v791
      %v806 = vmul.f32 %v631, %v791
      %v807 = vmul.f32 %v630, %v791
      %v808 = vadd.f32 %v774, %v792
      %v809 = vadd.f32 %v775, %v793
      %v810 = vadd.f32 %v776, %v794
      %v811 = vadd.f32 %v777, %v795
      %v812 = vadd.f32 %v778, %v796
      %v813 = vadd.f32 %v779, %v797
      %v814 = vadd.f32 %v780, %v798
      %v815 = vadd.f32 %v781, %v799
      %v816 = vadd.f32 %v782, %v800
      %v817 = vadd.f32 %v783, %v801
      %v818 = vadd.f32 %v784, %v802
      %v819 = vadd.f32 %v785, %v803
      %v820 = vadd.f32 %v786, %v804
      %v821 = vadd.f32 %v787, %v805
      %v822 = vadd.f32 %v788, %v806
      %v823 = vadd.f32 %v789, %v807
      %v824 = vld [vmem:[%s524 + $0x1] sm:$0x1]
      %v825 = vperm.slane %v824, 0
      %v826 = vmul.f32 %v643, %v825
      %v827 = vmul.f32 %v642, %v825
      %v828 = vmul.f32 %v641, %v825
      %v829 = vmul.f32 %v640, %v825
      %v830 = vmul.f32 %v639, %v825
      %v831 = vmul.f32 %v638, %v825
      %v832 = vmul.f32 %v637, %v825
      %v833 = vmul.f32 %v636, %v825
      %v834 = vmul.f32 %v635, %v825
      %v835 = vmul.f32 %v634, %v825
      %v836 = vmul.f32 %v633, %v825
      %v837 = vmul.f32 %v632, %v825
      %v838 = vmul.f32 %v631, %v825
      %v839 = vmul.f32 %v630, %v825
      %v840 = vmul.f32 %v629, %v825
      %v841 = vmul.f32 %v628, %v825
      %v842 = vadd.f32 %v808, %v826
      %v843 = vadd.f32 %v809, %v827
      %v844 = vadd.f32 %v810, %v828
      %v845 = vadd.f32 %v811, %v829
      %v846 = vadd.f32 %v812, %v830
      %v847 = vadd.f32 %v813, %v831
      %v848 = vadd.f32 %v814, %v832
      %v849 = vadd.f32 %v815, %v833
      %v850 = vadd.f32 %v816, %v834
      %v851 = vadd.f32 %v817, %v835
      %v852 = vadd.f32 %v818, %v836
      %v853 = vadd.f32 %v819, %v837
      %v854 = vadd.f32 %v820, %v838
      %v855 = vadd.f32 %v821, %v839
      %v856 = vadd.f32 %v822, %v840
      %v857 = vadd.f32 %v823, %v841
      %v858 = vld [vmem:[%s559 + $0x1] sm:$0x1]
      %v859 = vperm.slane %v858, 0
      %v860 = vmul.f32 %v641, %v859
      %v861 = vmul.f32 %v640, %v859
      %v862 = vmul.f32 %v639, %v859
      %v863 = vmul.f32 %v638, %v859
      %v864 = vmul.f32 %v637, %v859
      %v865 = vmul.f32 %v636, %v859
      %v866 = vmul.f32 %v635, %v859
      %v867 = vmul.f32 %v634, %v859
      %v868 = vmul.f32 %v633, %v859
      %v869 = vmul.f32 %v632, %v859
      %v870 = vmul.f32 %v631, %v859
      %v871 = vmul.f32 %v630, %v859
      %v872 = vmul.f32 %v629, %v859
      %v873 = vmul.f32 %v628, %v859
      %v874 = vmul.f32 %v627, %v859
      %v875 = vmul.f32 %v626, %v859
      %v876 = vadd.f32 %v842, %v860
      %v877 = vadd.f32 %v843, %v861
      %v878 = vadd.f32 %v844, %v862
      %v879 = vadd.f32 %v845, %v863
      %v880 = vadd.f32 %v846, %v864
      %v881 = vadd.f32 %v847, %v865
      %v882 = vadd.f32 %v848, %v866
      %v883 = vadd.f32 %v849, %v867
      %v884 = vadd.f32 %v850, %v868
      %v885 = vadd.f32 %v851, %v869
      %v886 = vadd.f32 %v852, %v870
      %v887 = vadd.f32 %v853, %v871
      %v888 = vadd.f32 %v854, %v872
      %v889 = vadd.f32 %v855, %v873
      %v890 = vadd.f32 %v856, %v874
      %v891 = vadd.f32 %v857, %v875
      %v892 = vrot.slane %v337, 2
      %v893 = vrot.slane %v338, 2
      %v894 = vrot.slane %v339, 2
      %v895 = vrot.slane %v340, 2
      %v896 = vrot.slane %v341, 2
      %v897 = vrot.slane %v342, 2
      %v898 = vrot.slane %v343, 2
      %v899 = vrot.slane %v344, 2
      %v900 = vrot.slane %v345, 2
      %v901 = vrot.slane %v346, 2
      %v902 = vrot.slane %v347, 2
      %v903 = vrot.slane %v348, 2
      %v904 = vrot.slane %v349, 2
      %v905 = vrot.slane %v350, 2
      %v906 = vrot.slane %v351, 2
      %v907 = vrot.slane %v352, 2
      %v908 = vrot.slane %v353, 2
      %v909 = vrot.slane %v354, 2
      %v910 = vrot.slane %v355, 2
      %v911 = vrot.slane %v356, 2
      %v912 = vrot.slane %v357, 2
      %v913 = vrot.slane %v358, 2
      %v914 = vrot.slane %v359, 2
      %v915 = vrot.slane %v360, 2
      %v916 = vrot.slane %v361, 2
      %v917 = vrot.slane %v362, 2
      %v918 = vrot.slane %v363, 2
      %v919 = vrot.slane %v364, 2
      %v920 = vrot.slane %v365, 2
      %vm921 = vcmp.lt.s32.totalorder %v624, 6
      %v922 = vsel %vm921, %v919, %v920
      %v923 = vsel %vm921, %v918, %v919
      %v924 = vsel %vm921, %v917, %v918
      %v925 = vsel %vm921, %v916, %v917
      %v926 = vsel %vm921, %v915, %v916
      %v927 = vsel %vm921, %v914, %v915
      %v928 = vsel %vm921, %v913, %v914
      %v929 = vsel %vm921, %v912, %v913
      %v930 = vsel %vm921, %v911, %v912
      %v931 = vsel %vm921, %v910, %v911
      %v932 = vsel %vm921, %v909, %v910
      %v933 = vsel %vm921, %v908, %v909
      %v934 = vsel %vm921, %v907, %v908
      %v935 = vsel %vm921, %v906, %v907
      %v936 = vsel %vm921, %v905, %v906
      %v937 = vsel %vm921, %v904, %v905
      %v938 = vsel %vm921, %v903, %v904
      %v939 = vsel %vm921, %v902, %v903
      %v940 = vsel %vm921, %v901, %v902
      %v941 = vsel %vm921, %v900, %v901
      %v942 = vsel %vm921, %v899, %v900
      %v943 = vsel %vm921, %v898, %v899
      %v944 = vsel %vm921, %v897, %v898
      %v945 = vsel %vm921, %v896, %v897
      %v946 = vsel %vm921, %v895, %v896
      %v947 = vsel %vm921, %v894, %v895
      %v948 = vsel %vm921, %v893, %v894
      %v949 = vsel %vm921, %v892, %v893
      %v950 = vld [vmem:[%s1 + $0x2] sm:$0x1]
      %v951 = vperm.slane %v950, 0
      %v952 = vmul.f32 %v949, %v951
      %v953 = vmul.f32 %v948, %v951
      %v954 = vmul.f32 %v947, %v951
      %v955 = vmul.f32 %v946, %v951
      %v956 = vmul.f32 %v945, %v951
      %v957 = vmul.f32 %v944, %v951
      %v958 = vmul.f32 %v943, %v951
      %v959 = vmul.f32 %v942, %v951
      %v960 = vmul.f32 %v941, %v951
      %v961 = vmul.f32 %v940, %v951
      %v962 = vmul.f32 %v939, %v951
      %v963 = vmul.f32 %v938, %v951
      %v964 = vmul.f32 %v937, %v951
      %v965 = vmul.f32 %v936, %v951
      %v966 = vmul.f32 %v935, %v951
      %v967 = vmul.f32 %v934, %v951
      %v968 = vadd.f32 %v876, %v952
      %v969 = vadd.f32 %v877, %v953
      %v970 = vadd.f32 %v878, %v954
      %v971 = vadd.f32 %v879, %v955
      %v972 = vadd.f32 %v880, %v956
      %v973 = vadd.f32 %v881, %v957
      %v974 = vadd.f32 %v882, %v958
      %v975 = vadd.f32 %v883, %v959
      %v976 = vadd.f32 %v884, %v960
      %v977 = vadd.f32 %v885, %v961
      %v978 = vadd.f32 %v886, %v962
      %v979 = vadd.f32 %v887, %v963
      %v980 = vadd.f32 %v888, %v964
      %v981 = vadd.f32 %v889, %v965
      %v982 = vadd.f32 %v890, %v966
      %v983 = vadd.f32 %v891, %v967
      %v984 = vld [vmem:[%s384 + $0x2] sm:$0x1]
      %v985 = vperm.slane %v984, 0
      %v986 = vmul.f32 %v947, %v985
      %v987 = vmul.f32 %v946, %v985
      %v988 = vmul.f32 %v945, %v985
      %v989 = vmul.f32 %v944, %v985
      %v990 = vmul.f32 %v943, %v985
      %v991 = vmul.f32 %v942, %v985
      %v992 = vmul.f32 %v941, %v985
      %v993 = vmul.f32 %v940, %v985
      %v994 = vmul.f32 %v939, %v985
      %v995 = vmul.f32 %v938, %v985
      %v996 = vmul.f32 %v937, %v985
      %v997 = vmul.f32 %v936, %v985
      %v998 = vmul.f32 %v935, %v985
      %v999 = vmul.f32 %v934, %v985
      %v1000 = vmul.f32 %v933, %v985
      %v1001 = vmul.f32 %v932, %v985
      %v1002 = vadd.f32 %v968, %v986
      %v1003 = vadd.f32 %v969, %v987
      %v1004 = vadd.f32 %v970, %v988
      %v1005 = vadd.f32 %v971, %v989
      %v1006 = vadd.f32 %v972, %v990
      %v1007 = vadd.f32 %v973, %v991
      %v1008 = vadd.f32 %v974, %v992
      %v1009 = vadd.f32 %v975, %v993
      %v1010 = vadd.f32 %v976, %v994
      %v1011 = vadd.f32 %v977, %v995
      %v1012 = vadd.f32 %v978, %v996
      %v1013 = vadd.f32 %v979, %v997
      %v1014 = vadd.f32 %v980, %v998
      %v1015 = vadd.f32 %v981, %v999
      %v1016 = vadd.f32 %v982, %v1000
      %v1017 = vadd.f32 %v983, %v1001
      %v1018 = vld [vmem:[%s419 + $0x2] sm:$0x1]
      %v1019 = vperm.slane %v1018, 0
      %v1020 = vmul.f32 %v945, %v1019
      %v1021 = vmul.f32 %v944, %v1019
      %v1022 = vmul.f32 %v943, %v1019
      %v1023 = vmul.f32 %v942, %v1019
      %v1024 = vmul.f32 %v941, %v1019
      %v1025 = vmul.f32 %v940, %v1019
      %v1026 = vmul.f32 %v939, %v1019
      %v1027 = vmul.f32 %v938, %v1019
      %v1028 = vmul.f32 %v937, %v1019
      %v1029 = vmul.f32 %v936, %v1019
      %v1030 = vmul.f32 %v935, %v1019
      %v1031 = vmul.f32 %v934, %v1019
      %v1032 = vmul.f32 %v933, %v1019
      %v1033 = vmul.f32 %v932, %v1019
      %v1034 = vmul.f32 %v931, %v1019
      %v1035 = vmul.f32 %v930, %v1019
      %v1036 = vadd.f32 %v1002, %v1020
      %v1037 = vadd.f32 %v1003, %v1021
      %v1038 = vadd.f32 %v1004, %v1022
      %v1039 = vadd.f32 %v1005, %v1023
      %v1040 = vadd.f32 %v1006, %v1024
      %v1041 = vadd.f32 %v1007, %v1025
      %v1042 = vadd.f32 %v1008, %v1026
      %v1043 = vadd.f32 %v1009, %v1027
      %v1044 = vadd.f32 %v1010, %v1028
      %v1045 = vadd.f32 %v1011, %v1029
      %v1046 = vadd.f32 %v1012, %v1030
      %v1047 = vadd.f32 %v1013, %v1031
      %v1048 = vadd.f32 %v1014, %v1032
      %v1049 = vadd.f32 %v1015, %v1033
      %v1050 = vadd.f32 %v1016, %v1034
      %v1051 = vadd.f32 %v1017, %v1035
      %v1052 = vld [vmem:[%s454 + $0x2] sm:$0x1]
      %v1053 = vperm.slane %v1052, 0
      %v1054 = vmul.f32 %v943, %v1053
      %v1055 = vmul.f32 %v942, %v1053
      %v1056 = vmul.f32 %v941, %v1053
      %v1057 = vmul.f32 %v940, %v1053
      %v1058 = vmul.f32 %v939, %v1053
      %v1059 = vmul.f32 %v938, %v1053
      %v1060 = vmul.f32 %v937, %v1053
      %v1061 = vmul.f32 %v936, %v1053
      %v1062 = vmul.f32 %v935, %v1053
      %v1063 = vmul.f32 %v934, %v1053
      %v1064 = vmul.f32 %v933, %v1053
      %v1065 = vmul.f32 %v932, %v1053
      %v1066 = vmul.f32 %v931, %v1053
      %v1067 = vmul.f32 %v930, %v1053
      %v1068 = vmul.f32 %v929, %v1053
      %v1069 = vmul.f32 %v928, %v1053
      %v1070 = vadd.f32 %v1036, %v1054
      %v1071 = vadd.f32 %v1037, %v1055
      %v1072 = vadd.f32 %v1038, %v1056
      %v1073 = vadd.f32 %v1039, %v1057
      %v1074 = vadd.f32 %v1040, %v1058
      %v1075 = vadd.f32 %v1041, %v1059
      %v1076 = vadd.f32 %v1042, %v1060
      %v1077 = vadd.f32 %v1043, %v1061
      %v1078 = vadd.f32 %v1044, %v1062
      %v1079 = vadd.f32 %v1045, %v1063
      %v1080 = vadd.f32 %v1046, %v1064
      %v1081 = vadd.f32 %v1047, %v1065
      %v1082 = vadd.f32 %v1048, %v1066
      %v1083 = vadd.f32 %v1049, %v1067
      %v1084 = vadd.f32 %v1050, %v1068
      %v1085 = vadd.f32 %v1051, %v1069
      %v1086 = vld [vmem:[%s489 + $0x2] sm:$0x1]
      %v1087 = vperm.slane %v1086, 0
      %v1088 = vmul.f32 %v941, %v1087
      %v1089 = vmul.f32 %v940, %v1087
      %v1090 = vmul.f32 %v939, %v1087
      %v1091 = vmul.f32 %v938, %v1087
      %v1092 = vmul.f32 %v937, %v1087
      %v1093 = vmul.f32 %v936, %v1087
      %v1094 = vmul.f32 %v935, %v1087
      %v1095 = vmul.f32 %v934, %v1087
      %v1096 = vmul.f32 %v933, %v1087
      %v1097 = vmul.f32 %v932, %v1087
      %v1098 = vmul.f32 %v931, %v1087
      %v1099 = vmul.f32 %v930, %v1087
      %v1100 = vmul.f32 %v929, %v1087
      %v1101 = vmul.f32 %v928, %v1087
      %v1102 = vmul.f32 %v927, %v1087
      %v1103 = vmul.f32 %v926, %v1087
      %v1104 = vadd.f32 %v1070, %v1088
      %v1105 = vadd.f32 %v1071, %v1089
      %v1106 = vadd.f32 %v1072, %v1090
      %v1107 = vadd.f32 %v1073, %v1091
      %v1108 = vadd.f32 %v1074, %v1092
      %v1109 = vadd.f32 %v1075, %v1093
      %v1110 = vadd.f32 %v1076, %v1094
      %v1111 = vadd.f32 %v1077, %v1095
      %v1112 = vadd.f32 %v1078, %v1096
      %v1113 = vadd.f32 %v1079, %v1097
      %v1114 = vadd.f32 %v1080, %v1098
      %v1115 = vadd.f32 %v1081, %v1099
      %v1116 = vadd.f32 %v1082, %v1100
      %v1117 = vadd.f32 %v1083, %v1101
      %v1118 = vadd.f32 %v1084, %v1102
      %v1119 = vadd.f32 %v1085, %v1103
      %v1120 = vld [vmem:[%s524 + $0x2] sm:$0x1]
      %v1121 = vperm.slane %v1120, 0
      %v1122 = vmul.f32 %v939, %v1121
      %v1123 = vmul.f32 %v938, %v1121
      %v1124 = vmul.f32 %v937, %v1121
      %v1125 = vmul.f32 %v936, %v1121
      %v1126 = vmul.f32 %v935, %v1121
      %v1127 = vmul.f32 %v934, %v1121
      %v1128 = vmul.f32 %v933, %v1121
      %v1129 = vmul.f32 %v932, %v1121
      %v1130 = vmul.f32 %v931, %v1121
      %v1131 = vmul.f32 %v930, %v1121
      %v1132 = vmul.f32 %v929, %v1121
      %v1133 = vmul.f32 %v928, %v1121
      %v1134 = vmul.f32 %v927, %v1121
      %v1135 = vmul.f32 %v926, %v1121
      %v1136 = vmul.f32 %v925, %v1121
      %v1137 = vmul.f32 %v924, %v1121
      %v1138 = vadd.f32 %v1104, %v1122
      %v1139 = vadd.f32 %v1105, %v1123
      %v1140 = vadd.f32 %v1106, %v1124
      %v1141 = vadd.f32 %v1107, %v1125
      %v1142 = vadd.f32 %v1108, %v1126
      %v1143 = vadd.f32 %v1109, %v1127
      %v1144 = vadd.f32 %v1110, %v1128
      %v1145 = vadd.f32 %v1111, %v1129
      %v1146 = vadd.f32 %v1112, %v1130
      %v1147 = vadd.f32 %v1113, %v1131
      %v1148 = vadd.f32 %v1114, %v1132
      %v1149 = vadd.f32 %v1115, %v1133
      %v1150 = vadd.f32 %v1116, %v1134
      %v1151 = vadd.f32 %v1117, %v1135
      %v1152 = vadd.f32 %v1118, %v1136
      %v1153 = vadd.f32 %v1119, %v1137
      %v1154 = vld [vmem:[%s559 + $0x2] sm:$0x1]
      %v1155 = vperm.slane %v1154, 0
      %v1156 = vmul.f32 %v937, %v1155
      %v1157 = vmul.f32 %v936, %v1155
      %v1158 = vmul.f32 %v935, %v1155
      %v1159 = vmul.f32 %v934, %v1155
      %v1160 = vmul.f32 %v933, %v1155
      %v1161 = vmul.f32 %v932, %v1155
      %v1162 = vmul.f32 %v931, %v1155
      %v1163 = vmul.f32 %v930, %v1155
      %v1164 = vmul.f32 %v929, %v1155
      %v1165 = vmul.f32 %v928, %v1155
      %v1166 = vmul.f32 %v927, %v1155
      %v1167 = vmul.f32 %v926, %v1155
      %v1168 = vmul.f32 %v925, %v1155
      %v1169 = vmul.f32 %v924, %v1155
      %v1170 = vmul.f32 %v923, %v1155
      %v1171 = vmul.f32 %v922, %v1155
      %v1172 = vadd.f32 %v1138, %v1156
      %v1173 = vadd.f32 %v1139, %v1157
      %v1174 = vadd.f32 %v1140, %v1158
      %v1175 = vadd.f32 %v1141, %v1159
      %v1176 = vadd.f32 %v1142, %v1160
      %v1177 = vadd.f32 %v1143, %v1161
      %v1178 = vadd.f32 %v1144, %v1162
      %v1179 = vadd.f32 %v1145, %v1163
      %v1180 = vadd.f32 %v1146, %v1164
      %v1181 = vadd.f32 %v1147, %v1165
      %v1182 = vadd.f32 %v1148, %v1166
      %v1183 = vadd.f32 %v1149, %v1167
      %v1184 = vadd.f32 %v1150, %v1168
      %v1185 = vadd.f32 %v1151, %v1169
      %v1186 = vadd.f32 %v1152, %v1170
      %v1187 = vadd.f32 %v1153, %v1171
      %v1188 = vrot.slane %v337, 3
      %v1189 = vrot.slane %v338, 3
      %v1190 = vrot.slane %v339, 3
      %v1191 = vrot.slane %v340, 3
      %v1192 = vrot.slane %v341, 3
      %v1193 = vrot.slane %v342, 3
      %v1194 = vrot.slane %v343, 3
      %v1195 = vrot.slane %v344, 3
      %v1196 = vrot.slane %v345, 3
      %v1197 = vrot.slane %v346, 3
      %v1198 = vrot.slane %v347, 3
      %v1199 = vrot.slane %v348, 3
      %v1200 = vrot.slane %v349, 3
      %v1201 = vrot.slane %v350, 3
      %v1202 = vrot.slane %v351, 3
      %v1203 = vrot.slane %v352, 3
      %v1204 = vrot.slane %v353, 3
      %v1205 = vrot.slane %v354, 3
      %v1206 = vrot.slane %v355, 3
      %v1207 = vrot.slane %v356, 3
      %v1208 = vrot.slane %v357, 3
      %v1209 = vrot.slane %v358, 3
      %v1210 = vrot.slane %v359, 3
      %v1211 = vrot.slane %v360, 3
      %v1212 = vrot.slane %v361, 3
      %v1213 = vrot.slane %v362, 3
      %v1214 = vrot.slane %v363, 3
      %v1215 = vrot.slane %v364, 3
      %v1216 = vrot.slane %v365, 3
      %vm1217 = vcmp.lt.s32.totalorder %v624, 5
      %v1218 = vsel %vm1217, %v1215, %v1216
      %v1219 = vsel %vm1217, %v1214, %v1215
      %v1220 = vsel %vm1217, %v1213, %v1214
      %v1221 = vsel %vm1217, %v1212, %v1213
      %v1222 = vsel %vm1217, %v1211, %v1212
      %v1223 = vsel %vm1217, %v1210, %v1211
      %v1224 = vsel %vm1217, %v1209, %v1210
      %v1225 = vsel %vm1217, %v1208, %v1209
      %v1226 = vsel %vm1217, %v1207, %v1208
      %v1227 = vsel %vm1217, %v1206, %v1207
      %v1228 = vsel %vm1217, %v1205, %v1206
      %v1229 = vsel %vm1217, %v1204, %v1205
      %v1230 = vsel %vm1217, %v1203, %v1204
      %v1231 = vsel %vm1217, %v1202, %v1203
      %v1232 = vsel %vm1217, %v1201, %v1202
      %v1233 = vsel %vm1217, %v1200, %v1201
      %v1234 = vsel %vm1217, %v1199, %v1200
      %v1235 = vsel %vm1217, %v1198, %v1199
      %v1236 = vsel %vm1217, %v1197, %v1198
      %v1237 = vsel %vm1217, %v1196, %v1197
      %v1238 = vsel %vm1217, %v1195, %v1196
      %v1239 = vsel %vm1217, %v1194, %v1195
      %v1240 = vsel %vm1217, %v1193, %v1194
      %v1241 = vsel %vm1217, %v1192, %v1193
      %v1242 = vsel %vm1217, %v1191, %v1192
      %v1243 = vsel %vm1217, %v1190, %v1191
      %v1244 = vsel %vm1217, %v1189, %v1190
      %v1245 = vsel %vm1217, %v1188, %v1189
      %v1246 = vld [vmem:[%s1 + $0x3] sm:$0x1]
      %v1247 = vperm.slane %v1246, 0
      %v1248 = vmul.f32 %v1245, %v1247
      %v1249 = vmul.f32 %v1244, %v1247
      %v1250 = vmul.f32 %v1243, %v1247
      %v1251 = vmul.f32 %v1242, %v1247
      %v1252 = vmul.f32 %v1241, %v1247
      %v1253 = vmul.f32 %v1240, %v1247
      %v1254 = vmul.f32 %v1239, %v1247
      %v1255 = vmul.f32 %v1238, %v1247
      %v1256 = vmul.f32 %v1237, %v1247
      %v1257 = vmul.f32 %v1236, %v1247
      %v1258 = vmul.f32 %v1235, %v1247
      %v1259 = vmul.f32 %v1234, %v1247
      %v1260 = vmul.f32 %v1233, %v1247
      %v1261 = vmul.f32 %v1232, %v1247
      %v1262 = vmul.f32 %v1231, %v1247
      %v1263 = vmul.f32 %v1230, %v1247
      %v1264 = vadd.f32 %v1172, %v1248
      %v1265 = vadd.f32 %v1173, %v1249
      %v1266 = vadd.f32 %v1174, %v1250
      %v1267 = vadd.f32 %v1175, %v1251
      %v1268 = vadd.f32 %v1176, %v1252
      %v1269 = vadd.f32 %v1177, %v1253
      %v1270 = vadd.f32 %v1178, %v1254
      %v1271 = vadd.f32 %v1179, %v1255
      %v1272 = vadd.f32 %v1180, %v1256
      %v1273 = vadd.f32 %v1181, %v1257
      %v1274 = vadd.f32 %v1182, %v1258
      %v1275 = vadd.f32 %v1183, %v1259
      %v1276 = vadd.f32 %v1184, %v1260
      %v1277 = vadd.f32 %v1185, %v1261
      %v1278 = vadd.f32 %v1186, %v1262
      %v1279 = vadd.f32 %v1187, %v1263
      %v1280 = vld [vmem:[%s384 + $0x3] sm:$0x1]
      %v1281 = vperm.slane %v1280, 0
      %v1282 = vmul.f32 %v1243, %v1281
      %v1283 = vmul.f32 %v1242, %v1281
      %v1284 = vmul.f32 %v1241, %v1281
      %v1285 = vmul.f32 %v1240, %v1281
      %v1286 = vmul.f32 %v1239, %v1281
      %v1287 = vmul.f32 %v1238, %v1281
      %v1288 = vmul.f32 %v1237, %v1281
      %v1289 = vmul.f32 %v1236, %v1281
      %v1290 = vmul.f32 %v1235, %v1281
      %v1291 = vmul.f32 %v1234, %v1281
      %v1292 = vmul.f32 %v1233, %v1281
      %v1293 = vmul.f32 %v1232, %v1281
      %v1294 = vmul.f32 %v1231, %v1281
      %v1295 = vmul.f32 %v1230, %v1281
      %v1296 = vmul.f32 %v1229, %v1281
      %v1297 = vmul.f32 %v1228, %v1281
      %v1298 = vadd.f32 %v1264, %v1282
      %v1299 = vadd.f32 %v1265, %v1283
      %v1300 = vadd.f32 %v1266, %v1284
      %v1301 = vadd.f32 %v1267, %v1285
      %v1302 = vadd.f32 %v1268, %v1286
      %v1303 = vadd.f32 %v1269, %v1287
      %v1304 = vadd.f32 %v1270, %v1288
      %v1305 = vadd.f32 %v1271, %v1289
      %v1306 = vadd.f32 %v1272, %v1290
      %v1307 = vadd.f32 %v1273, %v1291
      %v1308 = vadd.f32 %v1274, %v1292
      %v1309 = vadd.f32 %v1275, %v1293
      %v1310 = vadd.f32 %v1276, %v1294
      %v1311 = vadd.f32 %v1277, %v1295
      %v1312 = vadd.f32 %v1278, %v1296
      %v1313 = vadd.f32 %v1279, %v1297
      %v1314 = vld [vmem:[%s419 + $0x3] sm:$0x1]
      %v1315 = vperm.slane %v1314, 0
      %v1316 = vmul.f32 %v1241, %v1315
      %v1317 = vmul.f32 %v1240, %v1315
      %v1318 = vmul.f32 %v1239, %v1315
      %v1319 = vmul.f32 %v1238, %v1315
      %v1320 = vmul.f32 %v1237, %v1315
      %v1321 = vmul.f32 %v1236, %v1315
      %v1322 = vmul.f32 %v1235, %v1315
      %v1323 = vmul.f32 %v1234, %v1315
      %v1324 = vmul.f32 %v1233, %v1315
      %v1325 = vmul.f32 %v1232, %v1315
      %v1326 = vmul.f32 %v1231, %v1315
      %v1327 = vmul.f32 %v1230, %v1315
      %v1328 = vmul.f32 %v1229, %v1315
      %v1329 = vmul.f32 %v1228, %v1315
      %v1330 = vmul.f32 %v1227, %v1315
      %v1331 = vmul.f32 %v1226, %v1315
      %v1332 = vadd.f32 %v1298, %v1316
      %v1333 = vadd.f32 %v1299, %v1317
      %v1334 = vadd.f32 %v1300, %v1318
      %v1335 = vadd.f32 %v1301, %v1319
      %v1336 = vadd.f32 %v1302, %v1320
      %v1337 = vadd.f32 %v1303, %v1321
      %v1338 = vadd.f32 %v1304, %v1322
      %v1339 = vadd.f32 %v1305, %v1323
      %v1340 = vadd.f32 %v1306, %v1324
      %v1341 = vadd.f32 %v1307, %v1325
      %v1342 = vadd.f32 %v1308, %v1326
      %v1343 = vadd.f32 %v1309, %v1327
      %v1344 = vadd.f32 %v1310, %v1328
      %v1345 = vadd.f32 %v1311, %v1329
      %v1346 = vadd.f32 %v1312, %v1330
      %v1347 = vadd.f32 %v1313, %v1331
      %v1348 = vld [vmem:[%s454 + $0x3] sm:$0x1]
      %v1349 = vperm.slane %v1348, 0
      %v1350 = vmul.f32 %v1239, %v1349
      %v1351 = vmul.f32 %v1238, %v1349
      %v1352 = vmul.f32 %v1237, %v1349
      %v1353 = vmul.f32 %v1236, %v1349
      %v1354 = vmul.f32 %v1235, %v1349
      %v1355 = vmul.f32 %v1234, %v1349
      %v1356 = vmul.f32 %v1233, %v1349
      %v1357 = vmul.f32 %v1232, %v1349
      %v1358 = vmul.f32 %v1231, %v1349
      %v1359 = vmul.f32 %v1230, %v1349
      %v1360 = vmul.f32 %v1229, %v1349
      %v1361 = vmul.f32 %v1228, %v1349
      %v1362 = vmul.f32 %v1227, %v1349
      %v1363 = vmul.f32 %v1226, %v1349
      %v1364 = vmul.f32 %v1225, %v1349
      %v1365 = vmul.f32 %v1224, %v1349
      %v1366 = vadd.f32 %v1332, %v1350
      %v1367 = vadd.f32 %v1333, %v1351
      %v1368 = vadd.f32 %v1334, %v1352
      %v1369 = vadd.f32 %v1335, %v1353
      %v1370 = vadd.f32 %v1336, %v1354
      %v1371 = vadd.f32 %v1337, %v1355
      %v1372 = vadd.f32 %v1338, %v1356
      %v1373 = vadd.f32 %v1339, %v1357
      %v1374 = vadd.f32 %v1340, %v1358
      %v1375 = vadd.f32 %v1341, %v1359
      %v1376 = vadd.f32 %v1342, %v1360
      %v1377 = vadd.f32 %v1343, %v1361
      %v1378 = vadd.f32 %v1344, %v1362
      %v1379 = vadd.f32 %v1345, %v1363
      %v1380 = vadd.f32 %v1346, %v1364
      %v1381 = vadd.f32 %v1347, %v1365
      %v1382 = vld [vmem:[%s489 + $0x3] sm:$0x1]
      %v1383 = vperm.slane %v1382, 0
      %v1384 = vmul.f32 %v1237, %v1383
      %v1385 = vmul.f32 %v1236, %v1383
      %v1386 = vmul.f32 %v1235, %v1383
      %v1387 = vmul.f32 %v1234, %v1383
      %v1388 = vmul.f32 %v1233, %v1383
      %v1389 = vmul.f32 %v1232, %v1383
      %v1390 = vmul.f32 %v1231, %v1383
      %v1391 = vmul.f32 %v1230, %v1383
      %v1392 = vmul.f32 %v1229, %v1383
      %v1393 = vmul.f32 %v1228, %v1383
      %v1394 = vmul.f32 %v1227, %v1383
      %v1395 = vmul.f32 %v1226, %v1383
      %v1396 = vmul.f32 %v1225, %v1383
      %v1397 = vmul.f32 %v1224, %v1383
      %v1398 = vmul.f32 %v1223, %v1383
      %v1399 = vmul.f32 %v1222, %v1383
      %v1400 = vadd.f32 %v1366, %v1384
      %v1401 = vadd.f32 %v1367, %v1385
      %v1402 = vadd.f32 %v1368, %v1386
      %v1403 = vadd.f32 %v1369, %v1387
      %v1404 = vadd.f32 %v1370, %v1388
      %v1405 = vadd.f32 %v1371, %v1389
      %v1406 = vadd.f32 %v1372, %v1390
      %v1407 = vadd.f32 %v1373, %v1391
      %v1408 = vadd.f32 %v1374, %v1392
      %v1409 = vadd.f32 %v1375, %v1393
      %v1410 = vadd.f32 %v1376, %v1394
      %v1411 = vadd.f32 %v1377, %v1395
      %v1412 = vadd.f32 %v1378, %v1396
      %v1413 = vadd.f32 %v1379, %v1397
      %v1414 = vadd.f32 %v1380, %v1398
      %v1415 = vadd.f32 %v1381, %v1399
      %v1416 = vld [vmem:[%s524 + $0x3] sm:$0x1]
      %v1417 = vperm.slane %v1416, 0
      %v1418 = vmul.f32 %v1235, %v1417
      %v1419 = vmul.f32 %v1234, %v1417
      %v1420 = vmul.f32 %v1233, %v1417
      %v1421 = vmul.f32 %v1232, %v1417
      %v1422 = vmul.f32 %v1231, %v1417
      %v1423 = vmul.f32 %v1230, %v1417
      %v1424 = vmul.f32 %v1229, %v1417
      %v1425 = vmul.f32 %v1228, %v1417
      %v1426 = vmul.f32 %v1227, %v1417
      %v1427 = vmul.f32 %v1226, %v1417
      %v1428 = vmul.f32 %v1225, %v1417
      %v1429 = vmul.f32 %v1224, %v1417
      %v1430 = vmul.f32 %v1223, %v1417
      %v1431 = vmul.f32 %v1222, %v1417
      %v1432 = vmul.f32 %v1221, %v1417
      %v1433 = vmul.f32 %v1220, %v1417
      %v1434 = vadd.f32 %v1400, %v1418
      %v1435 = vadd.f32 %v1401, %v1419
      %v1436 = vadd.f32 %v1402, %v1420
      %v1437 = vadd.f32 %v1403, %v1421
      %v1438 = vadd.f32 %v1404, %v1422
      %v1439 = vadd.f32 %v1405, %v1423
      %v1440 = vadd.f32 %v1406, %v1424
      %v1441 = vadd.f32 %v1407, %v1425
      %v1442 = vadd.f32 %v1408, %v1426
      %v1443 = vadd.f32 %v1409, %v1427
      %v1444 = vadd.f32 %v1410, %v1428
      %v1445 = vadd.f32 %v1411, %v1429
      %v1446 = vadd.f32 %v1412, %v1430
      %v1447 = vadd.f32 %v1413, %v1431
      %v1448 = vadd.f32 %v1414, %v1432
      %v1449 = vadd.f32 %v1415, %v1433
      %v1450 = vld [vmem:[%s559 + $0x3] sm:$0x1]
      %v1451 = vperm.slane %v1450, 0
      %v1452 = vmul.f32 %v1233, %v1451
      %v1453 = vmul.f32 %v1232, %v1451
      %v1454 = vmul.f32 %v1231, %v1451
      %v1455 = vmul.f32 %v1230, %v1451
      %v1456 = vmul.f32 %v1229, %v1451
      %v1457 = vmul.f32 %v1228, %v1451
      %v1458 = vmul.f32 %v1227, %v1451
      %v1459 = vmul.f32 %v1226, %v1451
      %v1460 = vmul.f32 %v1225, %v1451
      %v1461 = vmul.f32 %v1224, %v1451
      %v1462 = vmul.f32 %v1223, %v1451
      %v1463 = vmul.f32 %v1222, %v1451
      %v1464 = vmul.f32 %v1221, %v1451
      %v1465 = vmul.f32 %v1220, %v1451
      %v1466 = vmul.f32 %v1219, %v1451
      %v1467 = vmul.f32 %v1218, %v1451
      %v1468 = vadd.f32 %v1434, %v1452
      %v1469 = vadd.f32 %v1435, %v1453
      %v1470 = vadd.f32 %v1436, %v1454
      %v1471 = vadd.f32 %v1437, %v1455
      %v1472 = vadd.f32 %v1438, %v1456
      %v1473 = vadd.f32 %v1439, %v1457
      %v1474 = vadd.f32 %v1440, %v1458
      %v1475 = vadd.f32 %v1441, %v1459
      %v1476 = vadd.f32 %v1442, %v1460
      %v1477 = vadd.f32 %v1443, %v1461
      %v1478 = vadd.f32 %v1444, %v1462
      %v1479 = vadd.f32 %v1445, %v1463
      %v1480 = vadd.f32 %v1446, %v1464
      %v1481 = vadd.f32 %v1447, %v1465
      %v1482 = vadd.f32 %v1448, %v1466
      %v1483 = vadd.f32 %v1449, %v1467
      %v1484 = vrot.slane %v337, 4
      %v1485 = vrot.slane %v338, 4
      %v1486 = vrot.slane %v339, 4
      %v1487 = vrot.slane %v340, 4
      %v1488 = vrot.slane %v341, 4
      %v1489 = vrot.slane %v342, 4
      %v1490 = vrot.slane %v343, 4
      %v1491 = vrot.slane %v344, 4
      %v1492 = vrot.slane %v345, 4
      %v1493 = vrot.slane %v346, 4
      %v1494 = vrot.slane %v347, 4
      %v1495 = vrot.slane %v348, 4
      %v1496 = vrot.slane %v349, 4
      %v1497 = vrot.slane %v350, 4
      %v1498 = vrot.slane %v351, 4
      %v1499 = vrot.slane %v352, 4
      %v1500 = vrot.slane %v353, 4
      %v1501 = vrot.slane %v354, 4
      %v1502 = vrot.slane %v355, 4
      %v1503 = vrot.slane %v356, 4
      %v1504 = vrot.slane %v357, 4
      %v1505 = vrot.slane %v358, 4
      %v1506 = vrot.slane %v359, 4
      %v1507 = vrot.slane %v360, 4
      %v1508 = vrot.slane %v361, 4
      %v1509 = vrot.slane %v362, 4
      %v1510 = vrot.slane %v363, 4
      %v1511 = vrot.slane %v364, 4
      %v1512 = vrot.slane %v365, 4
      %vm1513 = vcmp.lt.s32.totalorder %v624, 4
      %v1514 = vsel %vm1513, %v1511, %v1512
      %v1515 = vsel %vm1513, %v1510, %v1511
      %v1516 = vsel %vm1513, %v1509, %v1510
      %v1517 = vsel %vm1513, %v1508, %v1509
      %v1518 = vsel %vm1513, %v1507, %v1508
      %v1519 = vsel %vm1513, %v1506, %v1507
      %v1520 = vsel %vm1513, %v1505, %v1506
      %v1521 = vsel %vm1513, %v1504, %v1505
      %v1522 = vsel %vm1513, %v1503, %v1504
      %v1523 = vsel %vm1513, %v1502, %v1503
      %v1524 = vsel %vm1513, %v1501, %v1502
      %v1525 = vsel %vm1513, %v1500, %v1501
      %v1526 = vsel %vm1513, %v1499, %v1500
      %v1527 = vsel %vm1513, %v1498, %v1499
      %v1528 = vsel %vm1513, %v1497, %v1498
      %v1529 = vsel %vm1513, %v1496, %v1497
      %v1530 = vsel %vm1513, %v1495, %v1496
      %v1531 = vsel %vm1513, %v1494, %v1495
      %v1532 = vsel %vm1513, %v1493, %v1494
      %v1533 = vsel %vm1513, %v1492, %v1493
      %v1534 = vsel %vm1513, %v1491, %v1492
      %v1535 = vsel %vm1513, %v1490, %v1491
      %v1536 = vsel %vm1513, %v1489, %v1490
      %v1537 = vsel %vm1513, %v1488, %v1489
      %v1538 = vsel %vm1513, %v1487, %v1488
      %v1539 = vsel %vm1513, %v1486, %v1487
      %v1540 = vsel %vm1513, %v1485, %v1486
      %v1541 = vsel %vm1513, %v1484, %v1485
      %v1542 = vld [vmem:[%s1 + $0x4] sm:$0x1]
      %v1543 = vperm.slane %v1542, 0
      %v1544 = vmul.f32 %v1541, %v1543
      %v1545 = vmul.f32 %v1540, %v1543
      %v1546 = vmul.f32 %v1539, %v1543
      %v1547 = vmul.f32 %v1538, %v1543
      %v1548 = vmul.f32 %v1537, %v1543
      %v1549 = vmul.f32 %v1536, %v1543
      %v1550 = vmul.f32 %v1535, %v1543
      %v1551 = vmul.f32 %v1534, %v1543
      %v1552 = vmul.f32 %v1533, %v1543
      %v1553 = vmul.f32 %v1532, %v1543
      %v1554 = vmul.f32 %v1531, %v1543
      %v1555 = vmul.f32 %v1530, %v1543
      %v1556 = vmul.f32 %v1529, %v1543
      %v1557 = vmul.f32 %v1528, %v1543
      %v1558 = vmul.f32 %v1527, %v1543
      %v1559 = vmul.f32 %v1526, %v1543
      %v1560 = vadd.f32 %v1468, %v1544
      %v1561 = vadd.f32 %v1469, %v1545
      %v1562 = vadd.f32 %v1470, %v1546
      %v1563 = vadd.f32 %v1471, %v1547
      %v1564 = vadd.f32 %v1472, %v1548
      %v1565 = vadd.f32 %v1473, %v1549
      %v1566 = vadd.f32 %v1474, %v1550
      %v1567 = vadd.f32 %v1475, %v1551
      %v1568 = vadd.f32 %v1476, %v1552
      %v1569 = vadd.f32 %v1477, %v1553
      %v1570 = vadd.f32 %v1478, %v1554
      %v1571 = vadd.f32 %v1479, %v1555
      %v1572 = vadd.f32 %v1480, %v1556
      %v1573 = vadd.f32 %v1481, %v1557
      %v1574 = vadd.f32 %v1482, %v1558
      %v1575 = vadd.f32 %v1483, %v1559
      %v1576 = vld [vmem:[%s384 + $0x4] sm:$0x1]
      %v1577 = vperm.slane %v1576, 0
      %v1578 = vmul.f32 %v1539, %v1577
      %v1579 = vmul.f32 %v1538, %v1577
      %v1580 = vmul.f32 %v1537, %v1577
      %v1581 = vmul.f32 %v1536, %v1577
      %v1582 = vmul.f32 %v1535, %v1577
      %v1583 = vmul.f32 %v1534, %v1577
      %v1584 = vmul.f32 %v1533, %v1577
      %v1585 = vmul.f32 %v1532, %v1577
      %v1586 = vmul.f32 %v1531, %v1577
      %v1587 = vmul.f32 %v1530, %v1577
      %v1588 = vmul.f32 %v1529, %v1577
      %v1589 = vmul.f32 %v1528, %v1577
      %v1590 = vmul.f32 %v1527, %v1577
      %v1591 = vmul.f32 %v1526, %v1577
      %v1592 = vmul.f32 %v1525, %v1577
      %v1593 = vmul.f32 %v1524, %v1577
      %v1594 = vadd.f32 %v1560, %v1578
      %v1595 = vadd.f32 %v1561, %v1579
      %v1596 = vadd.f32 %v1562, %v1580
      %v1597 = vadd.f32 %v1563, %v1581
      %v1598 = vadd.f32 %v1564, %v1582
      %v1599 = vadd.f32 %v1565, %v1583
      %v1600 = vadd.f32 %v1566, %v1584
      %v1601 = vadd.f32 %v1567, %v1585
      %v1602 = vadd.f32 %v1568, %v1586
      %v1603 = vadd.f32 %v1569, %v1587
      %v1604 = vadd.f32 %v1570, %v1588
      %v1605 = vadd.f32 %v1571, %v1589
      %v1606 = vadd.f32 %v1572, %v1590
      %v1607 = vadd.f32 %v1573, %v1591
      %v1608 = vadd.f32 %v1574, %v1592
      %v1609 = vadd.f32 %v1575, %v1593
      %v1610 = vld [vmem:[%s419 + $0x4] sm:$0x1]
      %v1611 = vperm.slane %v1610, 0
      %v1612 = vmul.f32 %v1537, %v1611
      %v1613 = vmul.f32 %v1536, %v1611
      %v1614 = vmul.f32 %v1535, %v1611
      %v1615 = vmul.f32 %v1534, %v1611
      %v1616 = vmul.f32 %v1533, %v1611
      %v1617 = vmul.f32 %v1532, %v1611
      %v1618 = vmul.f32 %v1531, %v1611
      %v1619 = vmul.f32 %v1530, %v1611
      %v1620 = vmul.f32 %v1529, %v1611
      %v1621 = vmul.f32 %v1528, %v1611
      %v1622 = vmul.f32 %v1527, %v1611
      %v1623 = vmul.f32 %v1526, %v1611
      %v1624 = vmul.f32 %v1525, %v1611
      %v1625 = vmul.f32 %v1524, %v1611
      %v1626 = vmul.f32 %v1523, %v1611
      %v1627 = vmul.f32 %v1522, %v1611
      %v1628 = vadd.f32 %v1594, %v1612
      %v1629 = vadd.f32 %v1595, %v1613
      %v1630 = vadd.f32 %v1596, %v1614
      %v1631 = vadd.f32 %v1597, %v1615
      %v1632 = vadd.f32 %v1598, %v1616
      %v1633 = vadd.f32 %v1599, %v1617
      %v1634 = vadd.f32 %v1600, %v1618
      %v1635 = vadd.f32 %v1601, %v1619
      %v1636 = vadd.f32 %v1602, %v1620
      %v1637 = vadd.f32 %v1603, %v1621
      %v1638 = vadd.f32 %v1604, %v1622
      %v1639 = vadd.f32 %v1605, %v1623
      %v1640 = vadd.f32 %v1606, %v1624
      %v1641 = vadd.f32 %v1607, %v1625
      %v1642 = vadd.f32 %v1608, %v1626
      %v1643 = vadd.f32 %v1609, %v1627
      %v1644 = vld [vmem:[%s454 + $0x4] sm:$0x1]
      %v1645 = vperm.slane %v1644, 0
      %v1646 = vmul.f32 %v1535, %v1645
      %v1647 = vmul.f32 %v1534, %v1645
      %v1648 = vmul.f32 %v1533, %v1645
      %v1649 = vmul.f32 %v1532, %v1645
      %v1650 = vmul.f32 %v1531, %v1645
      %v1651 = vmul.f32 %v1530, %v1645
      %v1652 = vmul.f32 %v1529, %v1645
      %v1653 = vmul.f32 %v1528, %v1645
      %v1654 = vmul.f32 %v1527, %v1645
      %v1655 = vmul.f32 %v1526, %v1645
      %v1656 = vmul.f32 %v1525, %v1645
      %v1657 = vmul.f32 %v1524, %v1645
      %v1658 = vmul.f32 %v1523, %v1645
      %v1659 = vmul.f32 %v1522, %v1645
      %v1660 = vmul.f32 %v1521, %v1645
      %v1661 = vmul.f32 %v1520, %v1645
      %v1662 = vadd.f32 %v1628, %v1646
      %v1663 = vadd.f32 %v1629, %v1647
      %v1664 = vadd.f32 %v1630, %v1648
      %v1665 = vadd.f32 %v1631, %v1649
      %v1666 = vadd.f32 %v1632, %v1650
      %v1667 = vadd.f32 %v1633, %v1651
      %v1668 = vadd.f32 %v1634, %v1652
      %v1669 = vadd.f32 %v1635, %v1653
      %v1670 = vadd.f32 %v1636, %v1654
      %v1671 = vadd.f32 %v1637, %v1655
      %v1672 = vadd.f32 %v1638, %v1656
      %v1673 = vadd.f32 %v1639, %v1657
      %v1674 = vadd.f32 %v1640, %v1658
      %v1675 = vadd.f32 %v1641, %v1659
      %v1676 = vadd.f32 %v1642, %v1660
      %v1677 = vadd.f32 %v1643, %v1661
      %v1678 = vld [vmem:[%s489 + $0x4] sm:$0x1]
      %v1679 = vperm.slane %v1678, 0
      %v1680 = vmul.f32 %v1533, %v1679
      %v1681 = vmul.f32 %v1532, %v1679
      %v1682 = vmul.f32 %v1531, %v1679
      %v1683 = vmul.f32 %v1530, %v1679
      %v1684 = vmul.f32 %v1529, %v1679
      %v1685 = vmul.f32 %v1528, %v1679
      %v1686 = vmul.f32 %v1527, %v1679
      %v1687 = vmul.f32 %v1526, %v1679
      %v1688 = vmul.f32 %v1525, %v1679
      %v1689 = vmul.f32 %v1524, %v1679
      %v1690 = vmul.f32 %v1523, %v1679
      %v1691 = vmul.f32 %v1522, %v1679
      %v1692 = vmul.f32 %v1521, %v1679
      %v1693 = vmul.f32 %v1520, %v1679
      %v1694 = vmul.f32 %v1519, %v1679
      %v1695 = vmul.f32 %v1518, %v1679
      %v1696 = vadd.f32 %v1662, %v1680
      %v1697 = vadd.f32 %v1663, %v1681
      %v1698 = vadd.f32 %v1664, %v1682
      %v1699 = vadd.f32 %v1665, %v1683
      %v1700 = vadd.f32 %v1666, %v1684
      %v1701 = vadd.f32 %v1667, %v1685
      %v1702 = vadd.f32 %v1668, %v1686
      %v1703 = vadd.f32 %v1669, %v1687
      %v1704 = vadd.f32 %v1670, %v1688
      %v1705 = vadd.f32 %v1671, %v1689
      %v1706 = vadd.f32 %v1672, %v1690
      %v1707 = vadd.f32 %v1673, %v1691
      %v1708 = vadd.f32 %v1674, %v1692
      %v1709 = vadd.f32 %v1675, %v1693
      %v1710 = vadd.f32 %v1676, %v1694
      %v1711 = vadd.f32 %v1677, %v1695
      %v1712 = vld [vmem:[%s524 + $0x4] sm:$0x1]
      %v1713 = vperm.slane %v1712, 0
      %v1714 = vmul.f32 %v1531, %v1713
      %v1715 = vmul.f32 %v1530, %v1713
      %v1716 = vmul.f32 %v1529, %v1713
      %v1717 = vmul.f32 %v1528, %v1713
      %v1718 = vmul.f32 %v1527, %v1713
      %v1719 = vmul.f32 %v1526, %v1713
      %v1720 = vmul.f32 %v1525, %v1713
      %v1721 = vmul.f32 %v1524, %v1713
      %v1722 = vmul.f32 %v1523, %v1713
      %v1723 = vmul.f32 %v1522, %v1713
      %v1724 = vmul.f32 %v1521, %v1713
      %v1725 = vmul.f32 %v1520, %v1713
      %v1726 = vmul.f32 %v1519, %v1713
      %v1727 = vmul.f32 %v1518, %v1713
      %v1728 = vmul.f32 %v1517, %v1713
      %v1729 = vmul.f32 %v1516, %v1713
      %v1730 = vadd.f32 %v1696, %v1714
      %v1731 = vadd.f32 %v1697, %v1715
      %v1732 = vadd.f32 %v1698, %v1716
      %v1733 = vadd.f32 %v1699, %v1717
      %v1734 = vadd.f32 %v1700, %v1718
      %v1735 = vadd.f32 %v1701, %v1719
      %v1736 = vadd.f32 %v1702, %v1720
      %v1737 = vadd.f32 %v1703, %v1721
      %v1738 = vadd.f32 %v1704, %v1722
      %v1739 = vadd.f32 %v1705, %v1723
      %v1740 = vadd.f32 %v1706, %v1724
      %v1741 = vadd.f32 %v1707, %v1725
      %v1742 = vadd.f32 %v1708, %v1726
      %v1743 = vadd.f32 %v1709, %v1727
      %v1744 = vadd.f32 %v1710, %v1728
      %v1745 = vadd.f32 %v1711, %v1729
      %v1746 = vld [vmem:[%s559 + $0x4] sm:$0x1]
      %v1747 = vperm.slane %v1746, 0
      %v1748 = vmul.f32 %v1529, %v1747
      %v1749 = vmul.f32 %v1528, %v1747
      %v1750 = vmul.f32 %v1527, %v1747
      %v1751 = vmul.f32 %v1526, %v1747
      %v1752 = vmul.f32 %v1525, %v1747
      %v1753 = vmul.f32 %v1524, %v1747
      %v1754 = vmul.f32 %v1523, %v1747
      %v1755 = vmul.f32 %v1522, %v1747
      %v1756 = vmul.f32 %v1521, %v1747
      %v1757 = vmul.f32 %v1520, %v1747
      %v1758 = vmul.f32 %v1519, %v1747
      %v1759 = vmul.f32 %v1518, %v1747
      %v1760 = vmul.f32 %v1517, %v1747
      %v1761 = vmul.f32 %v1516, %v1747
      %v1762 = vmul.f32 %v1515, %v1747
      %v1763 = vmul.f32 %v1514, %v1747
      %v1764 = vadd.f32 %v1730, %v1748
      %v1765 = vadd.f32 %v1731, %v1749
      %v1766 = vadd.f32 %v1732, %v1750
      %v1767 = vadd.f32 %v1733, %v1751
      %v1768 = vadd.f32 %v1734, %v1752
      %v1769 = vadd.f32 %v1735, %v1753
      %v1770 = vadd.f32 %v1736, %v1754
      %v1771 = vadd.f32 %v1737, %v1755
      %v1772 = vadd.f32 %v1738, %v1756
      %v1773 = vadd.f32 %v1739, %v1757
      %v1774 = vadd.f32 %v1740, %v1758
      %v1775 = vadd.f32 %v1741, %v1759
      %v1776 = vadd.f32 %v1742, %v1760
      %v1777 = vadd.f32 %v1743, %v1761
      %v1778 = vadd.f32 %v1744, %v1762
      %v1779 = vadd.f32 %v1745, %v1763
      %v1780 = vrot.slane %v337, 5
      %v1781 = vrot.slane %v338, 5
      %v1782 = vrot.slane %v339, 5
      %v1783 = vrot.slane %v340, 5
      %v1784 = vrot.slane %v341, 5
      %v1785 = vrot.slane %v342, 5
      %v1786 = vrot.slane %v343, 5
      %v1787 = vrot.slane %v344, 5
      %v1788 = vrot.slane %v345, 5
      %v1789 = vrot.slane %v346, 5
      %v1790 = vrot.slane %v347, 5
      %v1791 = vrot.slane %v348, 5
      %v1792 = vrot.slane %v349, 5
      %v1793 = vrot.slane %v350, 5
      %v1794 = vrot.slane %v351, 5
      %v1795 = vrot.slane %v352, 5
      %v1796 = vrot.slane %v353, 5
      %v1797 = vrot.slane %v354, 5
      %v1798 = vrot.slane %v355, 5
      %v1799 = vrot.slane %v356, 5
      %v1800 = vrot.slane %v357, 5
      %v1801 = vrot.slane %v358, 5
      %v1802 = vrot.slane %v359, 5
      %v1803 = vrot.slane %v360, 5
      %v1804 = vrot.slane %v361, 5
      %v1805 = vrot.slane %v362, 5
      %v1806 = vrot.slane %v363, 5
      %v1807 = vrot.slane %v364, 5
      %v1808 = vrot.slane %v365, 5
      %vm1809 = vcmp.lt.s32.totalorder %v624, 3
      %v1810 = vsel %vm1809, %v1807, %v1808
      %v1811 = vsel %vm1809, %v1806, %v1807
      %v1812 = vsel %vm1809, %v1805, %v1806
      %v1813 = vsel %vm1809, %v1804, %v1805
      %v1814 = vsel %vm1809, %v1803, %v1804
      %v1815 = vsel %vm1809, %v1802, %v1803
      %v1816 = vsel %vm1809, %v1801, %v1802
      %v1817 = vsel %vm1809, %v1800, %v1801
      %v1818 = vsel %vm1809, %v1799, %v1800
      %v1819 = vsel %vm1809, %v1798, %v1799
      %v1820 = vsel %vm1809, %v1797, %v1798
      %v1821 = vsel %vm1809, %v1796, %v1797
      %v1822 = vsel %vm1809, %v1795, %v1796
      %v1823 = vsel %vm1809, %v1794, %v1795
      %v1824 = vsel %vm1809, %v1793, %v1794
      %v1825 = vsel %vm1809, %v1792, %v1793
      %v1826 = vsel %vm1809, %v1791, %v1792
      %v1827 = vsel %vm1809, %v1790, %v1791
      %v1828 = vsel %vm1809, %v1789, %v1790
      %v1829 = vsel %vm1809, %v1788, %v1789
      %v1830 = vsel %vm1809, %v1787, %v1788
      %v1831 = vsel %vm1809, %v1786, %v1787
      %v1832 = vsel %vm1809, %v1785, %v1786
      %v1833 = vsel %vm1809, %v1784, %v1785
      %v1834 = vsel %vm1809, %v1783, %v1784
      %v1835 = vsel %vm1809, %v1782, %v1783
      %v1836 = vsel %vm1809, %v1781, %v1782
      %v1837 = vsel %vm1809, %v1780, %v1781
      %v1838 = vld [vmem:[%s1 + $0x5] sm:$0x1]
      %v1839 = vperm.slane %v1838, 0
      %v1840 = vmul.f32 %v1837, %v1839
      %v1841 = vmul.f32 %v1836, %v1839
      %v1842 = vmul.f32 %v1835, %v1839
      %v1843 = vmul.f32 %v1834, %v1839
      %v1844 = vmul.f32 %v1833, %v1839
      %v1845 = vmul.f32 %v1832, %v1839
      %v1846 = vmul.f32 %v1831, %v1839
      %v1847 = vmul.f32 %v1830, %v1839
      %v1848 = vmul.f32 %v1829, %v1839
      %v1849 = vmul.f32 %v1828, %v1839
      %v1850 = vmul.f32 %v1827, %v1839
      %v1851 = vmul.f32 %v1826, %v1839
      %v1852 = vmul.f32 %v1825, %v1839
      %v1853 = vmul.f32 %v1824, %v1839
      %v1854 = vmul.f32 %v1823, %v1839
      %v1855 = vmul.f32 %v1822, %v1839
      %v1856 = vadd.f32 %v1764, %v1840
      %v1857 = vadd.f32 %v1765, %v1841
      %v1858 = vadd.f32 %v1766, %v1842
      %v1859 = vadd.f32 %v1767, %v1843
      %v1860 = vadd.f32 %v1768, %v1844
      %v1861 = vadd.f32 %v1769, %v1845
      %v1862 = vadd.f32 %v1770, %v1846
      %v1863 = vadd.f32 %v1771, %v1847
      %v1864 = vadd.f32 %v1772, %v1848
      %v1865 = vadd.f32 %v1773, %v1849
      %v1866 = vadd.f32 %v1774, %v1850
      %v1867 = vadd.f32 %v1775, %v1851
      %v1868 = vadd.f32 %v1776, %v1852
      %v1869 = vadd.f32 %v1777, %v1853
      %v1870 = vadd.f32 %v1778, %v1854
      %v1871 = vadd.f32 %v1779, %v1855
      %v1872 = vld [vmem:[%s384 + $0x5] sm:$0x1]
      %v1873 = vperm.slane %v1872, 0
      %v1874 = vmul.f32 %v1835, %v1873
      %v1875 = vmul.f32 %v1834, %v1873
      %v1876 = vmul.f32 %v1833, %v1873
      %v1877 = vmul.f32 %v1832, %v1873
      %v1878 = vmul.f32 %v1831, %v1873
      %v1879 = vmul.f32 %v1830, %v1873
      %v1880 = vmul.f32 %v1829, %v1873
      %v1881 = vmul.f32 %v1828, %v1873
      %v1882 = vmul.f32 %v1827, %v1873
      %v1883 = vmul.f32 %v1826, %v1873
      %v1884 = vmul.f32 %v1825, %v1873
      %v1885 = vmul.f32 %v1824, %v1873
      %v1886 = vmul.f32 %v1823, %v1873
      %v1887 = vmul.f32 %v1822, %v1873
      %v1888 = vmul.f32 %v1821, %v1873
      %v1889 = vmul.f32 %v1820, %v1873
      %v1890 = vadd.f32 %v1856, %v1874
      %v1891 = vadd.f32 %v1857, %v1875
      %v1892 = vadd.f32 %v1858, %v1876
      %v1893 = vadd.f32 %v1859, %v1877
      %v1894 = vadd.f32 %v1860, %v1878
      %v1895 = vadd.f32 %v1861, %v1879
      %v1896 = vadd.f32 %v1862, %v1880
      %v1897 = vadd.f32 %v1863, %v1881
      %v1898 = vadd.f32 %v1864, %v1882
      %v1899 = vadd.f32 %v1865, %v1883
      %v1900 = vadd.f32 %v1866, %v1884
      %v1901 = vadd.f32 %v1867, %v1885
      %v1902 = vadd.f32 %v1868, %v1886
      %v1903 = vadd.f32 %v1869, %v1887
      %v1904 = vadd.f32 %v1870, %v1888
      %v1905 = vadd.f32 %v1871, %v1889
      %v1906 = vld [vmem:[%s419 + $0x5] sm:$0x1]
      %v1907 = vperm.slane %v1906, 0
      %v1908 = vmul.f32 %v1833, %v1907
      %v1909 = vmul.f32 %v1832, %v1907
      %v1910 = vmul.f32 %v1831, %v1907
      %v1911 = vmul.f32 %v1830, %v1907
      %v1912 = vmul.f32 %v1829, %v1907
      %v1913 = vmul.f32 %v1828, %v1907
      %v1914 = vmul.f32 %v1827, %v1907
      %v1915 = vmul.f32 %v1826, %v1907
      %v1916 = vmul.f32 %v1825, %v1907
      %v1917 = vmul.f32 %v1824, %v1907
      %v1918 = vmul.f32 %v1823, %v1907
      %v1919 = vmul.f32 %v1822, %v1907
      %v1920 = vmul.f32 %v1821, %v1907
      %v1921 = vmul.f32 %v1820, %v1907
      %v1922 = vmul.f32 %v1819, %v1907
      %v1923 = vmul.f32 %v1818, %v1907
      %v1924 = vadd.f32 %v1890, %v1908
      %v1925 = vadd.f32 %v1891, %v1909
      %v1926 = vadd.f32 %v1892, %v1910
      %v1927 = vadd.f32 %v1893, %v1911
      %v1928 = vadd.f32 %v1894, %v1912
      %v1929 = vadd.f32 %v1895, %v1913
      %v1930 = vadd.f32 %v1896, %v1914
      %v1931 = vadd.f32 %v1897, %v1915
      %v1932 = vadd.f32 %v1898, %v1916
      %v1933 = vadd.f32 %v1899, %v1917
      %v1934 = vadd.f32 %v1900, %v1918
      %v1935 = vadd.f32 %v1901, %v1919
      %v1936 = vadd.f32 %v1902, %v1920
      %v1937 = vadd.f32 %v1903, %v1921
      %v1938 = vadd.f32 %v1904, %v1922
      %v1939 = vadd.f32 %v1905, %v1923
      %v1940 = vld [vmem:[%s454 + $0x5] sm:$0x1]
      %v1941 = vperm.slane %v1940, 0
      %v1942 = vmul.f32 %v1831, %v1941
      %v1943 = vmul.f32 %v1830, %v1941
      %v1944 = vmul.f32 %v1829, %v1941
      %v1945 = vmul.f32 %v1828, %v1941
      %v1946 = vmul.f32 %v1827, %v1941
      %v1947 = vmul.f32 %v1826, %v1941
      %v1948 = vmul.f32 %v1825, %v1941
      %v1949 = vmul.f32 %v1824, %v1941
      %v1950 = vmul.f32 %v1823, %v1941
      %v1951 = vmul.f32 %v1822, %v1941
      %v1952 = vmul.f32 %v1821, %v1941
      %v1953 = vmul.f32 %v1820, %v1941
      %v1954 = vmul.f32 %v1819, %v1941
      %v1955 = vmul.f32 %v1818, %v1941
      %v1956 = vmul.f32 %v1817, %v1941
      %v1957 = vmul.f32 %v1816, %v1941
      %v1958 = vadd.f32 %v1924, %v1942
      %v1959 = vadd.f32 %v1925, %v1943
      %v1960 = vadd.f32 %v1926, %v1944
      %v1961 = vadd.f32 %v1927, %v1945
      %v1962 = vadd.f32 %v1928, %v1946
      %v1963 = vadd.f32 %v1929, %v1947
      %v1964 = vadd.f32 %v1930, %v1948
      %v1965 = vadd.f32 %v1931, %v1949
      %v1966 = vadd.f32 %v1932, %v1950
      %v1967 = vadd.f32 %v1933, %v1951
      %v1968 = vadd.f32 %v1934, %v1952
      %v1969 = vadd.f32 %v1935, %v1953
      %v1970 = vadd.f32 %v1936, %v1954
      %v1971 = vadd.f32 %v1937, %v1955
      %v1972 = vadd.f32 %v1938, %v1956
      %v1973 = vadd.f32 %v1939, %v1957
      %v1974 = vld [vmem:[%s489 + $0x5] sm:$0x1]
      %v1975 = vperm.slane %v1974, 0
      %v1976 = vmul.f32 %v1829, %v1975
      %v1977 = vmul.f32 %v1828, %v1975
      %v1978 = vmul.f32 %v1827, %v1975
      %v1979 = vmul.f32 %v1826, %v1975
      %v1980 = vmul.f32 %v1825, %v1975
      %v1981 = vmul.f32 %v1824, %v1975
      %v1982 = vmul.f32 %v1823, %v1975
      %v1983 = vmul.f32 %v1822, %v1975
      %v1984 = vmul.f32 %v1821, %v1975
      %v1985 = vmul.f32 %v1820, %v1975
      %v1986 = vmul.f32 %v1819, %v1975
      %v1987 = vmul.f32 %v1818, %v1975
      %v1988 = vmul.f32 %v1817, %v1975
      %v1989 = vmul.f32 %v1816, %v1975
      %v1990 = vmul.f32 %v1815, %v1975
      %v1991 = vmul.f32 %v1814, %v1975
      %v1992 = vadd.f32 %v1958, %v1976
      %v1993 = vadd.f32 %v1959, %v1977
      %v1994 = vadd.f32 %v1960, %v1978
      %v1995 = vadd.f32 %v1961, %v1979
      %v1996 = vadd.f32 %v1962, %v1980
      %v1997 = vadd.f32 %v1963, %v1981
      %v1998 = vadd.f32 %v1964, %v1982
      %v1999 = vadd.f32 %v1965, %v1983
      %v2000 = vadd.f32 %v1966, %v1984
      %v2001 = vadd.f32 %v1967, %v1985
      %v2002 = vadd.f32 %v1968, %v1986
      %v2003 = vadd.f32 %v1969, %v1987
      %v2004 = vadd.f32 %v1970, %v1988
      %v2005 = vadd.f32 %v1971, %v1989
      %v2006 = vadd.f32 %v1972, %v1990
      %v2007 = vadd.f32 %v1973, %v1991
      %v2008 = vld [vmem:[%s524 + $0x5] sm:$0x1]
      %v2009 = vperm.slane %v2008, 0
      %v2010 = vmul.f32 %v1827, %v2009
      %v2011 = vmul.f32 %v1826, %v2009
      %v2012 = vmul.f32 %v1825, %v2009
      %v2013 = vmul.f32 %v1824, %v2009
      %v2014 = vmul.f32 %v1823, %v2009
      %v2015 = vmul.f32 %v1822, %v2009
      %v2016 = vmul.f32 %v1821, %v2009
      %v2017 = vmul.f32 %v1820, %v2009
      %v2018 = vmul.f32 %v1819, %v2009
      %v2019 = vmul.f32 %v1818, %v2009
      %v2020 = vmul.f32 %v1817, %v2009
      %v2021 = vmul.f32 %v1816, %v2009
      %v2022 = vmul.f32 %v1815, %v2009
      %v2023 = vmul.f32 %v1814, %v2009
      %v2024 = vmul.f32 %v1813, %v2009
      %v2025 = vmul.f32 %v1812, %v2009
      %v2026 = vadd.f32 %v1992, %v2010
      %v2027 = vadd.f32 %v1993, %v2011
      %v2028 = vadd.f32 %v1994, %v2012
      %v2029 = vadd.f32 %v1995, %v2013
      %v2030 = vadd.f32 %v1996, %v2014
      %v2031 = vadd.f32 %v1997, %v2015
      %v2032 = vadd.f32 %v1998, %v2016
      %v2033 = vadd.f32 %v1999, %v2017
      %v2034 = vadd.f32 %v2000, %v2018
      %v2035 = vadd.f32 %v2001, %v2019
      %v2036 = vadd.f32 %v2002, %v2020
      %v2037 = vadd.f32 %v2003, %v2021
      %v2038 = vadd.f32 %v2004, %v2022
      %v2039 = vadd.f32 %v2005, %v2023
      %v2040 = vadd.f32 %v2006, %v2024
      %v2041 = vadd.f32 %v2007, %v2025
      %v2042 = vld [vmem:[%s559 + $0x5] sm:$0x1]
      %v2043 = vperm.slane %v2042, 0
      %v2044 = vmul.f32 %v1825, %v2043
      %v2045 = vmul.f32 %v1824, %v2043
      %v2046 = vmul.f32 %v1823, %v2043
      %v2047 = vmul.f32 %v1822, %v2043
      %v2048 = vmul.f32 %v1821, %v2043
      %v2049 = vmul.f32 %v1820, %v2043
      %v2050 = vmul.f32 %v1819, %v2043
      %v2051 = vmul.f32 %v1818, %v2043
      %v2052 = vmul.f32 %v1817, %v2043
      %v2053 = vmul.f32 %v1816, %v2043
      %v2054 = vmul.f32 %v1815, %v2043
      %v2055 = vmul.f32 %v1814, %v2043
      %v2056 = vmul.f32 %v1813, %v2043
      %v2057 = vmul.f32 %v1812, %v2043
      %v2058 = vmul.f32 %v1811, %v2043
      %v2059 = vmul.f32 %v1810, %v2043
      %v2060 = vadd.f32 %v2026, %v2044
      %v2061 = vadd.f32 %v2027, %v2045
      %v2062 = vadd.f32 %v2028, %v2046
      %v2063 = vadd.f32 %v2029, %v2047
      %v2064 = vadd.f32 %v2030, %v2048
      %v2065 = vadd.f32 %v2031, %v2049
      %v2066 = vadd.f32 %v2032, %v2050
      %v2067 = vadd.f32 %v2033, %v2051
      %v2068 = vadd.f32 %v2034, %v2052
      %v2069 = vadd.f32 %v2035, %v2053
      %v2070 = vadd.f32 %v2036, %v2054
      %v2071 = vadd.f32 %v2037, %v2055
      %v2072 = vadd.f32 %v2038, %v2056
      %v2073 = vadd.f32 %v2039, %v2057
      %v2074 = vadd.f32 %v2040, %v2058
      %v2075 = vadd.f32 %v2041, %v2059
      %v2076 = vrot.slane %v337, 6
      %v2077 = vrot.slane %v338, 6
      %v2078 = vrot.slane %v339, 6
      %v2079 = vrot.slane %v340, 6
      %v2080 = vrot.slane %v341, 6
      %v2081 = vrot.slane %v342, 6
      %v2082 = vrot.slane %v343, 6
      %v2083 = vrot.slane %v344, 6
      %v2084 = vrot.slane %v345, 6
      %v2085 = vrot.slane %v346, 6
      %v2086 = vrot.slane %v347, 6
      %v2087 = vrot.slane %v348, 6
      %v2088 = vrot.slane %v349, 6
      %v2089 = vrot.slane %v350, 6
      %v2090 = vrot.slane %v351, 6
      %v2091 = vrot.slane %v352, 6
      %v2092 = vrot.slane %v353, 6
      %v2093 = vrot.slane %v354, 6
      %v2094 = vrot.slane %v355, 6
      %v2095 = vrot.slane %v356, 6
      %v2096 = vrot.slane %v357, 6
      %v2097 = vrot.slane %v358, 6
      %v2098 = vrot.slane %v359, 6
      %v2099 = vrot.slane %v360, 6
      %v2100 = vrot.slane %v361, 6
      %v2101 = vrot.slane %v362, 6
      %v2102 = vrot.slane %v363, 6
      %v2103 = vrot.slane %v364, 6
      %v2104 = vrot.slane %v365, 6
      %vm2105 = vcmp.lt.s32.totalorder %v624, 2
      %v2106 = vsel %vm2105, %v2103, %v2104
      %v2107 = vsel %vm2105, %v2102, %v2103
      %v2108 = vsel %vm2105, %v2101, %v2102
      %v2109 = vsel %vm2105, %v2100, %v2101
      %v2110 = vsel %vm2105, %v2099, %v2100
      %v2111 = vsel %vm2105, %v2098, %v2099
      %v2112 = vsel %vm2105, %v2097, %v2098
      %v2113 = vsel %vm2105, %v2096, %v2097
      %v2114 = vsel %vm2105, %v2095, %v2096
      %v2115 = vsel %vm2105, %v2094, %v2095
      %v2116 = vsel %vm2105, %v2093, %v2094
      %v2117 = vsel %vm2105, %v2092, %v2093
      %v2118 = vsel %vm2105, %v2091, %v2092
      %v2119 = vsel %vm2105, %v2090, %v2091
      %v2120 = vsel %vm2105, %v2089, %v2090
      %v2121 = vsel %vm2105, %v2088, %v2089
      %v2122 = vsel %vm2105, %v2087, %v2088
      %v2123 = vsel %vm2105, %v2086, %v2087
      %v2124 = vsel %vm2105, %v2085, %v2086
      %v2125 = vsel %vm2105, %v2084, %v2085
      %v2126 = vsel %vm2105, %v2083, %v2084
      %v2127 = vsel %vm2105, %v2082, %v2083
      %v2128 = vsel %vm2105, %v2081, %v2082
      %v2129 = vsel %vm2105, %v2080, %v2081
      %v2130 = vsel %vm2105, %v2079, %v2080
      %v2131 = vsel %vm2105, %v2078, %v2079
      %v2132 = vsel %vm2105, %v2077, %v2078
      %v2133 = vsel %vm2105, %v2076, %v2077
      %v2134 = vld [vmem:[%s1 + $0x6] sm:$0x1]
      %v2135 = vperm.slane %v2134, 0
      %v2136 = vmul.f32 %v2133, %v2135
      %v2137 = vmul.f32 %v2132, %v2135
      %v2138 = vmul.f32 %v2131, %v2135
      %v2139 = vmul.f32 %v2130, %v2135
      %v2140 = vmul.f32 %v2129, %v2135
      %v2141 = vmul.f32 %v2128, %v2135
      %v2142 = vmul.f32 %v2127, %v2135
      %v2143 = vmul.f32 %v2126, %v2135
      %v2144 = vmul.f32 %v2125, %v2135
      %v2145 = vmul.f32 %v2124, %v2135
      %v2146 = vmul.f32 %v2123, %v2135
      %v2147 = vmul.f32 %v2122, %v2135
      %v2148 = vmul.f32 %v2121, %v2135
      %v2149 = vmul.f32 %v2120, %v2135
      %v2150 = vmul.f32 %v2119, %v2135
      %v2151 = vmul.f32 %v2118, %v2135
      %v2152 = vadd.f32 %v2060, %v2136
      %v2153 = vadd.f32 %v2061, %v2137
      %v2154 = vadd.f32 %v2062, %v2138
      %v2155 = vadd.f32 %v2063, %v2139
      %v2156 = vadd.f32 %v2064, %v2140
      %v2157 = vadd.f32 %v2065, %v2141
      %v2158 = vadd.f32 %v2066, %v2142
      %v2159 = vadd.f32 %v2067, %v2143
      %v2160 = vadd.f32 %v2068, %v2144
      %v2161 = vadd.f32 %v2069, %v2145
      %v2162 = vadd.f32 %v2070, %v2146
      %v2163 = vadd.f32 %v2071, %v2147
      %v2164 = vadd.f32 %v2072, %v2148
      %v2165 = vadd.f32 %v2073, %v2149
      %v2166 = vadd.f32 %v2074, %v2150
      %v2167 = vadd.f32 %v2075, %v2151
      %v2168 = vld [vmem:[%s384 + $0x6] sm:$0x1]
      %v2169 = vperm.slane %v2168, 0
      %v2170 = vmul.f32 %v2131, %v2169
      %v2171 = vmul.f32 %v2130, %v2169
      %v2172 = vmul.f32 %v2129, %v2169
      %v2173 = vmul.f32 %v2128, %v2169
      %v2174 = vmul.f32 %v2127, %v2169
      %v2175 = vmul.f32 %v2126, %v2169
      %v2176 = vmul.f32 %v2125, %v2169
      %v2177 = vmul.f32 %v2124, %v2169
      %v2178 = vmul.f32 %v2123, %v2169
      %v2179 = vmul.f32 %v2122, %v2169
      %v2180 = vmul.f32 %v2121, %v2169
      %v2181 = vmul.f32 %v2120, %v2169
      %v2182 = vmul.f32 %v2119, %v2169
      %v2183 = vmul.f32 %v2118, %v2169
      %v2184 = vmul.f32 %v2117, %v2169
      %v2185 = vmul.f32 %v2116, %v2169
      %v2186 = vadd.f32 %v2152, %v2170
      %v2187 = vadd.f32 %v2153, %v2171
      %v2188 = vadd.f32 %v2154, %v2172
      %v2189 = vadd.f32 %v2155, %v2173
      %v2190 = vadd.f32 %v2156, %v2174
      %v2191 = vadd.f32 %v2157, %v2175
      %v2192 = vadd.f32 %v2158, %v2176
      %v2193 = vadd.f32 %v2159, %v2177
      %v2194 = vadd.f32 %v2160, %v2178
      %v2195 = vadd.f32 %v2161, %v2179
      %v2196 = vadd.f32 %v2162, %v2180
      %v2197 = vadd.f32 %v2163, %v2181
      %v2198 = vadd.f32 %v2164, %v2182
      %v2199 = vadd.f32 %v2165, %v2183
      %v2200 = vadd.f32 %v2166, %v2184
      %v2201 = vadd.f32 %v2167, %v2185
      %v2202 = vld [vmem:[%s419 + $0x6] sm:$0x1]
      %v2203 = vperm.slane %v2202, 0
      %v2204 = vmul.f32 %v2129, %v2203
      %v2205 = vmul.f32 %v2128, %v2203
      %v2206 = vmul.f32 %v2127, %v2203
      %v2207 = vmul.f32 %v2126, %v2203
      %v2208 = vmul.f32 %v2125, %v2203
      %v2209 = vmul.f32 %v2124, %v2203
      %v2210 = vmul.f32 %v2123, %v2203
      %v2211 = vmul.f32 %v2122, %v2203
      %v2212 = vmul.f32 %v2121, %v2203
      %v2213 = vmul.f32 %v2120, %v2203
      %v2214 = vmul.f32 %v2119, %v2203
      %v2215 = vmul.f32 %v2118, %v2203
      %v2216 = vmul.f32 %v2117, %v2203
      %v2217 = vmul.f32 %v2116, %v2203
      %v2218 = vmul.f32 %v2115, %v2203
      %v2219 = vmul.f32 %v2114, %v2203
      %v2220 = vadd.f32 %v2186, %v2204
      %v2221 = vadd.f32 %v2187, %v2205
      %v2222 = vadd.f32 %v2188, %v2206
      %v2223 = vadd.f32 %v2189, %v2207
      %v2224 = vadd.f32 %v2190, %v2208
      %v2225 = vadd.f32 %v2191, %v2209
      %v2226 = vadd.f32 %v2192, %v2210
      %v2227 = vadd.f32 %v2193, %v2211
      %v2228 = vadd.f32 %v2194, %v2212
      %v2229 = vadd.f32 %v2195, %v2213
      %v2230 = vadd.f32 %v2196, %v2214
      %v2231 = vadd.f32 %v2197, %v2215
      %v2232 = vadd.f32 %v2198, %v2216
      %v2233 = vadd.f32 %v2199, %v2217
      %v2234 = vadd.f32 %v2200, %v2218
      %v2235 = vadd.f32 %v2201, %v2219
      %v2236 = vld [vmem:[%s454 + $0x6] sm:$0x1]
      %v2237 = vperm.slane %v2236, 0
      %v2238 = vmul.f32 %v2127, %v2237
      %v2239 = vmul.f32 %v2126, %v2237
      %v2240 = vmul.f32 %v2125, %v2237
      %v2241 = vmul.f32 %v2124, %v2237
      %v2242 = vmul.f32 %v2123, %v2237
      %v2243 = vmul.f32 %v2122, %v2237
      %v2244 = vmul.f32 %v2121, %v2237
      %v2245 = vmul.f32 %v2120, %v2237
      %v2246 = vmul.f32 %v2119, %v2237
      %v2247 = vmul.f32 %v2118, %v2237
      %v2248 = vmul.f32 %v2117, %v2237
      %v2249 = vmul.f32 %v2116, %v2237
      %v2250 = vmul.f32 %v2115, %v2237
      %v2251 = vmul.f32 %v2114, %v2237
      %v2252 = vmul.f32 %v2113, %v2237
      %v2253 = vmul.f32 %v2112, %v2237
      %v2254 = vadd.f32 %v2220, %v2238
      %v2255 = vadd.f32 %v2221, %v2239
      %v2256 = vadd.f32 %v2222, %v2240
      %v2257 = vadd.f32 %v2223, %v2241
      %v2258 = vadd.f32 %v2224, %v2242
      %v2259 = vadd.f32 %v2225, %v2243
      %v2260 = vadd.f32 %v2226, %v2244
      %v2261 = vadd.f32 %v2227, %v2245
      %v2262 = vadd.f32 %v2228, %v2246
      %v2263 = vadd.f32 %v2229, %v2247
      %v2264 = vadd.f32 %v2230, %v2248
      %v2265 = vadd.f32 %v2231, %v2249
      %v2266 = vadd.f32 %v2232, %v2250
      %v2267 = vadd.f32 %v2233, %v2251
      %v2268 = vadd.f32 %v2234, %v2252
      %v2269 = vadd.f32 %v2235, %v2253
      %v2270 = vld [vmem:[%s489 + $0x6] sm:$0x1]
      %v2271 = vperm.slane %v2270, 0
      %v2272 = vmul.f32 %v2125, %v2271
      %v2273 = vmul.f32 %v2124, %v2271
      %v2274 = vmul.f32 %v2123, %v2271
      %v2275 = vmul.f32 %v2122, %v2271
      %v2276 = vmul.f32 %v2121, %v2271
      %v2277 = vmul.f32 %v2120, %v2271
      %v2278 = vmul.f32 %v2119, %v2271
      %v2279 = vmul.f32 %v2118, %v2271
      %v2280 = vmul.f32 %v2117, %v2271
      %v2281 = vmul.f32 %v2116, %v2271
      %v2282 = vmul.f32 %v2115, %v2271
      %v2283 = vmul.f32 %v2114, %v2271
      %v2284 = vmul.f32 %v2113, %v2271
      %v2285 = vmul.f32 %v2112, %v2271
      %v2286 = vmul.f32 %v2111, %v2271
      %v2287 = vmul.f32 %v2110, %v2271
      %v2288 = vadd.f32 %v2254, %v2272
      %v2289 = vadd.f32 %v2255, %v2273
      %v2290 = vadd.f32 %v2256, %v2274
      %v2291 = vadd.f32 %v2257, %v2275
      %v2292 = vadd.f32 %v2258, %v2276
      %v2293 = vadd.f32 %v2259, %v2277
      %v2294 = vadd.f32 %v2260, %v2278
      %v2295 = vadd.f32 %v2261, %v2279
      %v2296 = vadd.f32 %v2262, %v2280
      %v2297 = vadd.f32 %v2263, %v2281
      %v2298 = vadd.f32 %v2264, %v2282
      %v2299 = vadd.f32 %v2265, %v2283
      %v2300 = vadd.f32 %v2266, %v2284
      %v2301 = vadd.f32 %v2267, %v2285
      %v2302 = vadd.f32 %v2268, %v2286
      %v2303 = vadd.f32 %v2269, %v2287
      %v2304 = vld [vmem:[%s524 + $0x6] sm:$0x1]
      %v2305 = vperm.slane %v2304, 0
      %v2306 = vmul.f32 %v2123, %v2305
      %v2307 = vmul.f32 %v2122, %v2305
      %v2308 = vmul.f32 %v2121, %v2305
      %v2309 = vmul.f32 %v2120, %v2305
      %v2310 = vmul.f32 %v2119, %v2305
      %v2311 = vmul.f32 %v2118, %v2305
      %v2312 = vmul.f32 %v2117, %v2305
      %v2313 = vmul.f32 %v2116, %v2305
      %v2314 = vmul.f32 %v2115, %v2305
      %v2315 = vmul.f32 %v2114, %v2305
      %v2316 = vmul.f32 %v2113, %v2305
      %v2317 = vmul.f32 %v2112, %v2305
      %v2318 = vmul.f32 %v2111, %v2305
      %v2319 = vmul.f32 %v2110, %v2305
      %v2320 = vmul.f32 %v2109, %v2305
      %v2321 = vmul.f32 %v2108, %v2305
      %v2322 = vadd.f32 %v2288, %v2306
      %v2323 = vadd.f32 %v2289, %v2307
      %v2324 = vadd.f32 %v2290, %v2308
      %v2325 = vadd.f32 %v2291, %v2309
      %v2326 = vadd.f32 %v2292, %v2310
      %v2327 = vadd.f32 %v2293, %v2311
      %v2328 = vadd.f32 %v2294, %v2312
      %v2329 = vadd.f32 %v2295, %v2313
      %v2330 = vadd.f32 %v2296, %v2314
      %v2331 = vadd.f32 %v2297, %v2315
      %v2332 = vadd.f32 %v2298, %v2316
      %v2333 = vadd.f32 %v2299, %v2317
      %v2334 = vadd.f32 %v2300, %v2318
      %v2335 = vadd.f32 %v2301, %v2319
      %v2336 = vadd.f32 %v2302, %v2320
      %v2337 = vadd.f32 %v2303, %v2321
      %v2338 = vld [vmem:[%s559 + $0x6] sm:$0x1]
      %v2339 = vperm.slane %v2338, 0
      %v2340 = vmul.f32 %v2121, %v2339
      %v2341 = vmul.f32 %v2120, %v2339
      %v2342 = vmul.f32 %v2119, %v2339
      %v2343 = vmul.f32 %v2118, %v2339
      %v2344 = vmul.f32 %v2117, %v2339
      %v2345 = vmul.f32 %v2116, %v2339
      %v2346 = vmul.f32 %v2115, %v2339
      %v2347 = vmul.f32 %v2114, %v2339
      %v2348 = vmul.f32 %v2113, %v2339
      %v2349 = vmul.f32 %v2112, %v2339
      %v2350 = vmul.f32 %v2111, %v2339
      %v2351 = vmul.f32 %v2110, %v2339
      %v2352 = vmul.f32 %v2109, %v2339
      %v2353 = vmul.f32 %v2108, %v2339
      %v2354 = vmul.f32 %v2107, %v2339
      %v2355 = vmul.f32 %v2106, %v2339
      %v2356 = vadd.f32 %v2322, %v2340
      %v2357 = vadd.f32 %v2323, %v2341
      %v2358 = vadd.f32 %v2324, %v2342
      %v2359 = vadd.f32 %v2325, %v2343
      %v2360 = vadd.f32 %v2326, %v2344
      %v2361 = vadd.f32 %v2327, %v2345
      %v2362 = vadd.f32 %v2328, %v2346
      %v2363 = vadd.f32 %v2329, %v2347
      %v2364 = vadd.f32 %v2330, %v2348
      %v2365 = vadd.f32 %v2331, %v2349
      %v2366 = vadd.f32 %v2332, %v2350
      %v2367 = vadd.f32 %v2333, %v2351
      %v2368 = vadd.f32 %v2334, %v2352
      %v2369 = vadd.f32 %v2335, %v2353
      %v2370 = vadd.f32 %v2336, %v2354
      %v2371 = vadd.f32 %v2337, %v2355
      %v2372 = vld [vmem:[%s2] sm:$0x1]
      %v2374 = vperm.slane %v2372, 0
      %v2376 = vadd.f32 %v2356, %v2374
      %v2377 = vadd.f32 %v2357, %v2374
      %v2378 = vadd.f32 %v2358, %v2374
      %v2379 = vadd.f32 %v2359, %v2374
      %v2380 = vadd.f32 %v2360, %v2374
      %v2381 = vadd.f32 %v2361, %v2374
      %v2382 = vadd.f32 %v2362, %v2374
      %v2383 = vadd.f32 %v2363, %v2374
      %v2384 = vadd.f32 %v2364, %v2374
      %v2385 = vadd.f32 %v2365, %v2374
      %v2386 = vadd.f32 %v2366, %v2374
      %v2387 = vadd.f32 %v2367, %v2374
      %v2388 = vadd.f32 %v2368, %v2374
      %v2389 = vadd.f32 %v2369, %v2374
      %v2390 = vadd.f32 %v2370, %v2374
      %v2391 = vadd.f32 %v2371, %v2374
      %vm2392 = vcmask 261120
      %v2393 = vsel %vm2392, %v2376, 0.0
      %2394 = vadd.xlane.f32.xlu0 %v2393
      %v2395 = vpop.xlane.xlu0 %2394
      %v2396 = vsel %vm2392, %v2377, 0.0
      %2397 = vadd.xlane.f32.xlu0 %v2396
      %v2398 = vpop.xlane.xlu0 %2397
      %v2399 = vsel %vm2392, %v2378, 0.0
      %2400 = vadd.xlane.f32.xlu0 %v2399
      %v2401 = vpop.xlane.xlu0 %2400
      %v2402 = vsel %vm2392, %v2379, 0.0
      %2403 = vadd.xlane.f32.xlu0 %v2402
      %v2404 = vpop.xlane.xlu0 %2403
      %v2405 = vsel %vm2392, %v2380, 0.0
      %2406 = vadd.xlane.f32.xlu0 %v2405
      %v2407 = vpop.xlane.xlu0 %2406
      %v2408 = vsel %vm2392, %v2381, 0.0
      %2409 = vadd.xlane.f32.xlu0 %v2408
      %v2410 = vpop.xlane.xlu0 %2409
      %v2411 = vsel %vm2392, %v2382, 0.0
      %2412 = vadd.xlane.f32.xlu0 %v2411
      %v2413 = vpop.xlane.xlu0 %2412
      %v2414 = vsel %vm2392, %v2383, 0.0
      %2415 = vadd.xlane.f32.xlu0 %v2414
      %v2416 = vpop.xlane.xlu0 %2415
      %v2417 = vsel %vm2392, %v2384, 0.0
      %2418 = vadd.xlane.f32.xlu0 %v2417
      %v2419 = vpop.xlane.xlu0 %2418
      %v2420 = vsel %vm2392, %v2385, 0.0
      %2421 = vadd.xlane.f32.xlu0 %v2420
      %v2422 = vpop.xlane.xlu0 %2421
      %v2423 = vsel %vm2392, %v2386, 0.0
      %2424 = vadd.xlane.f32.xlu0 %v2423
      %v2425 = vpop.xlane.xlu0 %2424
      %v2426 = vsel %vm2392, %v2387, 0.0
      %2427 = vadd.xlane.f32.xlu0 %v2426
      %v2428 = vpop.xlane.xlu0 %2427
      %v2429 = vsel %vm2392, %v2388, 0.0
      %2430 = vadd.xlane.f32.xlu0 %v2429
      %v2431 = vpop.xlane.xlu0 %2430
      %v2432 = vsel %vm2392, %v2389, 0.0
      %2433 = vadd.xlane.f32.xlu0 %v2432
      %v2434 = vpop.xlane.xlu0 %2433
      %v2435 = vsel %vm2392, %v2390, 0.0
      %2436 = vadd.xlane.f32.xlu0 %v2435
      %v2437 = vpop.xlane.xlu0 %2436
      %v2438 = vsel %vm2392, %v2391, 0.0
      %2439 = vadd.xlane.f32.xlu0 %v2438
      %v2440 = vpop.xlane.xlu0 %2439
      %v2441 = vrcp.pop 32.0
      %v2442 = vmul.f32 32.0, %v2441
      %v2443 = vsub.f32 1.0, %v2442
      %v2444 = vmul.f32 %v2441, %v2443
      %v2445 = vadd.f32 %v2441, %v2444
      %vm2446 = vweird.f32 %v2441
      %v2447 = vsel %vm2446, %v2441, %v2445
      %v2448 = vmul.f32 %v2395, %v2447
      %v2449 = vmul.f32 %v2398, %v2447
      %v2450 = vmul.f32 %v2401, %v2447
      %v2451 = vmul.f32 %v2404, %v2447
      %v2452 = vmul.f32 %v2407, %v2447
      %v2453 = vmul.f32 %v2410, %v2447
      %v2454 = vmul.f32 %v2413, %v2447
      %v2455 = vmul.f32 %v2416, %v2447
      %v2456 = vmul.f32 %v2419, %v2447
      %v2457 = vmul.f32 %v2422, %v2447
      %v2458 = vmul.f32 %v2425, %v2447
      %v2459 = vmul.f32 %v2428, %v2447
      %v2460 = vmul.f32 %v2431, %v2447
      %v2461 = vmul.f32 %v2434, %v2447
      %v2462 = vmul.f32 %v2437, %v2447
      %v2463 = vmul.f32 %v2440, %v2447
      %v2464 = vsub.f32 %v2376, %v2448
      %v2465 = vsub.f32 %v2377, %v2449
      %v2466 = vsub.f32 %v2378, %v2450
      %v2467 = vsub.f32 %v2379, %v2451
      %v2468 = vsub.f32 %v2380, %v2452
      %v2469 = vsub.f32 %v2381, %v2453
      %v2470 = vsub.f32 %v2382, %v2454
      %v2471 = vsub.f32 %v2383, %v2455
      %v2472 = vsub.f32 %v2384, %v2456
      %v2473 = vsub.f32 %v2385, %v2457
      %v2474 = vsub.f32 %v2386, %v2458
      %v2475 = vsub.f32 %v2387, %v2459
      %v2476 = vsub.f32 %v2388, %v2460
      %v2477 = vsub.f32 %v2389, %v2461
      %v2478 = vsub.f32 %v2390, %v2462
      %v2479 = vsub.f32 %v2391, %v2463
      %v2480 = vmul.f32 %v2464, %v2464
      %v2481 = vmul.f32 %v2465, %v2465
      %v2482 = vmul.f32 %v2466, %v2466
      %v2483 = vmul.f32 %v2467, %v2467
      %v2484 = vmul.f32 %v2468, %v2468
      %v2485 = vmul.f32 %v2469, %v2469
      %v2486 = vmul.f32 %v2470, %v2470
      %v2487 = vmul.f32 %v2471, %v2471
      %v2488 = vmul.f32 %v2472, %v2472
      %v2489 = vmul.f32 %v2473, %v2473
      %v2490 = vmul.f32 %v2474, %v2474
      %v2491 = vmul.f32 %v2475, %v2475
      %v2492 = vmul.f32 %v2476, %v2476
      %v2493 = vmul.f32 %v2477, %v2477
      %v2494 = vmul.f32 %v2478, %v2478
      %v2495 = vmul.f32 %v2479, %v2479
      %v2496 = vsel %vm2392, %v2480, 0.0
      %2497 = vadd.xlane.f32.xlu0 %v2496
      %v2498 = vpop.xlane.xlu0 %2497
      %v2499 = vsel %vm2392, %v2481, 0.0
      %2500 = vadd.xlane.f32.xlu0 %v2499
      %v2501 = vpop.xlane.xlu0 %2500
      %v2502 = vsel %vm2392, %v2482, 0.0
      %2503 = vadd.xlane.f32.xlu0 %v2502
      %v2504 = vpop.xlane.xlu0 %2503
      %v2505 = vsel %vm2392, %v2483, 0.0
      %2506 = vadd.xlane.f32.xlu0 %v2505
      %v2507 = vpop.xlane.xlu0 %2506
      %v2508 = vsel %vm2392, %v2484, 0.0
      %2509 = vadd.xlane.f32.xlu0 %v2508
      %v2510 = vpop.xlane.xlu0 %2509
      %v2511 = vsel %vm2392, %v2485, 0.0
      %2512 = vadd.xlane.f32.xlu0 %v2511
      %v2513 = vpop.xlane.xlu0 %2512
      %v2514 = vsel %vm2392, %v2486, 0.0
      %2515 = vadd.xlane.f32.xlu0 %v2514
      %v2516 = vpop.xlane.xlu0 %2515
      %v2517 = vsel %vm2392, %v2487, 0.0
      %2518 = vadd.xlane.f32.xlu0 %v2517
      %v2519 = vpop.xlane.xlu0 %2518
      %v2520 = vsel %vm2392, %v2488, 0.0
      %2521 = vadd.xlane.f32.xlu0 %v2520
      %v2522 = vpop.xlane.xlu0 %2521
      %v2523 = vsel %vm2392, %v2489, 0.0
      %2524 = vadd.xlane.f32.xlu0 %v2523
      %v2525 = vpop.xlane.xlu0 %2524
      %v2526 = vsel %vm2392, %v2490, 0.0
      %2527 = vadd.xlane.f32.xlu0 %v2526
      %v2528 = vpop.xlane.xlu0 %2527
      %v2529 = vsel %vm2392, %v2491, 0.0
      %2530 = vadd.xlane.f32.xlu0 %v2529
      %v2531 = vpop.xlane.xlu0 %2530
      %v2532 = vsel %vm2392, %v2492, 0.0
      %2533 = vadd.xlane.f32.xlu0 %v2532
      %v2534 = vpop.xlane.xlu0 %2533
      %v2535 = vsel %vm2392, %v2493, 0.0
      %2536 = vadd.xlane.f32.xlu0 %v2535
      %v2537 = vpop.xlane.xlu0 %2536
      %v2538 = vsel %vm2392, %v2494, 0.0
      %2539 = vadd.xlane.f32.xlu0 %v2538
      %v2540 = vpop.xlane.xlu0 %2539
      %v2541 = vsel %vm2392, %v2495, 0.0
      %2542 = vadd.xlane.f32.xlu0 %v2541
      %v2543 = vpop.xlane.xlu0 %2542
      %v2544 = vmul.f32 %v2498, %v2447
      %v2545 = vmul.f32 %v2501, %v2447
      %v2546 = vmul.f32 %v2504, %v2447
      %v2547 = vmul.f32 %v2507, %v2447
      %v2548 = vmul.f32 %v2510, %v2447
      %v2549 = vmul.f32 %v2513, %v2447
      %v2550 = vmul.f32 %v2516, %v2447
      %v2551 = vmul.f32 %v2519, %v2447
      %v2552 = vmul.f32 %v2522, %v2447
      %v2553 = vmul.f32 %v2525, %v2447
      %v2554 = vmul.f32 %v2528, %v2447
      %v2555 = vmul.f32 %v2531, %v2447
      %v2556 = vmul.f32 %v2534, %v2447
      %v2557 = vmul.f32 %v2537, %v2447
      %v2558 = vmul.f32 %v2540, %v2447
      %v2559 = vmul.f32 %v2543, %v2447
      %v2560 = vadd.f32 %v2544, 1e-06
      %v2561 = vadd.f32 %v2545, 1e-06
      %v2562 = vadd.f32 %v2546, 1e-06
      %v2563 = vadd.f32 %v2547, 1e-06
      %v2564 = vadd.f32 %v2548, 1e-06
      %v2565 = vadd.f32 %v2549, 1e-06
      %v2566 = vadd.f32 %v2550, 1e-06
      %v2567 = vadd.f32 %v2551, 1e-06
      %v2568 = vadd.f32 %v2552, 1e-06
      %v2569 = vadd.f32 %v2553, 1e-06
      %v2570 = vadd.f32 %v2554, 1e-06
      %v2571 = vadd.f32 %v2555, 1e-06
      %v2572 = vadd.f32 %v2556, 1e-06
      %v2573 = vadd.f32 %v2557, 1e-06
      %v2574 = vadd.f32 %v2558, 1e-06
      %v2575 = vadd.f32 %v2559, 1e-06
      %v2576 = vrsqrt.pop %v2560
      %v2577 = vmul.f32 %v2576, %v2560
      %v2578 = vmul.f32 %v2577, %v2576
      %v2579 = vmul.f32 0.5, %v2578
      %v2580 = vsub.f32 1.5, %v2579
      %v2581 = vmul.f32 %v2576, %v2580
      %vm2582 = vweird.f32 %v2560
      %vm2583 = vweird.f32 %v2576
      %vm2584 = vmor %vm2582, %vm2583
      %v2585 = vsel %vm2584, %v2576, %v2581
      %v2586 = vrsqrt.pop %v2561
      %v2587 = vmul.f32 %v2586, %v2561
      %v2588 = vmul.f32 %v2587, %v2586
      %v2589 = vmul.f32 0.5, %v2588
      %v2590 = vsub.f32 1.5, %v2589
      %v2591 = vmul.f32 %v2586, %v2590
      %vm2592 = vweird.f32 %v2561
      %vm2593 = vweird.f32 %v2586
      %vm2594 = vmor %vm2592, %vm2593
      %v2595 = vsel %vm2594, %v2586, %v2591
      %v2596 = vrsqrt.pop %v2562
      %v2597 = vmul.f32 %v2596, %v2562
      %v2598 = vmul.f32 %v2597, %v2596
      %v2599 = vmul.f32 0.5, %v2598
      %v2600 = vsub.f32 1.5, %v2599
      %v2601 = vmul.f32 %v2596, %v2600
      %vm2602 = vweird.f32 %v2562
      %vm2603 = vweird.f32 %v2596
      %vm2604 = vmor %vm2602, %vm2603
      %v2605 = vsel %vm2604, %v2596, %v2601
      %v2606 = vrsqrt.pop %v2563
      %v2607 = vmul.f32 %v2606, %v2563
      %v2608 = vmul.f32 %v2607, %v2606
      %v2609 = vmul.f32 0.5, %v2608
      %v2610 = vsub.f32 1.5, %v2609
      %v2611 = vmul.f32 %v2606, %v2610
      %vm2612 = vweird.f32 %v2563
      %vm2613 = vweird.f32 %v2606
      %vm2614 = vmor %vm2612, %vm2613
      %v2615 = vsel %vm2614, %v2606, %v2611
      %v2616 = vrsqrt.pop %v2564
      %v2617 = vmul.f32 %v2616, %v2564
      %v2618 = vmul.f32 %v2617, %v2616
      %v2619 = vmul.f32 0.5, %v2618
      %v2620 = vsub.f32 1.5, %v2619
      %v2621 = vmul.f32 %v2616, %v2620
      %vm2622 = vweird.f32 %v2564
      %vm2623 = vweird.f32 %v2616
      %vm2624 = vmor %vm2622, %vm2623
      %v2625 = vsel %vm2624, %v2616, %v2621
      %v2626 = vrsqrt.pop %v2565
      %v2627 = vmul.f32 %v2626, %v2565
      %v2628 = vmul.f32 %v2627, %v2626
      %v2629 = vmul.f32 0.5, %v2628
      %v2630 = vsub.f32 1.5, %v2629
      %v2631 = vmul.f32 %v2626, %v2630
      %vm2632 = vweird.f32 %v2565
      %vm2633 = vweird.f32 %v2626
      %vm2634 = vmor %vm2632, %vm2633
      %v2635 = vsel %vm2634, %v2626, %v2631
      %v2636 = vrsqrt.pop %v2566
      %v2637 = vmul.f32 %v2636, %v2566
      %v2638 = vmul.f32 %v2637, %v2636
      %v2639 = vmul.f32 0.5, %v2638
      %v2640 = vsub.f32 1.5, %v2639
      %v2641 = vmul.f32 %v2636, %v2640
      %vm2642 = vweird.f32 %v2566
      %vm2643 = vweird.f32 %v2636
      %vm2644 = vmor %vm2642, %vm2643
      %v2645 = vsel %vm2644, %v2636, %v2641
      %v2646 = vrsqrt.pop %v2567
      %v2647 = vmul.f32 %v2646, %v2567
      %v2648 = vmul.f32 %v2647, %v2646
      %v2649 = vmul.f32 0.5, %v2648
      %v2650 = vsub.f32 1.5, %v2649
      %v2651 = vmul.f32 %v2646, %v2650
      %vm2652 = vweird.f32 %v2567
      %vm2653 = vweird.f32 %v2646
      %vm2654 = vmor %vm2652, %vm2653
      %v2655 = vsel %vm2654, %v2646, %v2651
      %v2656 = vrsqrt.pop %v2568
      %v2657 = vmul.f32 %v2656, %v2568
      %v2658 = vmul.f32 %v2657, %v2656
      %v2659 = vmul.f32 0.5, %v2658
      %v2660 = vsub.f32 1.5, %v2659
      %v2661 = vmul.f32 %v2656, %v2660
      %vm2662 = vweird.f32 %v2568
      %vm2663 = vweird.f32 %v2656
      %vm2664 = vmor %vm2662, %vm2663
      %v2665 = vsel %vm2664, %v2656, %v2661
      %v2666 = vrsqrt.pop %v2569
      %v2667 = vmul.f32 %v2666, %v2569
      %v2668 = vmul.f32 %v2667, %v2666
      %v2669 = vmul.f32 0.5, %v2668
      %v2670 = vsub.f32 1.5, %v2669
      %v2671 = vmul.f32 %v2666, %v2670
      %vm2672 = vweird.f32 %v2569
      %vm2673 = vweird.f32 %v2666
      %vm2674 = vmor %vm2672, %vm2673
      %v2675 = vsel %vm2674, %v2666, %v2671
      %v2676 = vrsqrt.pop %v2570
      %v2677 = vmul.f32 %v2676, %v2570
      %v2678 = vmul.f32 %v2677, %v2676
      %v2679 = vmul.f32 0.5, %v2678
      %v2680 = vsub.f32 1.5, %v2679
      %v2681 = vmul.f32 %v2676, %v2680
      %vm2682 = vweird.f32 %v2570
      %vm2683 = vweird.f32 %v2676
      %vm2684 = vmor %vm2682, %vm2683
      %v2685 = vsel %vm2684, %v2676, %v2681
      %v2686 = vrsqrt.pop %v2571
      %v2687 = vmul.f32 %v2686, %v2571
      %v2688 = vmul.f32 %v2687, %v2686
      %v2689 = vmul.f32 0.5, %v2688
      %v2690 = vsub.f32 1.5, %v2689
      %v2691 = vmul.f32 %v2686, %v2690
      %vm2692 = vweird.f32 %v2571
      %vm2693 = vweird.f32 %v2686
      %vm2694 = vmor %vm2692, %vm2693
      %v2695 = vsel %vm2694, %v2686, %v2691
      %v2696 = vrsqrt.pop %v2572
      %v2697 = vmul.f32 %v2696, %v2572
      %v2698 = vmul.f32 %v2697, %v2696
      %v2699 = vmul.f32 0.5, %v2698
      %v2700 = vsub.f32 1.5, %v2699
      %v2701 = vmul.f32 %v2696, %v2700
      %vm2702 = vweird.f32 %v2572
      %vm2703 = vweird.f32 %v2696
      %vm2704 = vmor %vm2702, %vm2703
      %v2705 = vsel %vm2704, %v2696, %v2701
      %v2706 = vrsqrt.pop %v2573
      %v2707 = vmul.f32 %v2706, %v2573
      %v2708 = vmul.f32 %v2707, %v2706
      %v2709 = vmul.f32 0.5, %v2708
      %v2710 = vsub.f32 1.5, %v2709
      %v2711 = vmul.f32 %v2706, %v2710
      %vm2712 = vweird.f32 %v2573
      %vm2713 = vweird.f32 %v2706
      %vm2714 = vmor %vm2712, %vm2713
      %v2715 = vsel %vm2714, %v2706, %v2711
      %v2716 = vrsqrt.pop %v2574
      %v2717 = vmul.f32 %v2716, %v2574
      %v2718 = vmul.f32 %v2717, %v2716
      %v2719 = vmul.f32 0.5, %v2718
      %v2720 = vsub.f32 1.5, %v2719
      %v2721 = vmul.f32 %v2716, %v2720
      %vm2722 = vweird.f32 %v2574
      %vm2723 = vweird.f32 %v2716
      %vm2724 = vmor %vm2722, %vm2723
      %v2725 = vsel %vm2724, %v2716, %v2721
      %v2726 = vrsqrt.pop %v2575
      %v2727 = vmul.f32 %v2726, %v2575
      %v2728 = vmul.f32 %v2727, %v2726
      %v2729 = vmul.f32 0.5, %v2728
      %v2730 = vsub.f32 1.5, %v2729
      %v2731 = vmul.f32 %v2726, %v2730
      %vm2732 = vweird.f32 %v2575
      %vm2733 = vweird.f32 %v2726
      %vm2734 = vmor %vm2732, %vm2733
      %v2735 = vsel %vm2734, %v2726, %v2731
      %v2736 = vmul.f32 %v2464, %v2585
      %v2737 = vmul.f32 %v2465, %v2595
      %v2738 = vmul.f32 %v2466, %v2605
      %v2739 = vmul.f32 %v2467, %v2615
      %v2740 = vmul.f32 %v2468, %v2625
      %v2741 = vmul.f32 %v2469, %v2635
      %v2742 = vmul.f32 %v2470, %v2645
      %v2743 = vmul.f32 %v2471, %v2655
      %v2744 = vmul.f32 %v2472, %v2665
      %v2745 = vmul.f32 %v2473, %v2675
      %v2746 = vmul.f32 %v2474, %v2685
      %v2747 = vmul.f32 %v2475, %v2695
      %v2748 = vmul.f32 %v2476, %v2705
      %v2749 = vmul.f32 %v2477, %v2715
      %v2750 = vmul.f32 %v2478, %v2725
      %v2751 = vmul.f32 %v2479, %v2735
      %v2752 = vpack.c.bf16 %v2737, %v2736
      %v2753 = vpack.c.bf16 %v2739, %v2738
      %v2754 = vpack.c.bf16 %v2741, %v2740
      %v2755 = vpack.c.bf16 %v2743, %v2742
      %v2756 = vpack.c.bf16 %v2745, %v2744
      %v2757 = vpack.c.bf16 %v2747, %v2746
      %v2758 = vpack.c.bf16 %v2749, %v2748
      %v2759 = vpack.c.bf16 %v2751, %v2750
      %v2760 = vld [vmem:[%s3] sm:$0xf]
      %v2761 = vld [vmem:[%s3 + $0x4] sm:$0xf]
      %v2762 = vld [vmem:[%s3 + $0x8] sm:$0xf]
      %v2763 = vld [vmem:[%s3 + $0xc] sm:$0xf]
      %v2764 = vld [vmem:[%s4] sm:$0x1]
      %v2766 = vperm.slane %v2764, 0
      %v2772 = vunpack.c.l.b16 %v2760
      %v2773 = vunpack.c.l.b16 %v2761
      %v2774 = vunpack.c.l.b16 %v2762
      %v2775 = vunpack.c.l.b16 %v2763
      %v2776 = vpack.c.b16 %v2773, %v2772
      %v2777 = vpack.c.b16 %v2775, %v2774
      %v2781 = vsel %vm2392, %v2752, 0
      %v2784 = vsel %vm2392, %v2753, 0
      %v2787 = vsel %vm2392, %v2754, 0
      %v2790 = vsel %vm2392, %v2755, 0
      %v2793 = vsel %vm2392, %v2756, 0
      %v2796 = vsel %vm2392, %v2757, 0
      %v2799 = vsel %vm2392, %v2758, 0
      %v2802 = vsel %vm2392, %v2759, 0
      %2804 = vmatpush.bf16.msra.mxu0 0
      %2805 = vmatpush.bf16.msra.mxu0 0
      %2806 = vmatpush.bf16.msra.mxu0 0
      %2807 = vmatpush.bf16.msra.mxu0 0
      %2808 = vmatpush.bf16.msra.mxu0 0
      %2809 = vmatpush.bf16.msra.mxu0 0
      %2810 = vmatpush.bf16.msra.mxu0 %v2777
      %2811 = vmatpush.bf16.msra.mxu0 %v2776
      %2812 = vmatmul.bf16.gmra.mxu0 %v2781
      %v2813 = vpop.f32.mrf.mxu0
      %v2814 = vadd.f32 %v2766, %v2813
      %v2815 = vpop.f32.mrf.mxu0
      %v2816 = vadd.f32 %v2766, %v2815
      %2817 = vmatmul.bf16.gmra.mxu0 %v2784
      %v2818 = vpop.f32.mrf.mxu0
      %v2819 = vadd.f32 %v2766, %v2818
      %v2820 = vpop.f32.mrf.mxu0
      %v2821 = vadd.f32 %v2766, %v2820
      %2822 = vmatmul.bf16.gmra.mxu0 %v2787
      %v2823 = vpop.f32.mrf.mxu0
      %v2824 = vadd.f32 %v2766, %v2823
      %v2825 = vpop.f32.mrf.mxu0
      %v2826 = vadd.f32 %v2766, %v2825
      %2827 = vmatmul.bf16.gmra.mxu0 %v2790
      %v2828 = vpop.f32.mrf.mxu0
      %v2829 = vadd.f32 %v2766, %v2828
      %v2830 = vpop.f32.mrf.mxu0
      %v2831 = vadd.f32 %v2766, %v2830
      %2832 = vmatmul.bf16.gmra.mxu0 %v2793
      %v2833 = vpop.f32.mrf.mxu0
      %v2834 = vadd.f32 %v2766, %v2833
      %v2835 = vpop.f32.mrf.mxu0
      %v2836 = vadd.f32 %v2766, %v2835
      %2837 = vmatmul.bf16.gmra.mxu0 %v2796
      %v2838 = vpop.f32.mrf.mxu0
      %v2839 = vadd.f32 %v2766, %v2838
      %v2840 = vpop.f32.mrf.mxu0
      %v2841 = vadd.f32 %v2766, %v2840
      %2842 = vmatmul.bf16.gmra.mxu0 %v2799
      %v2843 = vpop.f32.mrf.mxu0
      %v2844 = vadd.f32 %v2766, %v2843
      %v2845 = vpop.f32.mrf.mxu0
      %v2846 = vadd.f32 %v2766, %v2845
      %2847 = vmatmul.bf16.gmra.mxu0 %v2802
      %v2848 = vpop.f32.mrf.mxu0
      %v2849 = vadd.f32 %v2766, %v2848
      %v2850 = vpop.f32.mrf.mxu0
      %v2851 = vadd.f32 %v2766, %v2850
      %2852 = vdwg.mxu0
      %v2853 = vmul.f32 %v2814, 0.5
      %v2854 = vmul.f32 %v2816, 0.5
      %v2855 = vmul.f32 %v2819, 0.5
      %v2856 = vmul.f32 %v2821, 0.5
      %v2857 = vmul.f32 %v2824, 0.5
      %v2858 = vmul.f32 %v2826, 0.5
      %v2859 = vmul.f32 %v2829, 0.5
      %v2860 = vmul.f32 %v2831, 0.5
      %v2861 = vmul.f32 %v2834, 0.5
      %v2862 = vmul.f32 %v2836, 0.5
      %v2863 = vmul.f32 %v2839, 0.5
      %v2864 = vmul.f32 %v2841, 0.5
      %v2865 = vmul.f32 %v2844, 0.5
      %v2866 = vmul.f32 %v2846, 0.5
      %v2867 = vmul.f32 %v2849, 0.5
      %v2868 = vmul.f32 %v2851, 0.5
      %v2869 = vmul.f32 %v2814, %v2814
      %v2870 = vmul.f32 %v2816, %v2816
      %v2871 = vmul.f32 %v2819, %v2819
      %v2872 = vmul.f32 %v2821, %v2821
      %v2873 = vmul.f32 %v2824, %v2824
      %v2874 = vmul.f32 %v2826, %v2826
      %v2875 = vmul.f32 %v2829, %v2829
      %v2876 = vmul.f32 %v2831, %v2831
      %v2877 = vmul.f32 %v2834, %v2834
      %v2878 = vmul.f32 %v2836, %v2836
      %v2879 = vmul.f32 %v2839, %v2839
      %v2880 = vmul.f32 %v2841, %v2841
      %v2881 = vmul.f32 %v2844, %v2844
      %v2882 = vmul.f32 %v2846, %v2846
      %v2883 = vmul.f32 %v2849, %v2849
      %v2884 = vmul.f32 %v2851, %v2851
      %v2885 = vmul.f32 %v2869, %v2814
      %v2886 = vmul.f32 %v2870, %v2816
      %v2887 = vmul.f32 %v2871, %v2819
      %v2888 = vmul.f32 %v2872, %v2821
      %v2889 = vmul.f32 %v2873, %v2824
      %v2890 = vmul.f32 %v2874, %v2826
      %v2891 = vmul.f32 %v2875, %v2829
      %v2892 = vmul.f32 %v2876, %v2831
      %v2893 = vmul.f32 %v2877, %v2834
      %v2894 = vmul.f32 %v2878, %v2836
      %v2895 = vmul.f32 %v2879, %v2839
      %v2896 = vmul.f32 %v2880, %v2841
      %v2897 = vmul.f32 %v2881, %v2844
      %v2898 = vmul.f32 %v2882, %v2846
      %v2899 = vmul.f32 %v2883, %v2849
      %v2900 = vmul.f32 %v2884, %v2851
      %v2901 = vmul.f32 %v2885, 0.044715
      %v2902 = vmul.f32 %v2886, 0.044715
      %v2903 = vmul.f32 %v2887, 0.044715
      %v2904 = vmul.f32 %v2888, 0.044715
      %v2905 = vmul.f32 %v2889, 0.044715
      %v2906 = vmul.f32 %v2890, 0.044715
      %v2907 = vmul.f32 %v2891, 0.044715
      %v2908 = vmul.f32 %v2892, 0.044715
      %v2909 = vmul.f32 %v2893, 0.044715
      %v2910 = vmul.f32 %v2894, 0.044715
      %v2911 = vmul.f32 %v2895, 0.044715
      %v2912 = vmul.f32 %v2896, 0.044715
      %v2913 = vmul.f32 %v2897, 0.044715
      %v2914 = vmul.f32 %v2898, 0.044715
      %v2915 = vmul.f32 %v2899, 0.044715
      %v2916 = vmul.f32 %v2900, 0.044715
      %v2917 = vadd.f32 %v2814, %v2901
      %v2918 = vadd.f32 %v2816, %v2902
      %v2919 = vadd.f32 %v2819, %v2903
      %v2920 = vadd.f32 %v2821, %v2904
      %v2921 = vadd.f32 %v2824, %v2905
      %v2922 = vadd.f32 %v2826, %v2906
      %v2923 = vadd.f32 %v2829, %v2907
      %v2924 = vadd.f32 %v2831, %v2908
      %v2925 = vadd.f32 %v2834, %v2909
      %v2926 = vadd.f32 %v2836, %v2910
      %v2927 = vadd.f32 %v2839, %v2911
      %v2928 = vadd.f32 %v2841, %v2912
      %v2929 = vadd.f32 %v2844, %v2913
      %v2930 = vadd.f32 %v2846, %v2914
      %v2931 = vadd.f32 %v2849, %v2915
      %v2932 = vadd.f32 %v2851, %v2916
      %v2933 = vmul.f32 %v2917, 0.7978846
      %v2934 = vmul.f32 %v2918, 0.7978846
      %v2935 = vmul.f32 %v2919, 0.7978846
      %v2936 = vmul.f32 %v2920, 0.7978846
      %v2937 = vmul.f32 %v2921, 0.7978846
      %v2938 = vmul.f32 %v2922, 0.7978846
      %v2939 = vmul.f32 %v2923, 0.7978846
      %v2940 = vmul.f32 %v2924, 0.7978846
      %v2941 = vmul.f32 %v2925, 0.7978846
      %v2942 = vmul.f32 %v2926, 0.7978846
      %v2943 = vmul.f32 %v2927, 0.7978846
      %v2944 = vmul.f32 %v2928, 0.7978846
      %v2945 = vmul.f32 %v2929, 0.7978846
      %v2946 = vmul.f32 %v2930, 0.7978846
      %v2947 = vmul.f32 %v2931, 0.7978846
      %v2948 = vmul.f32 %v2932, 0.7978846
      %v2949 = vtanh.pop %v2933
      %v2950 = vtanh.pop %v2934
      %v2951 = vtanh.pop %v2935
      %v2952 = vtanh.pop %v2936
      %v2953 = vtanh.pop %v2937
      %v2954 = vtanh.pop %v2938
      %v2955 = vtanh.pop %v2939
      %v2956 = vtanh.pop %v2940
      %v2957 = vtanh.pop %v2941
      %v2958 = vtanh.pop %v2942
      %v2959 = vtanh.pop %v2943
      %v2960 = vtanh.pop %v2944
      %v2961 = vtanh.pop %v2945
      %v2962 = vtanh.pop %v2946
      %v2963 = vtanh.pop %v2947
      %v2964 = vtanh.pop %v2948
      %v2965 = vadd.f32 %v2949, 1.0
      %v2966 = vadd.f32 %v2950, 1.0
      %v2967 = vadd.f32 %v2951, 1.0
      %v2968 = vadd.f32 %v2952, 1.0
      %v2969 = vadd.f32 %v2953, 1.0
      %v2970 = vadd.f32 %v2954, 1.0
      %v2971 = vadd.f32 %v2955, 1.0
      %v2972 = vadd.f32 %v2956, 1.0
      %v2973 = vadd.f32 %v2957, 1.0
      %v2974 = vadd.f32 %v2958, 1.0
      %v2975 = vadd.f32 %v2959, 1.0
      %v2976 = vadd.f32 %v2960, 1.0
      %v2977 = vadd.f32 %v2961, 1.0
      %v2978 = vadd.f32 %v2962, 1.0
      %v2979 = vadd.f32 %v2963, 1.0
      %v2980 = vadd.f32 %v2964, 1.0
      %v2981 = vmul.f32 %v2853, %v2965
      %v2982 = vmul.f32 %v2854, %v2966
      %v2983 = vmul.f32 %v2855, %v2967
      %v2984 = vmul.f32 %v2856, %v2968
      %v2985 = vmul.f32 %v2857, %v2969
      %v2986 = vmul.f32 %v2858, %v2970
      %v2987 = vmul.f32 %v2859, %v2971
      %v2988 = vmul.f32 %v2860, %v2972
      %v2989 = vmul.f32 %v2861, %v2973
      %v2990 = vmul.f32 %v2862, %v2974
      %v2991 = vmul.f32 %v2863, %v2975
      %v2992 = vmul.f32 %v2864, %v2976
      %v2993 = vmul.f32 %v2865, %v2977
      %v2994 = vmul.f32 %v2866, %v2978
      %v2995 = vmul.f32 %v2867, %v2979
      %v2996 = vmul.f32 %v2868, %v2980
      %v2997 = vpack.c.bf16 %v2982, %v2981
      %v2998 = vpack.c.bf16 %v2984, %v2983
      %v2999 = vpack.c.bf16 %v2986, %v2985
      %v3000 = vpack.c.bf16 %v2988, %v2987
      %v3001 = vpack.c.bf16 %v2990, %v2989
      %v3002 = vpack.c.bf16 %v2992, %v2991
      %v3003 = vpack.c.bf16 %v2994, %v2993
      %v3004 = vpack.c.bf16 %v2996, %v2995
      %v3005 = vld [vmem:[%s5] sm:$0xf]
      %v3006 = vld [vmem:[%s5 + $0x4] sm:$0xf]
      %v3007 = vld [vmem:[%s5 + $0x8] sm:$0xf]
      %v3008 = vld [vmem:[%s5 + $0xc] sm:$0xf]
      %v3009 = vld [vmem:[%s5 + $0x10] sm:$0xf]
      %v3010 = vld [vmem:[%s5 + $0x14] sm:$0xf]
      %v3011 = vld [vmem:[%s5 + $0x18] sm:$0xf]
      %v3012 = vld [vmem:[%s5 + $0x1c] sm:$0xf]
      %v3013 = vld [vmem:[%s5 + $0x20] sm:$0xf]
      %v3014 = vld [vmem:[%s5 + $0x24] sm:$0xf]
      %v3015 = vld [vmem:[%s5 + $0x28] sm:$0xf]
      %v3016 = vld [vmem:[%s5 + $0x2c] sm:$0xf]
      %v3017 = vld [vmem:[%s5 + $0x30] sm:$0xf]
      %v3018 = vld [vmem:[%s5 + $0x34] sm:$0xf]
      %v3019 = vld [vmem:[%s5 + $0x38] sm:$0xf]
      %v3020 = vld [vmem:[%s5 + $0x3c] sm:$0xf]
      %v3021 = vld [vmem:[%s6] sm:$0x1]
      %v3023 = vperm.slane %v3021, 0
      %v3041 = vunpack.c.l.b16 %v3005
      %v3042 = vunpack.c.l.b16 %v3006
      %v3043 = vunpack.c.l.b16 %v3007
      %v3044 = vunpack.c.l.b16 %v3008
      %v3045 = vunpack.c.l.b16 %v3009
      %v3046 = vunpack.c.l.b16 %v3010
      %v3047 = vunpack.c.l.b16 %v3011
      %v3048 = vunpack.c.l.b16 %v3012
      %v3049 = vunpack.c.l.b16 %v3013
      %v3050 = vunpack.c.l.b16 %v3014
      %v3051 = vunpack.c.l.b16 %v3015
      %v3052 = vunpack.c.l.b16 %v3016
      %v3053 = vunpack.c.l.b16 %v3017
      %v3054 = vunpack.c.l.b16 %v3018
      %v3055 = vunpack.c.l.b16 %v3019
      %v3056 = vunpack.c.l.b16 %v3020
      %v3057 = vpack.c.b16 %v3042, %v3041
      %v3058 = vpack.c.b16 %v3044, %v3043
      %v3059 = vpack.c.b16 %v3046, %v3045
      %v3060 = vpack.c.b16 %v3048, %v3047
      %v3061 = vpack.c.b16 %v3050, %v3049
      %v3062 = vpack.c.b16 %v3052, %v3051
      %v3063 = vpack.c.b16 %v3054, %v3053
      %v3064 = vpack.c.b16 %v3056, %v3055
      %3073 = vmatpush.bf16.msra.mxu0 %v3064
      %3074 = vmatpush.bf16.msra.mxu0 %v3063
      %3075 = vmatpush.bf16.msra.mxu0 %v3062
      %3076 = vmatpush.bf16.msra.mxu0 %v3061
      %3077 = vmatpush.bf16.msra.mxu0 %v3060
      %3078 = vmatpush.bf16.msra.mxu0 %v3059
      %3079 = vmatpush.bf16.msra.mxu0 %v3058
      %3080 = vmatpush.bf16.msra.mxu0 %v3057
      %3081 = vmatmul.bf16.gmra.mxu0 %v2997
      %v3082 = vpop.f32.mrf.mxu0
      %v3083 = vadd.f32 %v3023, %v3082
      %v3084 = vpop.f32.mrf.mxu0
      %v3085 = vadd.f32 %v3023, %v3084
      %3086 = vmatmul.bf16.gmra.mxu0 %v2998
      %v3087 = vpop.f32.mrf.mxu0
      %v3088 = vadd.f32 %v3023, %v3087
      %v3089 = vpop.f32.mrf.mxu0
      %v3090 = vadd.f32 %v3023, %v3089
      %3091 = vmatmul.bf16.gmra.mxu0 %v2999
      %v3092 = vpop.f32.mrf.mxu0
      %v3093 = vadd.f32 %v3023, %v3092
      %v3094 = vpop.f32.mrf.mxu0
      %v3095 = vadd.f32 %v3023, %v3094
      %3096 = vmatmul.bf16.gmra.mxu0 %v3000
      %v3097 = vpop.f32.mrf.mxu0
      %v3098 = vadd.f32 %v3023, %v3097
      %v3099 = vpop.f32.mrf.mxu0
      %v3100 = vadd.f32 %v3023, %v3099
      %3101 = vmatmul.bf16.gmra.mxu0 %v3001
      %v3102 = vpop.f32.mrf.mxu0
      %v3103 = vadd.f32 %v3023, %v3102
      %v3104 = vpop.f32.mrf.mxu0
      %v3105 = vadd.f32 %v3023, %v3104
      %3106 = vmatmul.bf16.gmra.mxu0 %v3002
      %v3107 = vpop.f32.mrf.mxu0
      %v3108 = vadd.f32 %v3023, %v3107
      %v3109 = vpop.f32.mrf.mxu0
      %v3110 = vadd.f32 %v3023, %v3109
      %3111 = vmatmul.bf16.gmra.mxu0 %v3003
      %v3112 = vpop.f32.mrf.mxu0
      %v3113 = vadd.f32 %v3023, %v3112
      %v3114 = vpop.f32.mrf.mxu0
      %v3115 = vadd.f32 %v3023, %v3114
      %3116 = vmatmul.bf16.gmra.mxu0 %v3004
      %v3117 = vpop.f32.mrf.mxu0
      %v3118 = vadd.f32 %v3023, %v3117
      %v3119 = vpop.f32.mrf.mxu0
      %v3120 = vadd.f32 %v3023, %v3119
      %3121 = vdwg.mxu0
      %v3122 = vadd.f32 %v1239, %v3083
      %v3123 = vadd.f32 %v1238, %v3085
      %v3124 = vadd.f32 %v1237, %v3088
      %v3125 = vadd.f32 %v1236, %v3090
      %v3126 = vadd.f32 %v1235, %v3093
      %v3127 = vadd.f32 %v1234, %v3095
      %v3128 = vadd.f32 %v1233, %v3098
      %v3129 = vadd.f32 %v1232, %v3100
      %v3130 = vadd.f32 %v1231, %v3103
      %v3131 = vadd.f32 %v1230, %v3105
      %v3132 = vadd.f32 %v1229, %v3108
      %v3133 = vadd.f32 %v1228, %v3110
      %v3134 = vadd.f32 %v1227, %v3113
      %v3135 = vadd.f32 %v1226, %v3115
      %v3136 = vadd.f32 %v1225, %v3118
      %v3137 = vadd.f32 %v1224, %v3120
      %3138 = vst.msk [vmem:[%s300] sm:$0xff] %vm2392, %v3122
      %3139 = vst.msk [vmem:[%s300 + $0x8] sm:$0xff] %vm2392, %v3123
      %3140 = vst.msk [vmem:[%s300 + $0x10] sm:$0xff] %vm2392, %v3124
      %3141 = vst.msk [vmem:[%s300 + $0x18] sm:$0xff] %vm2392, %v3125
      %3142 = vst.msk [vmem:[%s300 + $0x20] sm:$0xff] %vm2392, %v3126
      %3143 = vst.msk [vmem:[%s300 + $0x28] sm:$0xff] %vm2392, %v3127
      %3144 = vst.msk [vmem:[%s300 + $0x30] sm:$0xff] %vm2392, %v3128
      %3145 = vst.msk [vmem:[%s300 + $0x38] sm:$0xff] %vm2392, %v3129
      %3146 = vst.msk [vmem:[%s300 + $0x40] sm:$0xff] %vm2392, %v3130
      %3147 = vst.msk [vmem:[%s300 + $0x48] sm:$0xff] %vm2392, %v3131
      %3148 = vst.msk [vmem:[%s300 + $0x50] sm:$0xff] %vm2392, %v3132
      %3149 = vst.msk [vmem:[%s300 + $0x58] sm:$0xff] %vm2392, %v3133
      %3150 = vst.msk [vmem:[%s300 + $0x60] sm:$0xff] %vm2392, %v3134
      %3151 = vst.msk [vmem:[%s300 + $0x68] sm:$0xff] %vm2392, %v3135
      %3152 = vst.msk [vmem:[%s300 + $0x70] sm:$0xff] %vm2392, %v3136
      %3153 = vst.msk [vmem:[%s300 + $0x78] sm:$0xff] %vm2392, %v3137
      %s3154 = smul.u32 16, %s23
      %p3155 = scmp.lt.s32.totalorder %s22, 1
      %s3156 = scalar_select %p3155, %s22, 1
      %p3157 = scmp.lt.s32.totalorder %s3154, 15
      %s3158 = scalar_select %p3157, %s3154, 15
      %s3159 = smul.addr %s3156, 16
      %s3160 = sadd.s32 %s3158, %s3159
      %s3161 = smul.addr %s3160, 8
      %s3162 = scalar_lea.vmem %s7, %s3161
      // Predicated region
      $region49: #{block_forward.1} parent=47 // pred_check
        %p3163 = pneg %p202
      $region50: #{block_forward.1} parent=47 // pred_check_branch
        %3165 = sbr.rel (%p3163) target = $region52
      $region51: #{block_forward.1} parent=47 // pred_region
        %s3166 = smul.u32 16, %s23
      $region52: #{block_forward.1} parent=47 // pred_fallthru
        _
    $region48: #{block_forward.1} parent=5 // pred_fallthru
      _
    %p3167 = scmp.le.s32.totalorder 2, %s13
    // Predicated region
    $region53: #{block_forward.1} parent=5 // pred_check
      %p3168 = pneg %p3167
    $region54: #{block_forward.1} parent=5 // pred_check_branch
      %3170 = sbr.rel (%p3168) target = $region56
    $region55: #{block_forward.1} parent=5 // pred_region
      %s3171 = ssub.s32 %s13, 2
      // Predicated region
      $region57: #{block_forward.1} parent=55 // pred_check
        %p3172 = pneg %p208
      $region58: #{block_forward.1} parent=55 // pred_check_branch
        %3174 = sbr.rel (%p3172) target = $region60
      $region59: #{block_forward.1} parent=55 // pred_region
        %s3175 = smul.u32 16, %s25
        %p3176 = scmp.lt.s32.totalorder %s24, 1
        %s3177 = scalar_select %p3176, %s24, 1
        %p3178 = scmp.lt.s32.totalorder %s3175, 15
        %s3179 = scalar_select %p3178, %s3175, 15
        %s3180 = smul.addr %s3177, 16
        %s3181 = sadd.s32 %s3179, %s3180
        %s3182 = smul.addr %s3181, 8
        %s3183 = scalar_lea.vmem %s7, %s3182
      $region60: #{block_forward.1} parent=55 // pred_fallthru
        _
    $region56: #{block_forward.1} parent=5 // pred_fallthru
      _
  $region6: #{block_forward.1} parent=0 // loop_footer
    %s17 = sadd.s32 1, %s13
  $region7: #{block_forward.1} parent=0 // loop_footer_branch
    %12 = sbr.rel target = $region3
  $region8: #{block_forward.1} parent=0 // loop_exit
    _

</llo_original>
